<compile_context>
chip_gen: v6e
topology: v6e:2x2x1
jax: 0.10.0
libtpu: 0.0.40
codegen_flags: <defaults>
</compile_context>

<pallas_src>
import math
from functools import partial

import numpy as np
import jax
import jax.numpy as jnp
from jax.experimental import pallas as pl
from jax.experimental.pallas import tpu as pltpu

_SQRT2 = math.sqrt(2.0)


# ----------------------------- in-kernel helpers -----------------------------

def _gelu(x):
    """Exact (erf) GELU matching nn.GELU(); erf via the A&S 7.1.26 polynomial
    (|err| ~ 1.5e-7).  One abs + one select; exp goes to the EUP slot."""
    z = x * (1.0 / _SQRT2)
    az = jnp.abs(z)
    t = 1.0 / (1.0 + 0.3275911 * az)
    poly = ((((1.061405429 * t - 1.453152027) * t + 1.421413741) * t
             - 0.284496736) * t + 0.254829592) * t
    q = 0.5 * poly * jnp.exp(-az * az)          # q = 0.5 * (1 - erf(|z|))
    return x * jnp.where(z >= 0.0, 1.0 - q, q)  # x * Phi(x)


def _groupnorm1(x, gamma, beta, eps=1e-5):
    """GroupNorm(num_groups=1) over the whole (C, HW) sample (biased variance,
    as torch), with the affine folded into a single scale+shift."""
    n = float(x.shape[0] * x.shape[1])
    mean = jnp.sum(x) * (1.0 / n)
    var = jnp.maximum(jnp.sum(x * x) * (1.0 / n) - mean * mean, 0.0)
    inv = jax.lax.rsqrt(var + eps)
    a = gamma * inv                             # (C, 1), lane-broadcast
    b = beta - mean * a                         # (C, 1)
    return x * a + b


def _conv3x3(x, w_ref, mask_ref, stack_ref, W):
    """3x3 / stride 1 / zero-pad 1 conv, channels-first flat-pixel layout,
    realized as 8 lane-rolls + border masks + ONE wide-K MXU matmul.

    x:         (Cin, HW) f32; pixel axis flattened row-major over (H, W)
    w_ref:     (Cout, 9*CS) bf16, tap-major, Cin zero-padded to CS
    mask_ref:  (9*CS, HW) f32, rows [k*CS, k*CS+Cin) = tap k's in-bounds mask
    stack_ref: (9*CS, HW) bf16 VMEM scratch for the masked shifted taps
    W:         spatial width (row stride of the flat pixel axis)
    """
    cin, HW = x.shape
    CS = stack_ref.shape[0] // 9
    for dy in range(3):
        for dx in range(3):
            k = 3 * dy + dx
            off = (dy - 1) * W + (dx - 1)       # flat source offset of this tap
            if off == 0:
                tap = x                         # centre tap: always in bounds
            else:
                # tap[:, p] = x[:, p + off] (cyclic; wrap-arounds killed by mask)
                tap = pltpu.roll(x, shift=(-off) % HW, axis=1)
                tap = tap * mask_ref[k * CS:k * CS + cin, :]
            stack_ref[k * CS:k * CS + cin, :] = tap.astype(stack_ref.dtype)
    # one (Cout, 9*CS) @ (9*CS, HW) matmul instead of 9 tiny per-tap dots.
    # Rows [k*CS+cin, (k+1)*CS) hold stale-but-finite data and hit zero weights.
    return jnp.dot(w_ref[...], stack_ref[...], preferred_element_type=jnp.float32)


# --------------------------------- kernel ------------------------------------

def up_kernel(x_ref, beta2_ref, mask_ref,
              w1a_ref, g1a_ref, b1a_ref,
              w1b_ref, g1b_ref, b1b_ref,
              w2a_ref, g2a_ref, b2a_ref,
              w2b_ref, g2b_ref,
              o_ref, stack_ref, *, W):
    # If in_ch itself needs channel padding, keep never-written stack rows
    # finite (they only ever multiply exactly-zero weight columns).
    if stack_ref.shape[0] // 9 != x_ref.shape[1]:
        stack_ref[...] = jnp.zeros_like(stack_ref)

    x = x_ref[0]                                # (in_ch, HW) = cat([skip, up], ch)
    conv = lambda a, w: _conv3x3(a, w, mask_ref, stack_ref, W)

    # ---- DoubleConv #1 (residual, in_ch -> in_ch) ----------------------------
    h = conv(x, w1a_ref)
    h = _gelu(_groupnorm1(h, g1a_ref[...], b1a_ref[...]))
    h = conv(h, w1b_ref)
    h = _groupnorm1(h, g1b_ref[...], b1b_ref[...])
    x1 = _gelu(x + h)

    # ---- DoubleConv #2 (in_ch -> in_ch//2 -> out_ch) -------------------------
    h = conv(x1, w2a_ref)
    h = _gelu(_groupnorm1(h, g2a_ref[...], b2a_ref[...]))
    h = conv(h, w2b_ref)
    # final GroupNorm; per-sample time-embedding bias already folded into beta
    o_ref[0] = _groupnorm1(h, g2b_ref[...], beta2_ref[0]).astype(o_ref.dtype)


# ----------------------------- wrapper helpers --------------------------------

def _interp_matrix(n_in, n_out):
    """Bilinear interpolation matrix, align_corners=True (as the PyTorch Up)."""
    A = np.zeros((n_out, n_in), dtype=np.float32)
    scale = (n_in - 1) / (n_out - 1)
    for o in range(n_out):
        src = o * scale
        i0 = min(int(np.floor(src)), n_in - 1)
        i1 = min(i0 + 1, n_in - 1)
        w1 = src - i0
        A[o, i0] += 1.0 - w1
        A[o, i1] += w1
    return A


def _stacked_border_mask(H, W, cs):
    """(9*cs, H*W) f32: rows [k*cs, (k+1)*cs) = 1.0 where tap k's source pixel
    is in bounds (separable row/col validity, pre-expanded to the stack layout)."""
    hh, ww = np.meshgrid(np.arange(H), np.arange(W), indexing="ij")
    hh = hh.reshape(-1)
    ww = ww.reshape(-1)
    m = np.zeros((9 * cs, H * W), np.float32)
    for dy in range(3):
        for dx in range(3):
            ok = ((hh + dy - 1 >= 0) & (hh + dy - 1 < H) &
                  (ww + dx - 1 >= 0) & (ww + dx - 1 < W))
            m[(3 * dy + dx) * cs:(3 * dy + dx + 1) * cs] = ok.astype(np.float32)
    return m


def _flatten_conv_w(w, cs):
    """torch (Cout, Cin, 3, 3) conv weight -> (Cout, 9*cs), tap-major, with the
    Cin axis zero-padded to the stack's channel stride cs."""
    cout, cin = w.shape[0], w.shape[1]
    wt = jnp.transpose(w, (0, 2, 3, 1))                        # (Cout, ky, kx, Cin)
    if cs != cin:
        wt = jnp.pad(wt, ((0, 0), (0, 0), (0, 0), (0, cs - cin)))
    return wt.reshape(cout, 9 * cs)


# --------------------------------- wrapper ------------------------------------

@jax.jit
def up_forward(x, skip_x, t, params):
    """x: (B, Cx, H, W), skip_x: (B, Cs, 2H, 2W), t: (B, emb_dim)  (NCHW).
    Returns (B, out_ch, 2H, 2W) -- same as the PyTorch Up block."""
    B, Cx, H, W = x.shape
    _, Cs, Ho, Wo = skip_x.shape
    assert Ho == 2 * H and Wo == 2 * W
    in_ch = Cs + Cx
    mid2 = params["w2b"].shape[1]
    out_ch = params["w2b"].shape[0]
    HW = Ho * Wo
    CS = -(-in_ch // 8) * 8                 # channel stride of the tap stack

    # 2x bilinear upsample (align_corners=True), separable -> two tiny matmuls
    r_h = jnp.asarray(_interp_matrix(H, Ho))                  # (Ho, H)
    r_w = jnp.asarray(_interp_matrix(W, Wo))                  # (Wo, W)
    hi = jax.lax.Precision.HIGHEST                            # negligible FLOPs
    up = jnp.einsum("oh,bchw->bcow", r_h, x, precision=hi)
    up = jnp.einsum("pw,bcow->bcop", r_w, up, precision=hi)   # (B, Cx, Ho, Wo)

    # channel concat (torch.cat([skip, up], 1)) done once here, flat-pixel layout
    xcat = jnp.concatenate([skip_x.reshape(B, Cs, HW),
                            up.reshape(B, Cx, HW)], axis=1)   # (B, in_ch, HW)

    # time-embedding projection, folded into the final GroupNorm's beta
    emb = jax.nn.silu(t) @ params["we"].T + params["be"]               # (B, out_ch)
    beta2 = params["b2b"].reshape(1, out_ch, 1) + emb[:, :, None]      # (B, out_ch, 1)
    beta2 = beta2.astype(jnp.float32)

    # border masks in the stacked-tap layout (baked constant under jit)
    smask = jnp.asarray(_stacked_border_mask(Ho, Wo, CS))              # (9*CS, HW)

    # conv weights -> (Cout, 9*CS) tap-major, bf16 for the MXU (f32 accumulate)
    wf = lambda w: _flatten_conv_w(w, CS).astype(jnp.bfloat16)
    col = lambda v: v.reshape(-1, 1).astype(jnp.float32)

    operands = [xcat, beta2, smask,
                wf(params["w1a"]), col(params["g1a"]), col(params["b1a"]),
                wf(params["w1b"]), col(params["g1b"]), col(params["b1b"]),
                wf(params["w2a"]), col(params["g2a"]), col(params["b2a"]),
                wf(params["w2b"]), col(params["g2b"])]

    def batch_spec(c, last):
        return pl.BlockSpec((1, c, last), lambda b: (b, 0, 0))

    def shared_spec(a):
        return pl.BlockSpec(a.shape, lambda b, _n=a.ndim: (0,) * _n)

    in_specs = ([batch_spec(in_ch, HW), batch_spec(out_ch, 1)]
                + [shared_spec(a) for a in operands[2:]])

    out_flat = pl.pallas_call(
        partial(up_kernel, W=Wo),
        out_shape=jax.ShapeDtypeStruct((B, out_ch, HW), jnp.float32),
        grid=(B,),
        in_specs=in_specs,
        out_specs=pl.BlockSpec((1, out_ch, HW), lambda b: (b, 0, 0)),
        scratch_shapes=[pltpu.VMEM((9 * CS, HW), jnp.bfloat16)],
        compiler_params=pltpu.CompilerParams(
            # batch axis is independent -> lets v7x's two TCs split it.
            # TODO(synk): pltpu.CORE_PARALLEL + row-tile axis for B==1 / large HW.
            dimension_semantics=("parallel",)),
    )(*operands)

    return out_flat.reshape(B, out_ch, Ho, Wo)


# ------------------------- pure-JAX reference (check) -------------------------

def up_reference(x, skip_x, t, params):
    """Reference mirroring the kernel's numerics (bf16 MXU inputs, f32
    accumulation / element-wise).  Used only for the self-check."""
    B, Cx, H, W = x.shape
    Ho, Wo = 2 * H, 2 * W
    hi = jax.lax.Precision.HIGHEST
    r_h = jnp.asarray(_interp_matrix(H, Ho))
    r_w = jnp.asarray(_interp_matrix(W, Wo))
    up = jnp.einsum("oh,bchw->bcow", r_h, x, precision=hi)
    up = jnp.einsum("pw,bcow->bcop", r_w, up, precision=hi)
    h = jnp.concatenate([skip_x, up], axis=1)

    def conv(a, w):
        return jax.lax.conv_general_dilated(
            a.astype(jnp.bfloat16), w.astype(jnp.bfloat16),
            window_strides=(1, 1), padding=((1, 1), (1, 1)),
            dimension_numbers=("NCHW", "OIHW", "NCHW"),
            preferred_element_type=jnp.float32)

    def gn(a, g, b, eps=1e-5):
        mu = jnp.mean(a, axis=(1, 2, 3), keepdims=True)
        var = jnp.var(a, axis=(1, 2, 3), keepdims=True)
        return ((a - mu) * jax.lax.rsqrt(var + eps) * g.reshape(1, -1, 1, 1)
                + b.reshape(1, -1, 1, 1))

    gelu = lambda a: jax.nn.gelu(a, approximate=False)
    d = gn(conv(h, params["w1a"]), params["g1a"], params["b1a"])
    d = gn(conv(gelu(d), params["w1b"]), params["g1b"], params["b1b"])
    x1 = gelu(h + d)
    d = gn(conv(x1, params["w2a"]), params["g2a"], params["b2a"])
    d = gn(conv(gelu(d), params["w2b"]), params["g2b"], params["b2b"])
    emb = jax.nn.silu(t) @ params["we"].T + params["be"]
    return d + emb[:, :, None, None]


# ---------------------------------- params ------------------------------------

def init_params(key, in_ch, out_ch, emb_dim):
    """Parameters in PyTorch layouts: conv (Cout, Cin, 3, 3); GroupNorm (C,);
    Linear weight (out, in), bias (out,)."""
    mid2 = in_ch // 2
    ks = jax.random.split(key, 14)

    def conv_w(k, cout, cin):
        return jax.random.normal(k, (cout, cin, 3, 3), jnp.float32) / np.sqrt(9.0 * cin)

    p = {}
    p["w1a"] = conv_w(ks[0], in_ch, in_ch)
    p["w1b"] = conv_w(ks[1], in_ch, in_ch)
    p["w2a"] = conv_w(ks[2], mid2, in_ch)
    p["w2b"] = conv_w(ks[3], out_ch, mid2)
    p["g1a"] = 1.0 + 0.1 * jax.random.normal(ks[4], (in_ch,), jnp.float32)
    p["b1a"] = 0.1 * jax.random.normal(ks[5], (in_ch,), jnp.float32)
    p["g1b"] = 1.0 + 0.1 * jax.random.normal(ks[6], (in_ch,), jnp.float32)
    p["b1b"] = 0.1 * jax.random.normal(ks[7], (in_ch,), jnp.float32)
    p["g2a"] = 1.0 + 0.1 * jax.random.normal(ks[8], (mid2,), jnp.float32)
    p["b2a"] = 0.1 * jax.random.normal(ks[9], (mid2,), jnp.float32)
    p["g2b"] = 1.0 + 0.1 * jax.random.normal(ks[10], (out_ch,), jnp.float32)
    p["b2b"] = 0.1 * jax.random.normal(ks[11], (out_ch,), jnp.float32)
    p["we"] = jax.random.normal(ks[12], (out_ch, emb_dim), jnp.float32) / np.sqrt(emb_dim)
    p["be"] = 0.1 * jax.random.normal(ks[13], (out_ch,), jnp.float32)
    return p


if __name__ == "__main__":
    B, H, W = 2, 16, 16
    in_ch, out_ch, emb_dim = 8, 4, 32     # Up(in_channels=8, out_channels=4, emb_dim=32)
    Cx = Cs = in_ch // 2                  # x (from below) + skip concat -> in_ch

    key = jax.random.PRNGKey(0)
    kx, ks, kt, kp = jax.random.split(key, 4)
    x = jax.random.normal(kx, (B, Cx, H, W), jnp.float32)                 # NCHW
    skip_x = jax.random.normal(ks, (B, Cs, 2 * H, 2 * W), jnp.float32)
    t = jax.random.normal(kt, (B, emb_dim), jnp.float32)

    params = init_params(kp, in_ch, out_ch, emb_dim)

    out = up_forward(x, skip_x, t, params)
    jax.block_until_ready(out)
    assert out.shape == (B, out_ch, 2 * H, 2 * W), out.shape
    assert bool(jnp.all(jnp.isfinite(out)))

    ref = up_reference(x, skip_x, t, params)
    np.testing.assert_allclose(np.asarray(out), np.asarray(ref),
                               atol=3e-2, rtol=3e-2)
    print("KERNEL_OK")
</pallas_src>

<mosaic_0001>
module attributes {stable_mosaic.version = 11 : i64} {
  func.func @up_kernel(%arg0: i32, %arg1: memref<1x8x1024xf32, #tpu.memory_space<vmem>>, %arg2: memref<1x4x1xf32, #tpu.memory_space<vmem>>, %arg3: memref<72x1024xf32, #tpu.memory_space<vmem>>, %arg4: memref<8x72xbf16, #tpu.memory_space<vmem>>, %arg5: memref<8x1xf32, #tpu.memory_space<vmem>>, %arg6: memref<8x1xf32, #tpu.memory_space<vmem>>, %arg7: memref<8x72xbf16, #tpu.memory_space<vmem>>, %arg8: memref<8x1xf32, #tpu.memory_space<vmem>>, %arg9: memref<8x1xf32, #tpu.memory_space<vmem>>, %arg10: memref<4x72xbf16, #tpu.memory_space<vmem>>, %arg11: memref<4x1xf32, #tpu.memory_space<vmem>>, %arg12: memref<4x1xf32, #tpu.memory_space<vmem>>, %arg13: memref<4x72xbf16, #tpu.memory_space<vmem>>, %arg14: memref<4x1xf32, #tpu.memory_space<vmem>>, %arg15: memref<1x4x1024xf32, #tpu.memory_space<vmem>>, %arg16: memref<72x1024xbf16, #tpu.memory_space<vmem>>) attributes {dimension_semantics = [#tpu.dimension_semantics<parallel>], iteration_bounds = array<i64: 2>, scalar_prefetch = 0 : i64, scratch_operands = 1 : i64, tpu.core_type = #tpu.core_type<tc>, window_params = [{transform_indices = @transform_0, window_bounds = array<i64: 1, 8, 1024>}, {transform_indices = @transform_1, window_bounds = array<i64: 1, 4, 1>}, {pipeline_mode = #tpu.pipeline_mode<synchronous>, transform_indices = @transform_2, window_bounds = array<i64: 72, 1024>}, {pipeline_mode = #tpu.pipeline_mode<synchronous>, transform_indices = @transform_3, window_bounds = array<i64: 8, 72>}, {pipeline_mode = #tpu.pipeline_mode<synchronous>, transform_indices = @transform_4, window_bounds = array<i64: 8, 1>}, {pipeline_mode = #tpu.pipeline_mode<synchronous>, transform_indices = @transform_5, window_bounds = array<i64: 8, 1>}, {pipeline_mode = #tpu.pipeline_mode<synchronous>, transform_indices = @transform_6, window_bounds = array<i64: 8, 72>}, {pipeline_mode = #tpu.pipeline_mode<synchronous>, transform_indices = @transform_7, window_bounds = array<i64: 8, 1>}, {pipeline_mode = #tpu.pipeline_mode<synchronous>, transform_indices = @transform_8, window_bounds = array<i64: 8, 1>}, {pipeline_mode = #tpu.pipeline_mode<synchronous>, transform_indices = @transform_9, window_bounds = array<i64: 4, 72>}, {pipeline_mode = #tpu.pipeline_mode<synchronous>, transform_indices = @transform_10, window_bounds = array<i64: 4, 1>}, {pipeline_mode = #tpu.pipeline_mode<synchronous>, transform_indices = @transform_11, window_bounds = array<i64: 4, 1>}, {pipeline_mode = #tpu.pipeline_mode<synchronous>, transform_indices = @transform_12, window_bounds = array<i64: 4, 72>}, {pipeline_mode = #tpu.pipeline_mode<synchronous>, transform_indices = @transform_13, window_bounds = array<i64: 4, 1>}, {transform_indices = @transform_14, window_bounds = array<i64: 1, 4, 1024>}]} {
    %c0 = arith.constant 0 : index
    %c0_0 = arith.constant 0 : index
    %c0_1 = arith.constant 0 : index
    %0 = vector.load %arg1[%c0, %c0_0, %c0_1] : memref<1x8x1024xf32, #tpu.memory_space<vmem>>, vector<1x8x1024xf32>
    %1 = vector.shape_cast %0 : vector<1x8x1024xf32> to vector<8x1024xf32>
    %c33_i32 = arith.constant 33 : i32
    %2 = tpu.dynamic_rotate %1 by %c33_i32 dim 1 : vector<8x1024xf32>, i32 -> vector<8x1024xf32>
    %c0_2 = arith.constant 0 : index
    %c0_3 = arith.constant 0 : index
    %3 = vector.load %arg3[%c0_2, %c0_3] : memref<72x1024xf32, #tpu.memory_space<vmem>>, vector<8x1024xf32>
    %4 = arith.mulf %2, %3 : vector<8x1024xf32>
    %5 = arith.truncf %4 : vector<8x1024xf32> to vector<8x1024xbf16>
    %c0_4 = arith.constant 0 : index
    %c0_5 = arith.constant 0 : index
    %6 = vector.load %arg16[%c0_4, %c0_5] : memref<72x1024xbf16, #tpu.memory_space<vmem>>, vector<8x1024xbf16>
    tpu.vector_store %arg16[%c0_4, %c0_5], %5 {strides = array<i32>} : memref<72x1024xbf16, #tpu.memory_space<vmem>>, vector<8x1024xbf16>,
    %c32_i32 = arith.constant 32 : i32
    %7 = tpu.dynamic_rotate %1 by %c32_i32 dim 1 : vector<8x1024xf32>, i32 -> vector<8x1024xf32>
    %c8 = arith.constant 8 : index
    %c0_6 = arith.constant 0 : index
    %8 = vector.load %arg3[%c8, %c0_6] : memref<72x1024xf32, #tpu.memory_space<vmem>>, vector<8x1024xf32>
    %9 = arith.mulf %7, %8 : vector<8x1024xf32>
    %10 = arith.truncf %9 : vector<8x1024xf32> to vector<8x1024xbf16>
    %c8_7 = arith.constant 8 : index
    %c0_8 = arith.constant 0 : index
    %11 = vector.load %arg16[%c8_7, %c0_8] : memref<72x1024xbf16, #tpu.memory_space<vmem>>, vector<8x1024xbf16>
    tpu.vector_store %arg16[%c8_7, %c0_8], %10 {strides = array<i32>} : memref<72x1024xbf16, #tpu.memory_space<vmem>>, vector<8x1024xbf16>,
    %c31_i32 = arith.constant 31 : i32
    %12 = tpu.dynamic_rotate %1 by %c31_i32 dim 1 : vector<8x1024xf32>, i32 -> vector<8x1024xf32>
    %c16 = arith.constant 16 : index
    %c0_9 = arith.constant 0 : index
    %13 = vector.load %arg3[%c16, %c0_9] : memref<72x1024xf32, #tpu.memory_space<vmem>>, vector<8x1024xf32>
    %14 = arith.mulf %12, %13 : vector<8x1024xf32>
    %15 = arith.truncf %14 : vector<8x1024xf32> to vector<8x1024xbf16>
    %c16_10 = arith.constant 16 : index
    %c0_11 = arith.constant 0 : index
    %16 = vector.load %arg16[%c16_10, %c0_11] : memref<72x1024xbf16, #tpu.memory_space<vmem>>, vector<8x1024xbf16>
    tpu.vector_store %arg16[%c16_10, %c0_11], %15 {strides = array<i32>} : memref<72x1024xbf16, #tpu.memory_space<vmem>>, vector<8x1024xbf16>,
    %c1_i32 = arith.constant 1 : i32
    %17 = tpu.dynamic_rotate %1 by %c1_i32 dim 1 : vector<8x1024xf32>, i32 -> vector<8x1024xf32>
    %c24 = arith.constant 24 : index
    %c0_12 = arith.constant 0 : index
    %18 = vector.load %arg3[%c24, %c0_12] : memref<72x1024xf32, #tpu.memory_space<vmem>>, vector<8x1024xf32>
    %19 = arith.mulf %17, %18 : vector<8x1024xf32>
    %20 = arith.truncf %19 : vector<8x1024xf32> to vector<8x1024xbf16>
    %c24_13 = arith.constant 24 : index
    %c0_14 = arith.constant 0 : index
    %21 = vector.load %arg16[%c24_13, %c0_14] : memref<72x1024xbf16, #tpu.memory_space<vmem>>, vector<8x1024xbf16>
    tpu.vector_store %arg16[%c24_13, %c0_14], %20 {strides = array<i32>} : memref<72x1024xbf16, #tpu.memory_space<vmem>>, vector<8x1024xbf16>,
    %22 = arith.truncf %1 : vector<8x1024xf32> to vector<8x1024xbf16>
    %c32 = arith.constant 32 : index
    %c0_15 = arith.constant 0 : index
    %23 = vector.load %arg16[%c32, %c0_15] : memref<72x1024xbf16, #tpu.memory_space<vmem>>, vector<8x1024xbf16>
    tpu.vector_store %arg16[%c32, %c0_15], %22 {strides = array<i32>} : memref<72x1024xbf16, #tpu.memory_space<vmem>>, vector<8x1024xbf16>,
    %c1023_i32 = arith.constant 1023 : i32
    %24 = tpu.dynamic_rotate %1 by %c1023_i32 dim 1 : vector<8x1024xf32>, i32 -> vector<8x1024xf32>
    %c40 = arith.constant 40 : index
    %c0_16 = arith.constant 0 : index
    %25 = vector.load %arg3[%c40, %c0_16] : memref<72x1024xf32, #tpu.memory_space<vmem>>, vector<8x1024xf32>
    %26 = arith.mulf %24, %25 : vector<8x1024xf32>
    %27 = arith.truncf %26 : vector<8x1024xf32> to vector<8x1024xbf16>
    %c40_17 = arith.constant 40 : index
    %c0_18 = arith.constant 0 : index
    %28 = vector.load %arg16[%c40_17, %c0_18] : memref<72x1024xbf16, #tpu.memory_space<vmem>>, vector<8x1024xbf16>
    tpu.vector_store %arg16[%c40_17, %c0_18], %27 {strides = array<i32>} : memref<72x1024xbf16, #tpu.memory_space<vmem>>, vector<8x1024xbf16>,
    %c993_i32 = arith.constant 993 : i32
    %29 = tpu.dynamic_rotate %1 by %c993_i32 dim 1 : vector<8x1024xf32>, i32 -> vector<8x1024xf32>
    %c48 = arith.constant 48 : index
    %c0_19 = arith.constant 0 : index
    %30 = vector.load %arg3[%c48, %c0_19] : memref<72x1024xf32, #tpu.memory_space<vmem>>, vector<8x1024xf32>
    %31 = arith.mulf %29, %30 : vector<8x1024xf32>
    %32 = arith.truncf %31 : vector<8x1024xf32> to vector<8x1024xbf16>
    %c48_20 = arith.constant 48 : index
    %c0_21 = arith.constant 0 : index
    %33 = vector.load %arg16[%c48_20, %c0_21] : memref<72x1024xbf16, #tpu.memory_space<vmem>>, vector<8x1024xbf16>
    tpu.vector_store %arg16[%c48_20, %c0_21], %32 {strides = array<i32>} : memref<72x1024xbf16, #tpu.memory_space<vmem>>, vector<8x1024xbf16>,
    %c992_i32 = arith.constant 992 : i32
    %34 = tpu.dynamic_rotate %1 by %c992_i32 dim 1 : vector<8x1024xf32>, i32 -> vector<8x1024xf32>
    %c56 = arith.constant 56 : index
    %c0_22 = arith.constant 0 : index
    %35 = vector.load %arg3[%c56, %c0_22] : memref<72x1024xf32, #tpu.memory_space<vmem>>, vector<8x1024xf32>
    %36 = arith.mulf %34, %35 : vector<8x1024xf32>
    %37 = arith.truncf %36 : vector<8x1024xf32> to vector<8x1024xbf16>
    %c56_23 = arith.constant 56 : index
    %c0_24 = arith.constant 0 : index
    %38 = vector.load %arg16[%c56_23, %c0_24] : memref<72x1024xbf16, #tpu.memory_space<vmem>>, vector<8x1024xbf16>
    tpu.vector_store %arg16[%c56_23, %c0_24], %37 {strides = array<i32>} : memref<72x1024xbf16, #tpu.memory_space<vmem>>, vector<8x1024xbf16>,
    %c991_i32 = arith.constant 991 : i32
    %39 = tpu.dynamic_rotate %1 by %c991_i32 dim 1 : vector<8x1024xf32>, i32 -> vector<8x1024xf32>
    %c64 = arith.constant 64 : index
    %c0_25 = arith.constant 0 : index
    %40 = vector.load %arg3[%c64, %c0_25] : memref<72x1024xf32, #tpu.memory_space<vmem>>, vector<8x1024xf32>
    %41 = arith.mulf %39, %40 : vector<8x1024xf32>
    %42 = arith.truncf %41 : vector<8x1024xf32> to vector<8x1024xbf16>
    %c64_26 = arith.constant 64 : index
    %c0_27 = arith.constant 0 : index
    %43 = vector.load %arg16[%c64_26, %c0_27] : memref<72x1024xbf16, #tpu.memory_space<vmem>>, vector<8x1024xbf16>
    tpu.vector_store %arg16[%c64_26, %c0_27], %42 {strides = array<i32>} : memref<72x1024xbf16, #tpu.memory_space<vmem>>, vector<8x1024xbf16>,
    %c0_28 = arith.constant 0 : index
    %c0_29 = arith.constant 0 : index
    %44 = vector.load %arg4[%c0_28, %c0_29] : memref<8x72xbf16, #tpu.memory_space<vmem>>, vector<8x72xbf16>
    %c0_30 = arith.constant 0 : index
    %c0_31 = arith.constant 0 : index
    %45 = vector.load %arg16[%c0_30, %c0_31] : memref<72x1024xbf16, #tpu.memory_space<vmem>>, vector<72x1024xbf16>
    %cst = arith.constant dense<0.000000e+00> : vector<8x1024xf32>
    %46 = tpu.matmul %44, %45, %cst {dimension_numbers = #tpu.dot_dimension_numbers<[1], [0], [0], [1], [0, 0, 1, 1], [], []>} : vector<8x72xbf16>, vector<72x1024xbf16>, vector<8x1024xf32> -> vector<8x1024xf32>
    %c0_32 = arith.constant 0 : index
    %c0_33 = arith.constant 0 : index
    %47 = vector.load %arg5[%c0_32, %c0_33] : memref<8x1xf32, #tpu.memory_space<vmem>>, vector<8x1xf32>
    %c0_34 = arith.constant 0 : index
    %c0_35 = arith.constant 0 : index
    %48 = vector.load %arg6[%c0_34, %c0_35] : memref<8x1xf32, #tpu.memory_space<vmem>>, vector<8x1xf32>
    %49 = vector.shape_cast %46 : vector<8x1024xf32> to vector<1x8x1024xf32>
    %cst_36 = arith.constant dense<0.000000e+00> : vector<1xf32>
    %50 = vector.multi_reduction <add>, %49, %cst_36 [1, 2] : vector<1x8x1024xf32> to vector<1xf32>
    %51 = vector.shape_cast %50 : vector<1xf32> to vector<1x1x1xf32>
    %52 = vector.extract %51[0, 0, 0] : f32 from vector<1x1x1xf32>
    %cst_37 = arith.constant 1.22070313E-4 : f32
    %53 = arith.mulf %52, %cst_37 : f32
    %54 = arith.mulf %46, %46 : vector<8x1024xf32>
    %55 = vector.shape_cast %54 : vector<8x1024xf32> to vector<1x8x1024xf32>
    %cst_38 = arith.constant dense<0.000000e+00> : vector<1xf32>
    %56 = vector.multi_reduction <add>, %55, %cst_38 [1, 2] : vector<1x8x1024xf32> to vector<1xf32>
    %57 = vector.shape_cast %56 : vector<1xf32> to vector<1x1x1xf32>
    %58 = vector.extract %57[0, 0, 0] : f32 from vector<1x1x1xf32>
    %cst_39 = arith.constant 1.22070313E-4 : f32
    %59 = arith.mulf %58, %cst_39 : f32
    %60 = arith.mulf %53, %53 : f32
    %61 = arith.subf %59, %60 : f32
    %cst_40 = arith.constant 0.000000e+00 : f32
    %62 = arith.maximumf %61, %cst_40 : f32
    %cst_41 = arith.constant 9.99999974E-6 : f32
    %63 = arith.addf %62, %cst_41 : f32
    %64 = math.rsqrt %63 : f32
    %65 = vector.broadcast %64 : f32 to vector<8x1xf32>
    %66 = arith.mulf %47, %65 : vector<8x1xf32>
    %67 = vector.broadcast %53 : f32 to vector<8x1xf32>
    %68 = arith.mulf %67, %66 : vector<8x1xf32>
    %69 = arith.subf %48, %68 : vector<8x1xf32>
    %70 = vector.broadcast %66 : vector<8x1xf32> to vector<8x1024xf32>
    %71 = arith.mulf %46, %70 : vector<8x1024xf32>
    %72 = vector.broadcast %69 : vector<8x1xf32> to vector<8x1024xf32>
    %73 = arith.addf %71, %72 : vector<8x1024xf32>
    %cst_42 = arith.constant 0.707106769 : f32
    %74 = vector.broadcast %cst_42 : f32 to vector<8x1024xf32>
    %75 = arith.mulf %73, %74 : vector<8x1024xf32>
    %76 = math.absf %75 : vector<8x1024xf32>
    %cst_43 = arith.constant 0.327591091 : f32
    %77 = vector.broadcast %cst_43 : f32 to vector<8x1024xf32>
    %78 = arith.mulf %77, %76 : vector<8x1024xf32>
    %cst_44 = arith.constant 1.000000e+00 : f32
    %79 = vector.broadcast %cst_44 : f32 to vector<8x1024xf32>
    %80 = arith.addf %79, %78 : vector<8x1024xf32>
    %cst_45 = arith.constant 1.000000e+00 : f32
    %81 = vector.broadcast %cst_45 : f32 to vector<8x1024xf32>
    %82 = arith.divf %81, %80 : vector<8x1024xf32>
    %cst_46 = arith.constant 1.06140542 : f32
    %83 = vector.broadcast %cst_46 : f32 to vector<8x1024xf32>
    %84 = arith.mulf %83, %82 : vector<8x1024xf32>
    %cst_47 = arith.constant 1.45315206 : f32
    %85 = vector.broadcast %cst_47 : f32 to vector<8x1024xf32>
    %86 = arith.subf %84, %85 : vector<8x1024xf32>
    %87 = arith.mulf %86, %82 : vector<8x1024xf32>
    %cst_48 = arith.constant 1.42141378 : f32
    %88 = vector.broadcast %cst_48 : f32 to vector<8x1024xf32>
    %89 = arith.addf %87, %88 : vector<8x1024xf32>
    %90 = arith.mulf %89, %82 : vector<8x1024xf32>
    %cst_49 = arith.constant 0.284496725 : f32
    %91 = vector.broadcast %cst_49 : f32 to vector<8x1024xf32>
    %92 = arith.subf %90, %91 : vector<8x1024xf32>
    %93 = arith.mulf %92, %82 : vector<8x1024xf32>
    %cst_50 = arith.constant 0.254829586 : f32
    %94 = vector.broadcast %cst_50 : f32 to vector<8x1024xf32>
    %95 = arith.addf %93, %94 : vector<8x1024xf32>
    %96 = arith.mulf %95, %82 : vector<8x1024xf32>
    %cst_51 = arith.constant 5.000000e-01 : f32
    %97 = vector.broadcast %cst_51 : f32 to vector<8x1024xf32>
    %98 = arith.mulf %97, %96 : vector<8x1024xf32>
    %cst_52 = arith.constant 0.000000e+00 : f32
    %99 = vector.broadcast %cst_52 : f32 to vector<8x1024xf32>
    %100 = arith.subf %99, %76 : vector<8x1024xf32>
    %101 = arith.mulf %100, %76 : vector<8x1024xf32>
    %102 = math.exp %101 : vector<8x1024xf32>
    %103 = arith.mulf %98, %102 : vector<8x1024xf32>
    %cst_53 = arith.constant 0.000000e+00 : f32
    %104 = vector.broadcast %cst_53 : f32 to vector<8x1024xf32>
    %105 = arith.cmpf oge, %75, %104 : vector<8x1024xf32>
    %cst_54 = arith.constant 1.000000e+00 : f32
    %106 = vector.broadcast %cst_54 : f32 to vector<8x1024xf32>
    %107 = arith.subf %106, %103 : vector<8x1024xf32>
    %108 = arith.select %105, %107, %103 : vector<8x1024xi1>, vector<8x1024xf32>
    %109 = arith.mulf %73, %108 : vector<8x1024xf32>
    %c33_i32_55 = arith.constant 33 : i32
    %110 = tpu.dynamic_rotate %109 by %c33_i32_55 dim 1 : vector<8x1024xf32>, i32 -> vector<8x1024xf32>
    %c0_56 = arith.constant 0 : index
    %c0_57 = arith.constant 0 : index
    %111 = vector.load %arg3[%c0_56, %c0_57] : memref<72x1024xf32, #tpu.memory_space<vmem>>, vector<8x1024xf32>
    %112 = arith.mulf %110, %111 : vector<8x1024xf32>
    %113 = arith.truncf %112 : vector<8x1024xf32> to vector<8x1024xbf16>
    %c0_58 = arith.constant 0 : index
    %c0_59 = arith.constant 0 : index
    %114 = vector.load %arg16[%c0_58, %c0_59] : memref<72x1024xbf16, #tpu.memory_space<vmem>>, vector<8x1024xbf16>
    tpu.vector_store %arg16[%c0_58, %c0_59], %113 {strides = array<i32>} : memref<72x1024xbf16, #tpu.memory_space<vmem>>, vector<8x1024xbf16>,
    %c32_i32_60 = arith.constant 32 : i32
    %115 = tpu.dynamic_rotate %109 by %c32_i32_60 dim 1 : vector<8x1024xf32>, i32 -> vector<8x1024xf32>
    %c8_61 = arith.constant 8 : index
    %c0_62 = arith.constant 0 : index
    %116 = vector.load %arg3[%c8_61, %c0_62] : memref<72x1024xf32, #tpu.memory_space<vmem>>, vector<8x1024xf32>
    %117 = arith.mulf %115, %116 : vector<8x1024xf32>
    %118 = arith.truncf %117 : vector<8x1024xf32> to vector<8x1024xbf16>
    %c8_63 = arith.constant 8 : index
    %c0_64 = arith.constant 0 : index
    %119 = vector.load %arg16[%c8_63, %c0_64] : memref<72x1024xbf16, #tpu.memory_space<vmem>>, vector<8x1024xbf16>
    tpu.vector_store %arg16[%c8_63, %c0_64], %118 {strides = array<i32>} : memref<72x1024xbf16, #tpu.memory_space<vmem>>, vector<8x1024xbf16>,
    %c31_i32_65 = arith.constant 31 : i32
    %120 = tpu.dynamic_rotate %109 by %c31_i32_65 dim 1 : vector<8x1024xf32>, i32 -> vector<8x1024xf32>
    %c16_66 = arith.constant 16 : index
    %c0_67 = arith.constant 0 : index
    %121 = vector.load %arg3[%c16_66, %c0_67] : memref<72x1024xf32, #tpu.memory_space<vmem>>, vector<8x1024xf32>
    %122 = arith.mulf %120, %121 : vector<8x1024xf32>
    %123 = arith.truncf %122 : vector<8x1024xf32> to vector<8x1024xbf16>
    %c16_68 = arith.constant 16 : index
    %c0_69 = arith.constant 0 : index
    %124 = vector.load %arg16[%c16_68, %c0_69] : memref<72x1024xbf16, #tpu.memory_space<vmem>>, vector<8x1024xbf16>
    tpu.vector_store %arg16[%c16_68, %c0_69], %123 {strides = array<i32>} : memref<72x1024xbf16, #tpu.memory_space<vmem>>, vector<8x1024xbf16>,
    %c1_i32_70 = arith.constant 1 : i32
    %125 = tpu.dynamic_rotate %109 by %c1_i32_70 dim 1 : vector<8x1024xf32>, i32 -> vector<8x1024xf32>
    %c24_71 = arith.constant 24 : index
    %c0_72 = arith.constant 0 : index
    %126 = vector.load %arg3[%c24_71, %c0_72] : memref<72x1024xf32, #tpu.memory_space<vmem>>, vector<8x1024xf32>
    %127 = arith.mulf %125, %126 : vector<8x1024xf32>
    %128 = arith.truncf %127 : vector<8x1024xf32> to vector<8x1024xbf16>
    %c24_73 = arith.constant 24 : index
    %c0_74 = arith.constant 0 : index
    %129 = vector.load %arg16[%c24_73, %c0_74] : memref<72x1024xbf16, #tpu.memory_space<vmem>>, vector<8x1024xbf16>
    tpu.vector_store %arg16[%c24_73, %c0_74], %128 {strides = array<i32>} : memref<72x1024xbf16, #tpu.memory_space<vmem>>, vector<8x1024xbf16>,
    %130 = arith.truncf %109 : vector<8x1024xf32> to vector<8x1024xbf16>
    %c32_75 = arith.constant 32 : index
    %c0_76 = arith.constant 0 : index
    %131 = vector.load %arg16[%c32_75, %c0_76] : memref<72x1024xbf16, #tpu.memory_space<vmem>>, vector<8x1024xbf16>
    tpu.vector_store %arg16[%c32_75, %c0_76], %130 {strides = array<i32>} : memref<72x1024xbf16, #tpu.memory_space<vmem>>, vector<8x1024xbf16>,
    %c1023_i32_77 = arith.constant 1023 : i32
    %132 = tpu.dynamic_rotate %109 by %c1023_i32_77 dim 1 : vector<8x1024xf32>, i32 -> vector<8x1024xf32>
    %c40_78 = arith.constant 40 : index
    %c0_79 = arith.constant 0 : index
    %133 = vector.load %arg3[%c40_78, %c0_79] : memref<72x1024xf32, #tpu.memory_space<vmem>>, vector<8x1024xf32>
    %134 = arith.mulf %132, %133 : vector<8x1024xf32>
    %135 = arith.truncf %134 : vector<8x1024xf32> to vector<8x1024xbf16>
    %c40_80 = arith.constant 40 : index
    %c0_81 = arith.constant 0 : index
    %136 = vector.load %arg16[%c40_80, %c0_81] : memref<72x1024xbf16, #tpu.memory_space<vmem>>, vector<8x1024xbf16>
    tpu.vector_store %arg16[%c40_80, %c0_81], %135 {strides = array<i32>} : memref<72x1024xbf16, #tpu.memory_space<vmem>>, vector<8x1024xbf16>,
    %c993_i32_82 = arith.constant 993 : i32
    %137 = tpu.dynamic_rotate %109 by %c993_i32_82 dim 1 : vector<8x1024xf32>, i32 -> vector<8x1024xf32>
    %c48_83 = arith.constant 48 : index
    %c0_84 = arith.constant 0 : index
    %138 = vector.load %arg3[%c48_83, %c0_84] : memref<72x1024xf32, #tpu.memory_space<vmem>>, vector<8x1024xf32>
    %139 = arith.mulf %137, %138 : vector<8x1024xf32>
    %140 = arith.truncf %139 : vector<8x1024xf32> to vector<8x1024xbf16>
    %c48_85 = arith.constant 48 : index
    %c0_86 = arith.constant 0 : index
    %141 = vector.load %arg16[%c48_85, %c0_86] : memref<72x1024xbf16, #tpu.memory_space<vmem>>, vector<8x1024xbf16>
    tpu.vector_store %arg16[%c48_85, %c0_86], %140 {strides = array<i32>} : memref<72x1024xbf16, #tpu.memory_space<vmem>>, vector<8x1024xbf16>,
    %c992_i32_87 = arith.constant 992 : i32
    %142 = tpu.dynamic_rotate %109 by %c992_i32_87 dim 1 : vector<8x1024xf32>, i32 -> vector<8x1024xf32>
    %c56_88 = arith.constant 56 : index
    %c0_89 = arith.constant 0 : index
    %143 = vector.load %arg3[%c56_88, %c0_89] : memref<72x1024xf32, #tpu.memory_space<vmem>>, vector<8x1024xf32>
    %144 = arith.mulf %142, %143 : vector<8x1024xf32>
    %145 = arith.truncf %144 : vector<8x1024xf32> to vector<8x1024xbf16>
    %c56_90 = arith.constant 56 : index
    %c0_91 = arith.constant 0 : index
    %146 = vector.load %arg16[%c56_90, %c0_91] : memref<72x1024xbf16, #tpu.memory_space<vmem>>, vector<8x1024xbf16>
    tpu.vector_store %arg16[%c56_90, %c0_91], %145 {strides = array<i32>} : memref<72x1024xbf16, #tpu.memory_space<vmem>>, vector<8x1024xbf16>,
    %c991_i32_92 = arith.constant 991 : i32
    %147 = tpu.dynamic_rotate %109 by %c991_i32_92 dim 1 : vector<8x1024xf32>, i32 -> vector<8x1024xf32>
    %c64_93 = arith.constant 64 : index
    %c0_94 = arith.constant 0 : index
    %148 = vector.load %arg3[%c64_93, %c0_94] : memref<72x1024xf32, #tpu.memory_space<vmem>>, vector<8x1024xf32>
    %149 = arith.mulf %147, %148 : vector<8x1024xf32>
    %150 = arith.truncf %149 : vector<8x1024xf32> to vector<8x1024xbf16>
    %c64_95 = arith.constant 64 : index
    %c0_96 = arith.constant 0 : index
    %151 = vector.load %arg16[%c64_95, %c0_96] : memref<72x1024xbf16, #tpu.memory_space<vmem>>, vector<8x1024xbf16>
    tpu.vector_store %arg16[%c64_95, %c0_96], %150 {strides = array<i32>} : memref<72x1024xbf16, #tpu.memory_space<vmem>>, vector<8x1024xbf16>,
    %c0_97 = arith.constant 0 : index
    %c0_98 = arith.constant 0 : index
    %152 = vector.load %arg7[%c0_97, %c0_98] : memref<8x72xbf16, #tpu.memory_space<vmem>>, vector<8x72xbf16>
    %c0_99 = arith.constant 0 : index
    %c0_100 = arith.constant 0 : index
    %153 = vector.load %arg16[%c0_99, %c0_100] : memref<72x1024xbf16, #tpu.memory_space<vmem>>, vector<72x1024xbf16>
    %cst_101 = arith.constant dense<0.000000e+00> : vector<8x1024xf32>
    %154 = tpu.matmul %152, %153, %cst_101 {dimension_numbers = #tpu.dot_dimension_numbers<[1], [0], [0], [1], [0, 0, 1, 1], [], []>} : vector<8x72xbf16>, vector<72x1024xbf16>, vector<8x1024xf32> -> vector<8x1024xf32>
    %c0_102 = arith.constant 0 : index
    %c0_103 = arith.constant 0 : index
    %155 = vector.load %arg8[%c0_102, %c0_103] : memref<8x1xf32, #tpu.memory_space<vmem>>, vector<8x1xf32>
    %c0_104 = arith.constant 0 : index
    %c0_105 = arith.constant 0 : index
    %156 = vector.load %arg9[%c0_104, %c0_105] : memref<8x1xf32, #tpu.memory_space<vmem>>, vector<8x1xf32>
    %157 = vector.shape_cast %154 : vector<8x1024xf32> to vector<1x8x1024xf32>
    %cst_106 = arith.constant dense<0.000000e+00> : vector<1xf32>
    %158 = vector.multi_reduction <add>, %157, %cst_106 [1, 2] : vector<1x8x1024xf32> to vector<1xf32>
    %159 = vector.shape_cast %158 : vector<1xf32> to vector<1x1x1xf32>
    %160 = vector.extract %159[0, 0, 0] : f32 from vector<1x1x1xf32>
    %cst_107 = arith.constant 1.22070313E-4 : f32
    %161 = arith.mulf %160, %cst_107 : f32
    %162 = arith.mulf %154, %154 : vector<8x1024xf32>
    %163 = vector.shape_cast %162 : vector<8x1024xf32> to vector<1x8x1024xf32>
    %cst_108 = arith.constant dense<0.000000e+00> : vector<1xf32>
    %164 = vector.multi_reduction <add>, %163, %cst_108 [1, 2] : vector<1x8x1024xf32> to vector<1xf32>
    %165 = vector.shape_cast %164 : vector<1xf32> to vector<1x1x1xf32>
    %166 = vector.extract %165[0, 0, 0] : f32 from vector<1x1x1xf32>
    %cst_109 = arith.constant 1.22070313E-4 : f32
    %167 = arith.mulf %166, %cst_109 : f32
    %168 = arith.mulf %161, %161 : f32
    %169 = arith.subf %167, %168 : f32
    %cst_110 = arith.constant 0.000000e+00 : f32
    %170 = arith.maximumf %169, %cst_110 : f32
    %cst_111 = arith.constant 9.99999974E-6 : f32
    %171 = arith.addf %170, %cst_111 : f32
    %172 = math.rsqrt %171 : f32
    %173 = vector.broadcast %172 : f32 to vector<8x1xf32>
    %174 = arith.mulf %155, %173 : vector<8x1xf32>
    %175 = vector.broadcast %161 : f32 to vector<8x1xf32>
    %176 = arith.mulf %175, %174 : vector<8x1xf32>
    %177 = arith.subf %156, %176 : vector<8x1xf32>
    %178 = vector.broadcast %174 : vector<8x1xf32> to vector<8x1024xf32>
    %179 = arith.mulf %154, %178 : vector<8x1024xf32>
    %180 = vector.broadcast %177 : vector<8x1xf32> to vector<8x1024xf32>
    %181 = arith.addf %179, %180 : vector<8x1024xf32>
    %182 = arith.addf %1, %181 : vector<8x1024xf32>
    %cst_112 = arith.constant 0.707106769 : f32
    %183 = vector.broadcast %cst_112 : f32 to vector<8x1024xf32>
    %184 = arith.mulf %182, %183 : vector<8x1024xf32>
    %185 = math.absf %184 : vector<8x1024xf32>
    %cst_113 = arith.constant 0.327591091 : f32
    %186 = vector.broadcast %cst_113 : f32 to vector<8x1024xf32>
    %187 = arith.mulf %186, %185 : vector<8x1024xf32>
    %cst_114 = arith.constant 1.000000e+00 : f32
    %188 = vector.broadcast %cst_114 : f32 to vector<8x1024xf32>
    %189 = arith.addf %188, %187 : vector<8x1024xf32>
    %cst_115 = arith.constant 1.000000e+00 : f32
    %190 = vector.broadcast %cst_115 : f32 to vector<8x1024xf32>
    %191 = arith.divf %190, %189 : vector<8x1024xf32>
    %cst_116 = arith.constant 1.06140542 : f32
    %192 = vector.broadcast %cst_116 : f32 to vector<8x1024xf32>
    %193 = arith.mulf %192, %191 : vector<8x1024xf32>
    %cst_117 = arith.constant 1.45315206 : f32
    %194 = vector.broadcast %cst_117 : f32 to vector<8x1024xf32>
    %195 = arith.subf %193, %194 : vector<8x1024xf32>
    %196 = arith.mulf %195, %191 : vector<8x1024xf32>
    %cst_118 = arith.constant 1.42141378 : f32
    %197 = vector.broadcast %cst_118 : f32 to vector<8x1024xf32>
    %198 = arith.addf %196, %197 : vector<8x1024xf32>
    %199 = arith.mulf %198, %191 : vector<8x1024xf32>
    %cst_119 = arith.constant 0.284496725 : f32
    %200 = vector.broadcast %cst_119 : f32 to vector<8x1024xf32>
    %201 = arith.subf %199, %200 : vector<8x1024xf32>
    %202 = arith.mulf %201, %191 : vector<8x1024xf32>
    %cst_120 = arith.constant 0.254829586 : f32
    %203 = vector.broadcast %cst_120 : f32 to vector<8x1024xf32>
    %204 = arith.addf %202, %203 : vector<8x1024xf32>
    %205 = arith.mulf %204, %191 : vector<8x1024xf32>
    %cst_121 = arith.constant 5.000000e-01 : f32
    %206 = vector.broadcast %cst_121 : f32 to vector<8x1024xf32>
    %207 = arith.mulf %206, %205 : vector<8x1024xf32>
    %cst_122 = arith.constant 0.000000e+00 : f32
    %208 = vector.broadcast %cst_122 : f32 to vector<8x1024xf32>
    %209 = arith.subf %208, %185 : vector<8x1024xf32>
    %210 = arith.mulf %209, %185 : vector<8x1024xf32>
    %211 = math.exp %210 : vector<8x1024xf32>
    %212 = arith.mulf %207, %211 : vector<8x1024xf32>
    %cst_123 = arith.constant 0.000000e+00 : f32
    %213 = vector.broadcast %cst_123 : f32 to vector<8x1024xf32>
    %214 = arith.cmpf oge, %184, %213 : vector<8x1024xf32>
    %cst_124 = arith.constant 1.000000e+00 : f32
    %215 = vector.broadcast %cst_124 : f32 to vector<8x1024xf32>
    %216 = arith.subf %215, %212 : vector<8x1024xf32>
    %217 = arith.select %214, %216, %212 : vector<8x1024xi1>, vector<8x1024xf32>
    %218 = arith.mulf %182, %217 : vector<8x1024xf32>
    %c33_i32_125 = arith.constant 33 : i32
    %219 = tpu.dynamic_rotate %218 by %c33_i32_125 dim 1 : vector<8x1024xf32>, i32 -> vector<8x1024xf32>
    %c0_126 = arith.constant 0 : index
    %c0_127 = arith.constant 0 : index
    %220 = vector.load %arg3[%c0_126, %c0_127] : memref<72x1024xf32, #tpu.memory_space<vmem>>, vector<8x1024xf32>
    %221 = arith.mulf %219, %220 : vector<8x1024xf32>
    %222 = arith.truncf %221 : vector<8x1024xf32> to vector<8x1024xbf16>
    %c0_128 = arith.constant 0 : index
    %c0_129 = arith.constant 0 : index
    %223 = vector.load %arg16[%c0_128, %c0_129] : memref<72x1024xbf16, #tpu.memory_space<vmem>>, vector<8x1024xbf16>
    tpu.vector_store %arg16[%c0_128, %c0_129], %222 {strides = array<i32>} : memref<72x1024xbf16, #tpu.memory_space<vmem>>, vector<8x1024xbf16>,
    %c32_i32_130 = arith.constant 32 : i32
    %224 = tpu.dynamic_rotate %218 by %c32_i32_130 dim 1 : vector<8x1024xf32>, i32 -> vector<8x1024xf32>
    %c8_131 = arith.constant 8 : index
    %c0_132 = arith.constant 0 : index
    %225 = vector.load %arg3[%c8_131, %c0_132] : memref<72x1024xf32, #tpu.memory_space<vmem>>, vector<8x1024xf32>
    %226 = arith.mulf %224, %225 : vector<8x1024xf32>
    %227 = arith.truncf %226 : vector<8x1024xf32> to vector<8x1024xbf16>
    %c8_133 = arith.constant 8 : index
    %c0_134 = arith.constant 0 : index
    %228 = vector.load %arg16[%c8_133, %c0_134] : memref<72x1024xbf16, #tpu.memory_space<vmem>>, vector<8x1024xbf16>
    tpu.vector_store %arg16[%c8_133, %c0_134], %227 {strides = array<i32>} : memref<72x1024xbf16, #tpu.memory_space<vmem>>, vector<8x1024xbf16>,
    %c31_i32_135 = arith.constant 31 : i32
    %229 = tpu.dynamic_rotate %218 by %c31_i32_135 dim 1 : vector<8x1024xf32>, i32 -> vector<8x1024xf32>
    %c16_136 = arith.constant 16 : index
    %c0_137 = arith.constant 0 : index
    %230 = vector.load %arg3[%c16_136, %c0_137] : memref<72x1024xf32, #tpu.memory_space<vmem>>, vector<8x1024xf32>
    %231 = arith.mulf %229, %230 : vector<8x1024xf32>
    %232 = arith.truncf %231 : vector<8x1024xf32> to vector<8x1024xbf16>
    %c16_138 = arith.constant 16 : index
    %c0_139 = arith.constant 0 : index
    %233 = vector.load %arg16[%c16_138, %c0_139] : memref<72x1024xbf16, #tpu.memory_space<vmem>>, vector<8x1024xbf16>
    tpu.vector_store %arg16[%c16_138, %c0_139], %232 {strides = array<i32>} : memref<72x1024xbf16, #tpu.memory_space<vmem>>, vector<8x1024xbf16>,
    %c1_i32_140 = arith.constant 1 : i32
    %234 = tpu.dynamic_rotate %218 by %c1_i32_140 dim 1 : vector<8x1024xf32>, i32 -> vector<8x1024xf32>
    %c24_141 = arith.constant 24 : index
    %c0_142 = arith.constant 0 : index
    %235 = vector.load %arg3[%c24_141, %c0_142] : memref<72x1024xf32, #tpu.memory_space<vmem>>, vector<8x1024xf32>
    %236 = arith.mulf %234, %235 : vector<8x1024xf32>
    %237 = arith.truncf %236 : vector<8x1024xf32> to vector<8x1024xbf16>
    %c24_143 = arith.constant 24 : index
    %c0_144 = arith.constant 0 : index
    %238 = vector.load %arg16[%c24_143, %c0_144] : memref<72x1024xbf16, #tpu.memory_space<vmem>>, vector<8x1024xbf16>
    tpu.vector_store %arg16[%c24_143, %c0_144], %237 {strides = array<i32>} : memref<72x1024xbf16, #tpu.memory_space<vmem>>, vector<8x1024xbf16>,
    %239 = arith.truncf %218 : vector<8x1024xf32> to vector<8x1024xbf16>
    %c32_145 = arith.constant 32 : index
    %c0_146 = arith.constant 0 : index
    %240 = vector.load %arg16[%c32_145, %c0_146] : memref<72x1024xbf16, #tpu.memory_space<vmem>>, vector<8x1024xbf16>
    tpu.vector_store %arg16[%c32_145, %c0_146], %239 {strides = array<i32>} : memref<72x1024xbf16, #tpu.memory_space<vmem>>, vector<8x1024xbf16>,
    %c1023_i32_147 = arith.constant 1023 : i32
    %241 = tpu.dynamic_rotate %218 by %c1023_i32_147 dim 1 : vector<8x1024xf32>, i32 -> vector<8x1024xf32>
    %c40_148 = arith.constant 40 : index
    %c0_149 = arith.constant 0 : index
    %242 = vector.load %arg3[%c40_148, %c0_149] : memref<72x1024xf32, #tpu.memory_space<vmem>>, vector<8x1024xf32>
    %243 = arith.mulf %241, %242 : vector<8x1024xf32>
    %244 = arith.truncf %243 : vector<8x1024xf32> to vector<8x1024xbf16>
    %c40_150 = arith.constant 40 : index
    %c0_151 = arith.constant 0 : index
    %245 = vector.load %arg16[%c40_150, %c0_151] : memref<72x1024xbf16, #tpu.memory_space<vmem>>, vector<8x1024xbf16>
    tpu.vector_store %arg16[%c40_150, %c0_151], %244 {strides = array<i32>} : memref<72x1024xbf16, #tpu.memory_space<vmem>>, vector<8x1024xbf16>,
    %c993_i32_152 = arith.constant 993 : i32
    %246 = tpu.dynamic_rotate %218 by %c993_i32_152 dim 1 : vector<8x1024xf32>, i32 -> vector<8x1024xf32>
    %c48_153 = arith.constant 48 : index
    %c0_154 = arith.constant 0 : index
    %247 = vector.load %arg3[%c48_153, %c0_154] : memref<72x1024xf32, #tpu.memory_space<vmem>>, vector<8x1024xf32>
    %248 = arith.mulf %246, %247 : vector<8x1024xf32>
    %249 = arith.truncf %248 : vector<8x1024xf32> to vector<8x1024xbf16>
    %c48_155 = arith.constant 48 : index
    %c0_156 = arith.constant 0 : index
    %250 = vector.load %arg16[%c48_155, %c0_156] : memref<72x1024xbf16, #tpu.memory_space<vmem>>, vector<8x1024xbf16>
    tpu.vector_store %arg16[%c48_155, %c0_156], %249 {strides = array<i32>} : memref<72x1024xbf16, #tpu.memory_space<vmem>>, vector<8x1024xbf16>,
    %c992_i32_157 = arith.constant 992 : i32
    %251 = tpu.dynamic_rotate %218 by %c992_i32_157 dim 1 : vector<8x1024xf32>, i32 -> vector<8x1024xf32>
    %c56_158 = arith.constant 56 : index
    %c0_159 = arith.constant 0 : index
    %252 = vector.load %arg3[%c56_158, %c0_159] : memref<72x1024xf32, #tpu.memory_space<vmem>>, vector<8x1024xf32>
    %253 = arith.mulf %251, %252 : vector<8x1024xf32>
    %254 = arith.truncf %253 : vector<8x1024xf32> to vector<8x1024xbf16>
    %c56_160 = arith.constant 56 : index
    %c0_161 = arith.constant 0 : index
    %255 = vector.load %arg16[%c56_160, %c0_161] : memref<72x1024xbf16, #tpu.memory_space<vmem>>, vector<8x1024xbf16>
    tpu.vector_store %arg16[%c56_160, %c0_161], %254 {strides = array<i32>} : memref<72x1024xbf16, #tpu.memory_space<vmem>>, vector<8x1024xbf16>,
    %c991_i32_162 = arith.constant 991 : i32
    %256 = tpu.dynamic_rotate %218 by %c991_i32_162 dim 1 : vector<8x1024xf32>, i32 -> vector<8x1024xf32>
    %c64_163 = arith.constant 64 : index
    %c0_164 = arith.constant 0 : index
    %257 = vector.load %arg3[%c64_163, %c0_164] : memref<72x1024xf32, #tpu.memory_space<vmem>>, vector<8x1024xf32>
    %258 = arith.mulf %256, %257 : vector<8x1024xf32>
    %259 = arith.truncf %258 : vector<8x1024xf32> to vector<8x1024xbf16>
    %c64_165 = arith.constant 64 : index
    %c0_166 = arith.constant 0 : index
    %260 = vector.load %arg16[%c64_165, %c0_166] : memref<72x1024xbf16, #tpu.memory_space<vmem>>, vector<8x1024xbf16>
    tpu.vector_store %arg16[%c64_165, %c0_166], %259 {strides = array<i32>} : memref<72x1024xbf16, #tpu.memory_space<vmem>>, vector<8x1024xbf16>,
    %c0_167 = arith.constant 0 : index
    %c0_168 = arith.constant 0 : index
    %261 = vector.load %arg10[%c0_167, %c0_168] : memref<4x72xbf16, #tpu.memory_space<vmem>>, vector<4x72xbf16>
    %c0_169 = arith.constant 0 : index
    %c0_170 = arith.constant 0 : index
    %262 = vector.load %arg16[%c0_169, %c0_170] : memref<72x1024xbf16, #tpu.memory_space<vmem>>, vector<72x1024xbf16>
    %cst_171 = arith.constant dense<0.000000e+00> : vector<4x1024xf32>
    %263 = tpu.matmul %261, %262, %cst_171 {dimension_numbers = #tpu.dot_dimension_numbers<[1], [0], [0], [1], [0, 0, 1, 1], [], []>} : vector<4x72xbf16>, vector<72x1024xbf16>, vector<4x1024xf32> -> vector<4x1024xf32>
    %c0_172 = arith.constant 0 : index
    %c0_173 = arith.constant 0 : index
    %264 = vector.load %arg11[%c0_172, %c0_173] : memref<4x1xf32, #tpu.memory_space<vmem>>, vector<4x1xf32>
    %c0_174 = arith.constant 0 : index
    %c0_175 = arith.constant 0 : index
    %265 = vector.load %arg12[%c0_174, %c0_175] : memref<4x1xf32, #tpu.memory_space<vmem>>, vector<4x1xf32>
    %266 = vector.shape_cast %263 : vector<4x1024xf32> to vector<1x4x1024xf32>
    %cst_176 = arith.constant dense<0.000000e+00> : vector<1xf32>
    %267 = vector.multi_reduction <add>, %266, %cst_176 [1, 2] : vector<1x4x1024xf32> to vector<1xf32>
    %268 = vector.shape_cast %267 : vector<1xf32> to vector<1x1x1xf32>
    %269 = vector.extract %268[0, 0, 0] : f32 from vector<1x1x1xf32>
    %cst_177 = arith.constant 2.44140625E-4 : f32
    %270 = arith.mulf %269, %cst_177 : f32
    %271 = arith.mulf %263, %263 : vector<4x1024xf32>
    %272 = vector.shape_cast %271 : vector<4x1024xf32> to vector<1x4x1024xf32>
    %cst_178 = arith.constant dense<0.000000e+00> : vector<1xf32>
    %273 = vector.multi_reduction <add>, %272, %cst_178 [1, 2] : vector<1x4x1024xf32> to vector<1xf32>
    %274 = vector.shape_cast %273 : vector<1xf32> to vector<1x1x1xf32>
    %275 = vector.extract %274[0, 0, 0] : f32 from vector<1x1x1xf32>
    %cst_179 = arith.constant 2.44140625E-4 : f32
    %276 = arith.mulf %275, %cst_179 : f32
    %277 = arith.mulf %270, %270 : f32
    %278 = arith.subf %276, %277 : f32
    %cst_180 = arith.constant 0.000000e+00 : f32
    %279 = arith.maximumf %278, %cst_180 : f32
    %cst_181 = arith.constant 9.99999974E-6 : f32
    %280 = arith.addf %279, %cst_181 : f32
    %281 = math.rsqrt %280 : f32
    %282 = vector.broadcast %281 : f32 to vector<4x1xf32>
    %283 = arith.mulf %264, %282 : vector<4x1xf32>
    %284 = vector.broadcast %270 : f32 to vector<4x1xf32>
    %285 = arith.mulf %284, %283 : vector<4x1xf32>
    %286 = arith.subf %265, %285 : vector<4x1xf32>
    %287 = vector.broadcast %283 : vector<4x1xf32> to vector<4x1024xf32>
    %288 = arith.mulf %263, %287 : vector<4x1024xf32>
    %289 = vector.broadcast %286 : vector<4x1xf32> to vector<4x1024xf32>
    %290 = arith.addf %288, %289 : vector<4x1024xf32>
    %cst_182 = arith.constant 0.707106769 : f32
    %291 = vector.broadcast %cst_182 : f32 to vector<4x1024xf32>
    %292 = arith.mulf %290, %291 : vector<4x1024xf32>
    %293 = math.absf %292 : vector<4x1024xf32>
    %cst_183 = arith.constant 0.327591091 : f32
    %294 = vector.broadcast %cst_183 : f32 to vector<4x1024xf32>
    %295 = arith.mulf %294, %293 : vector<4x1024xf32>
    %cst_184 = arith.constant 1.000000e+00 : f32
    %296 = vector.broadcast %cst_184 : f32 to vector<4x1024xf32>
    %297 = arith.addf %296, %295 : vector<4x1024xf32>
    %cst_185 = arith.constant 1.000000e+00 : f32
    %298 = vector.broadcast %cst_185 : f32 to vector<4x1024xf32>
    %299 = arith.divf %298, %297 : vector<4x1024xf32>
    %cst_186 = arith.constant 1.06140542 : f32
    %300 = vector.broadcast %cst_186 : f32 to vector<4x1024xf32>
    %301 = arith.mulf %300, %299 : vector<4x1024xf32>
    %cst_187 = arith.constant 1.45315206 : f32
    %302 = vector.broadcast %cst_187 : f32 to vector<4x1024xf32>
    %303 = arith.subf %301, %302 : vector<4x1024xf32>
    %304 = arith.mulf %303, %299 : vector<4x1024xf32>
    %cst_188 = arith.constant 1.42141378 : f32
    %305 = vector.broadcast %cst_188 : f32 to vector<4x1024xf32>
    %306 = arith.addf %304, %305 : vector<4x1024xf32>
    %307 = arith.mulf %306, %299 : vector<4x1024xf32>
    %cst_189 = arith.constant 0.284496725 : f32
    %308 = vector.broadcast %cst_189 : f32 to vector<4x1024xf32>
    %309 = arith.subf %307, %308 : vector<4x1024xf32>
    %310 = arith.mulf %309, %299 : vector<4x1024xf32>
    %cst_190 = arith.constant 0.254829586 : f32
    %311 = vector.broadcast %cst_190 : f32 to vector<4x1024xf32>
    %312 = arith.addf %310, %311 : vector<4x1024xf32>
    %313 = arith.mulf %312, %299 : vector<4x1024xf32>
    %cst_191 = arith.constant 5.000000e-01 : f32
    %314 = vector.broadcast %cst_191 : f32 to vector<4x1024xf32>
    %315 = arith.mulf %314, %313 : vector<4x1024xf32>
    %cst_192 = arith.constant 0.000000e+00 : f32
    %316 = vector.broadcast %cst_192 : f32 to vector<4x1024xf32>
    %317 = arith.subf %316, %293 : vector<4x1024xf32>
    %318 = arith.mulf %317, %293 : vector<4x1024xf32>
    %319 = math.exp %318 : vector<4x1024xf32>
    %320 = arith.mulf %315, %319 : vector<4x1024xf32>
    %cst_193 = arith.constant 0.000000e+00 : f32
    %321 = vector.broadcast %cst_193 : f32 to vector<4x1024xf32>
    %322 = arith.cmpf oge, %292, %321 : vector<4x1024xf32>
    %cst_194 = arith.constant 1.000000e+00 : f32
    %323 = vector.broadcast %cst_194 : f32 to vector<4x1024xf32>
    %324 = arith.subf %323, %320 : vector<4x1024xf32>
    %325 = arith.select %322, %324, %320 : vector<4x1024xi1>, vector<4x1024xf32>
    %326 = arith.mulf %290, %325 : vector<4x1024xf32>
    %c33_i32_195 = arith.constant 33 : i32
    %327 = tpu.dynamic_rotate %326 by %c33_i32_195 dim 1 : vector<4x1024xf32>, i32 -> vector<4x1024xf32>
    %c0_196 = arith.constant 0 : index
    %c0_197 = arith.constant 0 : index
    %328 = vector.load %arg3[%c0_196, %c0_197] : memref<72x1024xf32, #tpu.memory_space<vmem>>, vector<4x1024xf32>
    %329 = arith.mulf %327, %328 : vector<4x1024xf32>
    %330 = arith.truncf %329 : vector<4x1024xf32> to vector<4x1024xbf16>
    %c0_198 = arith.constant 0 : index
    %c0_199 = arith.constant 0 : index
    %331 = vector.load %arg16[%c0_198, %c0_199] : memref<72x1024xbf16, #tpu.memory_space<vmem>>, vector<4x1024xbf16>
    tpu.vector_store %arg16[%c0_198, %c0_199], %330 {strides = array<i32>} : memref<72x1024xbf16, #tpu.memory_space<vmem>>, vector<4x1024xbf16>,
    %c32_i32_200 = arith.constant 32 : i32
    %332 = tpu.dynamic_rotate %326 by %c32_i32_200 dim 1 : vector<4x1024xf32>, i32 -> vector<4x1024xf32>
    %c8_201 = arith.constant 8 : index
    %c0_202 = arith.constant 0 : index
    %333 = vector.load %arg3[%c8_201, %c0_202] : memref<72x1024xf32, #tpu.memory_space<vmem>>, vector<4x1024xf32>
    %334 = arith.mulf %332, %333 : vector<4x1024xf32>
    %335 = arith.truncf %334 : vector<4x1024xf32> to vector<4x1024xbf16>
    %c8_203 = arith.constant 8 : index
    %c0_204 = arith.constant 0 : index
    %336 = vector.load %arg16[%c8_203, %c0_204] : memref<72x1024xbf16, #tpu.memory_space<vmem>>, vector<4x1024xbf16>
    tpu.vector_store %arg16[%c8_203, %c0_204], %335 {strides = array<i32>} : memref<72x1024xbf16, #tpu.memory_space<vmem>>, vector<4x1024xbf16>,
    %c31_i32_205 = arith.constant 31 : i32
    %337 = tpu.dynamic_rotate %326 by %c31_i32_205 dim 1 : vector<4x1024xf32>, i32 -> vector<4x1024xf32>
    %c16_206 = arith.constant 16 : index
    %c0_207 = arith.constant 0 : index
    %338 = vector.load %arg3[%c16_206, %c0_207] : memref<72x1024xf32, #tpu.memory_space<vmem>>, vector<4x1024xf32>
    %339 = arith.mulf %337, %338 : vector<4x1024xf32>
    %340 = arith.truncf %339 : vector<4x1024xf32> to vector<4x1024xbf16>
    %c16_208 = arith.constant 16 : index
    %c0_209 = arith.constant 0 : index
    %341 = vector.load %arg16[%c16_208, %c0_209] : memref<72x1024xbf16, #tpu.memory_space<vmem>>, vector<4x1024xbf16>
    tpu.vector_store %arg16[%c16_208, %c0_209], %340 {strides = array<i32>} : memref<72x1024xbf16, #tpu.memory_space<vmem>>, vector<4x1024xbf16>,
    %c1_i32_210 = arith.constant 1 : i32
    %342 = tpu.dynamic_rotate %326 by %c1_i32_210 dim 1 : vector<4x1024xf32>, i32 -> vector<4x1024xf32>
    %c24_211 = arith.constant 24 : index
    %c0_212 = arith.constant 0 : index
    %343 = vector.load %arg3[%c24_211, %c0_212] : memref<72x1024xf32, #tpu.memory_space<vmem>>, vector<4x1024xf32>
    %344 = arith.mulf %342, %343 : vector<4x1024xf32>
    %345 = arith.truncf %344 : vector<4x1024xf32> to vector<4x1024xbf16>
    %c24_213 = arith.constant 24 : index
    %c0_214 = arith.constant 0 : index
    %346 = vector.load %arg16[%c24_213, %c0_214] : memref<72x1024xbf16, #tpu.memory_space<vmem>>, vector<4x1024xbf16>
    tpu.vector_store %arg16[%c24_213, %c0_214], %345 {strides = array<i32>} : memref<72x1024xbf16, #tpu.memory_space<vmem>>, vector<4x1024xbf16>,
    %347 = arith.truncf %326 : vector<4x1024xf32> to vector<4x1024xbf16>
    %c32_215 = arith.constant 32 : index
    %c0_216 = arith.constant 0 : index
    %348 = vector.load %arg16[%c32_215, %c0_216] : memref<72x1024xbf16, #tpu.memory_space<vmem>>, vector<4x1024xbf16>
    tpu.vector_store %arg16[%c32_215, %c0_216], %347 {strides = array<i32>} : memref<72x1024xbf16, #tpu.memory_space<vmem>>, vector<4x1024xbf16>,
    %c1023_i32_217 = arith.constant 1023 : i32
    %349 = tpu.dynamic_rotate %326 by %c1023_i32_217 dim 1 : vector<4x1024xf32>, i32 -> vector<4x1024xf32>
    %c40_218 = arith.constant 40 : index
    %c0_219 = arith.constant 0 : index
    %350 = vector.load %arg3[%c40_218, %c0_219] : memref<72x1024xf32, #tpu.memory_space<vmem>>, vector<4x1024xf32>
    %351 = arith.mulf %349, %350 : vector<4x1024xf32>
    %352 = arith.truncf %351 : vector<4x1024xf32> to vector<4x1024xbf16>
    %c40_220 = arith.constant 40 : index
    %c0_221 = arith.constant 0 : index
    %353 = vector.load %arg16[%c40_220, %c0_221] : memref<72x1024xbf16, #tpu.memory_space<vmem>>, vector<4x1024xbf16>
    tpu.vector_store %arg16[%c40_220, %c0_221], %352 {strides = array<i32>} : memref<72x1024xbf16, #tpu.memory_space<vmem>>, vector<4x1024xbf16>,
    %c993_i32_222 = arith.constant 993 : i32
    %354 = tpu.dynamic_rotate %326 by %c993_i32_222 dim 1 : vector<4x1024xf32>, i32 -> vector<4x1024xf32>
    %c48_223 = arith.constant 48 : index
    %c0_224 = arith.constant 0 : index
    %355 = vector.load %arg3[%c48_223, %c0_224] : memref<72x1024xf32, #tpu.memory_space<vmem>>, vector<4x1024xf32>
    %356 = arith.mulf %354, %355 : vector<4x1024xf32>
    %357 = arith.truncf %356 : vector<4x1024xf32> to vector<4x1024xbf16>
    %c48_225 = arith.constant 48 : index
    %c0_226 = arith.constant 0 : index
    %358 = vector.load %arg16[%c48_225, %c0_226] : memref<72x1024xbf16, #tpu.memory_space<vmem>>, vector<4x1024xbf16>
    tpu.vector_store %arg16[%c48_225, %c0_226], %357 {strides = array<i32>} : memref<72x1024xbf16, #tpu.memory_space<vmem>>, vector<4x1024xbf16>,
    %c992_i32_227 = arith.constant 992 : i32
    %359 = tpu.dynamic_rotate %326 by %c992_i32_227 dim 1 : vector<4x1024xf32>, i32 -> vector<4x1024xf32>
    %c56_228 = arith.constant 56 : index
    %c0_229 = arith.constant 0 : index
    %360 = vector.load %arg3[%c56_228, %c0_229] : memref<72x1024xf32, #tpu.memory_space<vmem>>, vector<4x1024xf32>
    %361 = arith.mulf %359, %360 : vector<4x1024xf32>
    %362 = arith.truncf %361 : vector<4x1024xf32> to vector<4x1024xbf16>
    %c56_230 = arith.constant 56 : index
    %c0_231 = arith.constant 0 : index
    %363 = vector.load %arg16[%c56_230, %c0_231] : memref<72x1024xbf16, #tpu.memory_space<vmem>>, vector<4x1024xbf16>
    tpu.vector_store %arg16[%c56_230, %c0_231], %362 {strides = array<i32>} : memref<72x1024xbf16, #tpu.memory_space<vmem>>, vector<4x1024xbf16>,
    %c991_i32_232 = arith.constant 991 : i32
    %364 = tpu.dynamic_rotate %326 by %c991_i32_232 dim 1 : vector<4x1024xf32>, i32 -> vector<4x1024xf32>
    %c64_233 = arith.constant 64 : index
    %c0_234 = arith.constant 0 : index
    %365 = vector.load %arg3[%c64_233, %c0_234] : memref<72x1024xf32, #tpu.memory_space<vmem>>, vector<4x1024xf32>
    %366 = arith.mulf %364, %365 : vector<4x1024xf32>
    %367 = arith.truncf %366 : vector<4x1024xf32> to vector<4x1024xbf16>
    %c64_235 = arith.constant 64 : index
    %c0_236 = arith.constant 0 : index
    %368 = vector.load %arg16[%c64_235, %c0_236] : memref<72x1024xbf16, #tpu.memory_space<vmem>>, vector<4x1024xbf16>
    tpu.vector_store %arg16[%c64_235, %c0_236], %367 {strides = array<i32>} : memref<72x1024xbf16, #tpu.memory_space<vmem>>, vector<4x1024xbf16>,
    %c0_237 = arith.constant 0 : index
    %c0_238 = arith.constant 0 : index
    %369 = vector.load %arg13[%c0_237, %c0_238] : memref<4x72xbf16, #tpu.memory_space<vmem>>, vector<4x72xbf16>
    %c0_239 = arith.constant 0 : index
    %c0_240 = arith.constant 0 : index
    %370 = vector.load %arg16[%c0_239, %c0_240] : memref<72x1024xbf16, #tpu.memory_space<vmem>>, vector<72x1024xbf16>
    %cst_241 = arith.constant dense<0.000000e+00> : vector<4x1024xf32>
    %371 = tpu.matmul %369, %370, %cst_241 {dimension_numbers = #tpu.dot_dimension_numbers<[1], [0], [0], [1], [0, 0, 1, 1], [], []>} : vector<4x72xbf16>, vector<72x1024xbf16>, vector<4x1024xf32> -> vector<4x1024xf32>
    %c0_242 = arith.constant 0 : index
    %c0_243 = arith.constant 0 : index
    %372 = vector.load %arg14[%c0_242, %c0_243] : memref<4x1xf32, #tpu.memory_space<vmem>>, vector<4x1xf32>
    %c0_244 = arith.constant 0 : index
    %c0_245 = arith.constant 0 : index
    %c0_246 = arith.constant 0 : index
    %373 = vector.load %arg2[%c0_244, %c0_245, %c0_246] : memref<1x4x1xf32, #tpu.memory_space<vmem>>, vector<1x4x1xf32>
    %374 = vector.shape_cast %373 : vector<1x4x1xf32> to vector<4x1xf32>
    %375 = vector.shape_cast %371 : vector<4x1024xf32> to vector<1x4x1024xf32>
    %cst_247 = arith.constant dense<0.000000e+00> : vector<1xf32>
    %376 = vector.multi_reduction <add>, %375, %cst_247 [1, 2] : vector<1x4x1024xf32> to vector<1xf32>
    %377 = vector.shape_cast %376 : vector<1xf32> to vector<1x1x1xf32>
    %378 = vector.extract %377[0, 0, 0] : f32 from vector<1x1x1xf32>
    %cst_248 = arith.constant 2.44140625E-4 : f32
    %379 = arith.mulf %378, %cst_248 : f32
    %380 = arith.mulf %371, %371 : vector<4x1024xf32>
    %381 = vector.shape_cast %380 : vector<4x1024xf32> to vector<1x4x1024xf32>
    %cst_249 = arith.constant dense<0.000000e+00> : vector<1xf32>
    %382 = vector.multi_reduction <add>, %381, %cst_249 [1, 2] : vector<1x4x1024xf32> to vector<1xf32>
    %383 = vector.shape_cast %382 : vector<1xf32> to vector<1x1x1xf32>
    %384 = vector.extract %383[0, 0, 0] : f32 from vector<1x1x1xf32>
    %cst_250 = arith.constant 2.44140625E-4 : f32
    %385 = arith.mulf %384, %cst_250 : f32
    %386 = arith.mulf %379, %379 : f32
    %387 = arith.subf %385, %386 : f32
    %cst_251 = arith.constant 0.000000e+00 : f32
    %388 = arith.maximumf %387, %cst_251 : f32
    %cst_252 = arith.constant 9.99999974E-6 : f32
    %389 = arith.addf %388, %cst_252 : f32
    %390 = math.rsqrt %389 : f32
    %391 = vector.broadcast %390 : f32 to vector<4x1xf32>
    %392 = arith.mulf %372, %391 : vector<4x1xf32>
    %393 = vector.broadcast %379 : f32 to vector<4x1xf32>
    %394 = arith.mulf %393, %392 : vector<4x1xf32>
    %395 = arith.subf %374, %394 : vector<4x1xf32>
    %396 = vector.broadcast %392 : vector<4x1xf32> to vector<4x1024xf32>
    %397 = arith.mulf %371, %396 : vector<4x1024xf32>
    %398 = vector.broadcast %395 : vector<4x1xf32> to vector<4x1024xf32>
    %399 = arith.addf %397, %398 : vector<4x1024xf32>
    %c0_253 = arith.constant 0 : index
    %c0_254 = arith.constant 0 : index
    %c0_255 = arith.constant 0 : index
    %400 = vector.load %arg15[%c0_253, %c0_254, %c0_255] : memref<1x4x1024xf32, #tpu.memory_space<vmem>>, vector<1x4x1024xf32>
    %401 = vector.shape_cast %400 : vector<1x4x1024xf32> to vector<4x1024xf32>
    %402 = vector.shape_cast %399 : vector<4x1024xf32> to vector<1x4x1024xf32>
    tpu.vector_store %arg15[%c0_253, %c0_254, %c0_255], %402 {strides = array<i32>} : memref<1x4x1024xf32, #tpu.memory_space<vmem>>, vector<1x4x1024xf32>,
    return
  }
  func.func @transform_0(%arg0: i32) -> (i32, i32, i32) {
    %c0_i32 = arith.constant 0 : i32
    %c0_i32_0 = arith.constant 0 : i32
    %c0_i32_1 = arith.constant 0 : i32
    return %arg0, %c0_i32, %c0_i32_0 : i32, i32, i32
  }
  func.func @transform_1(%arg0: i32) -> (i32, i32, i32) {
    %c0_i32 = arith.constant 0 : i32
    %c0_i32_0 = arith.constant 0 : i32
    %c0_i32_1 = arith.constant 0 : i32
    return %arg0, %c0_i32, %c0_i32_0 : i32, i32, i32
  }
  func.func @transform_2(%arg0: i32) -> (i32, i32) {
    %c0_i32 = arith.constant 0 : i32
    %c0_i32_0 = arith.constant 0 : i32
    %c0_i32_1 = arith.constant 0 : i32
    return %c0_i32, %c0_i32_0 : i32, i32
  }
  func.func @transform_3(%arg0: i32) -> (i32, i32) {
    %c0_i32 = arith.constant 0 : i32
    %c0_i32_0 = arith.constant 0 : i32
    %c0_i32_1 = arith.constant 0 : i32
    return %c0_i32, %c0_i32_0 : i32, i32
  }
  func.func @transform_4(%arg0: i32) -> (i32, i32) {
    %c0_i32 = arith.constant 0 : i32
    %c0_i32_0 = arith.constant 0 : i32
    %c0_i32_1 = arith.constant 0 : i32
    return %c0_i32, %c0_i32_0 : i32, i32
  }
  func.func @transform_5(%arg0: i32) -> (i32, i32) {
    %c0_i32 = arith.constant 0 : i32
    %c0_i32_0 = arith.constant 0 : i32
    %c0_i32_1 = arith.constant 0 : i32
    return %c0_i32, %c0_i32_0 : i32, i32
  }
  func.func @transform_6(%arg0: i32) -> (i32, i32) {
    %c0_i32 = arith.constant 0 : i32
    %c0_i32_0 = arith.constant 0 : i32
    %c0_i32_1 = arith.constant 0 : i32
    return %c0_i32, %c0_i32_0 : i32, i32
  }
  func.func @transform_7(%arg0: i32) -> (i32, i32) {
    %c0_i32 = arith.constant 0 : i32
    %c0_i32_0 = arith.constant 0 : i32
    %c0_i32_1 = arith.constant 0 : i32
    return %c0_i32, %c0_i32_0 : i32, i32
  }
  func.func @transform_8(%arg0: i32) -> (i32, i32) {
    %c0_i32 = arith.constant 0 : i32
    %c0_i32_0 = arith.constant 0 : i32
    %c0_i32_1 = arith.constant 0 : i32
    return %c0_i32, %c0_i32_0 : i32, i32
  }
  func.func @transform_9(%arg0: i32) -> (i32, i32) {
    %c0_i32 = arith.constant 0 : i32
    %c0_i32_0 = arith.constant 0 : i32
    %c0_i32_1 = arith.constant 0 : i32
    return %c0_i32, %c0_i32_0 : i32, i32
  }
  func.func @transform_10(%arg0: i32) -> (i32, i32) {
    %c0_i32 = arith.constant 0 : i32
    %c0_i32_0 = arith.constant 0 : i32
    %c0_i32_1 = arith.constant 0 : i32
    return %c0_i32, %c0_i32_0 : i32, i32
  }
  func.func @transform_11(%arg0: i32) -> (i32, i32) {
    %c0_i32 = arith.constant 0 : i32
    %c0_i32_0 = arith.constant 0 : i32
    %c0_i32_1 = arith.constant 0 : i32
    return %c0_i32, %c0_i32_0 : i32, i32
  }
  func.func @transform_12(%arg0: i32) -> (i32, i32) {
    %c0_i32 = arith.constant 0 : i32
    %c0_i32_0 = arith.constant 0 : i32
    %c0_i32_1 = arith.constant 0 : i32
    return %c0_i32, %c0_i32_0 : i32, i32
  }
  func.func @transform_13(%arg0: i32) -> (i32, i32) {
    %c0_i32 = arith.constant 0 : i32
    %c0_i32_0 = arith.constant 0 : i32
    %c0_i32_1 = arith.constant 0 : i32
    return %c0_i32, %c0_i32_0 : i32, i32
  }
  func.func @transform_14(%arg0: i32) -> (i32, i32, i32) {
    %c0_i32 = arith.constant 0 : i32
    %c0_i32_0 = arith.constant 0 : i32
    %c0_i32_1 = arith.constant 0 : i32
    return %arg0, %c0_i32, %c0_i32_0 : i32, i32, i32
  }
}

</mosaic_0001>

<llo_original>
// kernel: up_forward.1
$region0: #{up_forward.1}
  #allocation0 [shape = 'u32[]', space=smem, size = 0x4, offset = 0x4, fixed_abs, tag = 'smem constant byte address 0x4 - core index']
  #allocation1 [shape = 'u32[144,128]{1,0:T(1,128)}', space=vmem, size = 0x12000, scoped, tag = 'internal scratch']
  #allocation2 [shape = 'bf16[72,1024]{1,0:T(8,128)(2,1)}', space=vmem, size = 0x24000, scoped, tag = 'scratch operand']
  %s0 = inlined_call_operand.vmem [shape: f32[2,8,1024], index: 0, kind: input, shape index: {}]
  %s1 = inlined_call_operand.vmem [shape: f32[2,4,1], index: 1, kind: input, shape index: {}]
  %s2 = inlined_call_operand.vmem [shape: f32[72,1024], index: 2, kind: input, shape index: {}]
  %s3 = inlined_call_operand.vmem [shape: bf16[8,72], index: 3, kind: input, shape index: {}]
  %s4 = inlined_call_operand.vmem [shape: f32[8,1], index: 4, kind: input, shape index: {}]
  %s5 = inlined_call_operand.vmem [shape: f32[8,1], index: 5, kind: input, shape index: {}]
  %s6 = inlined_call_operand.vmem [shape: bf16[8,72], index: 6, kind: input, shape index: {}]
  %s7 = inlined_call_operand.vmem [shape: f32[8,1], index: 7, kind: input, shape index: {}]
  %s8 = inlined_call_operand.vmem [shape: f32[8,1], index: 8, kind: input, shape index: {}]
  %s9 = inlined_call_operand.vmem [shape: bf16[4,72], index: 9, kind: input, shape index: {}]
  %s10 = inlined_call_operand.vmem [shape: f32[4,1], index: 10, kind: input, shape index: {}]
  %s11 = inlined_call_operand.vmem [shape: f32[4,1], index: 11, kind: input, shape index: {}]
  %s12 = inlined_call_operand.vmem [shape: bf16[4,72], index: 12, kind: input, shape index: {}]
  %s13 = inlined_call_operand.vmem [shape: f32[4,1], index: 13, kind: input, shape index: {}]
  %s14 = inlined_call_operand.vmem [shape: f32[2,4,1024], index: 14, kind: output, shape index: {}]
  %s15 = sld [smem:[#allocation0]]
  $region89: #{up_forward.1} parent=0
    _
  %s17 = ssub.s32 1, %s15
  %s18 = scalar_select 0, %s17, %s15
  loop: start=0, step=1, limit=4
  $region2: #{up_forward.1} parent=0 // loop_pre_header
    _
  $region3: #{up_forward.1} parent=0 // loop_header
    %s20 = sphi 0, %s24
    %p21 = scmp.ge.s32.totalorder %s20, 4
    %s30 = sphi 0, %s32
    %s33 = sphi 0, %s30
    %s34 = sphi 0, %s33
    %s50 = sphi 0, %s34
    %s56 = sphi 0, %s58
    %s59 = sphi 0, %s56
    %s60 = sphi 0, %s59
    %s76 = sphi 0, %s60
    %s80 = sphi 0, %s80
    %s82 = sphi 0, %s80
    %s83 = sphi 0, %s82
    %s97 = sphi 0, %s83
    %s101 = sphi 0, %s101
    %s103 = sphi 0, %s101
    %s104 = sphi 0, %s103
    %s118 = sphi 0, %s104
    %s122 = sphi 0, %s122
    %s124 = sphi 0, %s122
    %s125 = sphi 0, %s124
    %s139 = sphi 0, %s125
    %s143 = sphi 0, %s143
    %s145 = sphi 0, %s143
    %s146 = sphi 0, %s145
    %s160 = sphi 0, %s146
    %s164 = sphi 0, %s164
    %s166 = sphi 0, %s164
    %s167 = sphi 0, %s166
    %s181 = sphi 0, %s167
    %s185 = sphi 0, %s185
    %s187 = sphi 0, %s185
    %s188 = sphi 0, %s187
    %s202 = sphi 0, %s188
    %s206 = sphi 0, %s206
    %s208 = sphi 0, %s206
    %s209 = sphi 0, %s208
    %s223 = sphi 0, %s209
    %s227 = sphi 0, %s227
    %s229 = sphi 0, %s227
    %s230 = sphi 0, %s229
    %s244 = sphi 0, %s230
    %s248 = sphi 0, %s248
    %s250 = sphi 0, %s248
    %s251 = sphi 0, %s250
    %s265 = sphi 0, %s251
    %s269 = sphi 0, %s269
    %s271 = sphi 0, %s269
    %s272 = sphi 0, %s271
    %s286 = sphi 0, %s272
    %s290 = sphi 0, %s290
    %s292 = sphi 0, %s290
    %s293 = sphi 0, %s292
    %s307 = sphi 0, %s293
    %s311 = sphi 0, %s311
    %s313 = sphi 0, %s311
    %s314 = sphi 0, %s313
    %s328 = sphi 0, %s314
    %s334 = sphi 0, %s336
    %s337 = sphi 0, %s334
    %s338 = sphi 0, %s337
    %s354 = sphi 0, %s338
  $region4: #{up_forward.1} parent=0 // loop_header_branch
    %23 = sbr.rel (%p21) target = $region8
  $region5: #{up_forward.1} parent=0 // loop_body
    %s25 = ssub.s32 %s20, 1
    %s26 = ssub.s32 %s20, 2
    %s27 = sadd.s32 %s20, 1
    %s28 = ssub.s32 %s20, %s27
    %p29 = scmp.eq.s32.totalorder %s28, 0
    %s31 = sadd.s32 %s30, 1
    %s32 = scalar_select %p29, %s30, %s31
    %p35 = pneg %p29
    %p36 = scmp.eq.s32.totalorder %s20, 1
    %p37 = por %p35, %p36
    %p38 = scmp.ne.s32.totalorder %s30, %s33
    %p39 = scmp.eq.s32.totalorder %s20, 0
    %p40 = por %p38, %p39
    %p41 = scmp.ne.s32.totalorder %s30, %s33
    %p42 = scmp.eq.s32.totalorder %s25, 1
    %p43 = por %p41, %p42
    %p44 = scmp.ne.s32.totalorder %s33, %s34
    %p45 = scmp.eq.s32.totalorder %s25, 0
    %p46 = por %p44, %p45
    %p47 = scmp.ne.s32.totalorder %s33, %s34
    %p48 = scmp.eq.s32.totalorder %s26, 1
    %p49 = por %p47, %p48
    %p51 = scmp.ne.s32.totalorder %s34, %s50
    %p52 = scmp.eq.s32.totalorder %s26, 0
    %p53 = por %p51, %p52
    %s54 = ssub.s32 %s20, %s27
    %p55 = scmp.eq.s32.totalorder %s54, 0
    %s57 = sadd.s32 %s56, 1
    %s58 = scalar_select %p55, %s56, %s57
    %p61 = pneg %p55
    %p62 = scmp.eq.s32.totalorder %s20, 1
    %p63 = por %p61, %p62
    %p64 = scmp.ne.s32.totalorder %s56, %s59
    %p65 = scmp.eq.s32.totalorder %s20, 0
    %p66 = por %p64, %p65
    %p67 = scmp.ne.s32.totalorder %s56, %s59
    %p68 = scmp.eq.s32.totalorder %s25, 1
    %p69 = por %p67, %p68
    %p70 = scmp.ne.s32.totalorder %s59, %s60
    %p71 = scmp.eq.s32.totalorder %s25, 0
    %p72 = por %p70, %p71
    %p73 = scmp.ne.s32.totalorder %s59, %s60
    %p74 = scmp.eq.s32.totalorder %s26, 1
    %p75 = por %p73, %p74
    %p77 = scmp.ne.s32.totalorder %s60, %s76
    %p78 = scmp.eq.s32.totalorder %s26, 0
    %p79 = por %p77, %p78
    %s81 = sadd.s32 %s80, 1
    %p84 = scmp.eq.s32.totalorder %s20, 1
    %p85 = scmp.ne.s32.totalorder %s80, %s82
    %p86 = scmp.eq.s32.totalorder %s20, 0
    %p87 = por %p85, %p86
    %p88 = scmp.ne.s32.totalorder %s80, %s82
    %p89 = scmp.eq.s32.totalorder %s25, 1
    %p90 = por %p88, %p89
    %p91 = scmp.ne.s32.totalorder %s82, %s83
    %p92 = scmp.eq.s32.totalorder %s25, 0
    %p93 = por %p91, %p92
    %p94 = scmp.ne.s32.totalorder %s82, %s83
    %p95 = scmp.eq.s32.totalorder %s26, 1
    %p96 = por %p94, %p95
    %p98 = scmp.ne.s32.totalorder %s83, %s97
    %p99 = scmp.eq.s32.totalorder %s26, 0
    %p100 = por %p98, %p99
    %s102 = sadd.s32 %s101, 1
    %p105 = scmp.eq.s32.totalorder %s20, 1
    %p106 = scmp.ne.s32.totalorder %s101, %s103
    %p107 = scmp.eq.s32.totalorder %s20, 0
    %p108 = por %p106, %p107
    %p109 = scmp.ne.s32.totalorder %s101, %s103
    %p110 = scmp.eq.s32.totalorder %s25, 1
    %p111 = por %p109, %p110
    %p112 = scmp.ne.s32.totalorder %s103, %s104
    %p113 = scmp.eq.s32.totalorder %s25, 0
    %p114 = por %p112, %p113
    %p115 = scmp.ne.s32.totalorder %s103, %s104
    %p116 = scmp.eq.s32.totalorder %s26, 1
    %p117 = por %p115, %p116
    %p119 = scmp.ne.s32.totalorder %s104, %s118
    %p120 = scmp.eq.s32.totalorder %s26, 0
    %p121 = por %p119, %p120
    %s123 = sadd.s32 %s122, 1
    %p126 = scmp.eq.s32.totalorder %s20, 1
    %p127 = scmp.ne.s32.totalorder %s122, %s124
    %p128 = scmp.eq.s32.totalorder %s20, 0
    %p129 = por %p127, %p128
    %p130 = scmp.ne.s32.totalorder %s122, %s124
    %p131 = scmp.eq.s32.totalorder %s25, 1
    %p132 = por %p130, %p131
    %p133 = scmp.ne.s32.totalorder %s124, %s125
    %p134 = scmp.eq.s32.totalorder %s25, 0
    %p135 = por %p133, %p134
    %p136 = scmp.ne.s32.totalorder %s124, %s125
    %p137 = scmp.eq.s32.totalorder %s26, 1
    %p138 = por %p136, %p137
    %p140 = scmp.ne.s32.totalorder %s125, %s139
    %p141 = scmp.eq.s32.totalorder %s26, 0
    %p142 = por %p140, %p141
    %s144 = sadd.s32 %s143, 1
    %p147 = scmp.eq.s32.totalorder %s20, 1
    %p148 = scmp.ne.s32.totalorder %s143, %s145
    %p149 = scmp.eq.s32.totalorder %s20, 0
    %p150 = por %p148, %p149
    %p151 = scmp.ne.s32.totalorder %s143, %s145
    %p152 = scmp.eq.s32.totalorder %s25, 1
    %p153 = por %p151, %p152
    %p154 = scmp.ne.s32.totalorder %s145, %s146
    %p155 = scmp.eq.s32.totalorder %s25, 0
    %p156 = por %p154, %p155
    %p157 = scmp.ne.s32.totalorder %s145, %s146
    %p158 = scmp.eq.s32.totalorder %s26, 1
    %p159 = por %p157, %p158
    %p161 = scmp.ne.s32.totalorder %s146, %s160
    %p162 = scmp.eq.s32.totalorder %s26, 0
    %p163 = por %p161, %p162
    %s165 = sadd.s32 %s164, 1
    %p168 = scmp.eq.s32.totalorder %s20, 1
    %p169 = scmp.ne.s32.totalorder %s164, %s166
    %p170 = scmp.eq.s32.totalorder %s20, 0
    %p171 = por %p169, %p170
    %p172 = scmp.ne.s32.totalorder %s164, %s166
    %p173 = scmp.eq.s32.totalorder %s25, 1
    %p174 = por %p172, %p173
    %p175 = scmp.ne.s32.totalorder %s166, %s167
    %p176 = scmp.eq.s32.totalorder %s25, 0
    %p177 = por %p175, %p176
    %p178 = scmp.ne.s32.totalorder %s166, %s167
    %p179 = scmp.eq.s32.totalorder %s26, 1
    %p180 = por %p178, %p179
    %p182 = scmp.ne.s32.totalorder %s167, %s181
    %p183 = scmp.eq.s32.totalorder %s26, 0
    %p184 = por %p182, %p183
    %s186 = sadd.s32 %s185, 1
    %p189 = scmp.eq.s32.totalorder %s20, 1
    %p190 = scmp.ne.s32.totalorder %s185, %s187
    %p191 = scmp.eq.s32.totalorder %s20, 0
    %p192 = por %p190, %p191
    %p193 = scmp.ne.s32.totalorder %s185, %s187
    %p194 = scmp.eq.s32.totalorder %s25, 1
    %p195 = por %p193, %p194
    %p196 = scmp.ne.s32.totalorder %s187, %s188
    %p197 = scmp.eq.s32.totalorder %s25, 0
    %p198 = por %p196, %p197
    %p199 = scmp.ne.s32.totalorder %s187, %s188
    %p200 = scmp.eq.s32.totalorder %s26, 1
    %p201 = por %p199, %p200
    %p203 = scmp.ne.s32.totalorder %s188, %s202
    %p204 = scmp.eq.s32.totalorder %s26, 0
    %p205 = por %p203, %p204
    %s207 = sadd.s32 %s206, 1
    %p210 = scmp.eq.s32.totalorder %s20, 1
    %p211 = scmp.ne.s32.totalorder %s206, %s208
    %p212 = scmp.eq.s32.totalorder %s20, 0
    %p213 = por %p211, %p212
    %p214 = scmp.ne.s32.totalorder %s206, %s208
    %p215 = scmp.eq.s32.totalorder %s25, 1
    %p216 = por %p214, %p215
    %p217 = scmp.ne.s32.totalorder %s208, %s209
    %p218 = scmp.eq.s32.totalorder %s25, 0
    %p219 = por %p217, %p218
    %p220 = scmp.ne.s32.totalorder %s208, %s209
    %p221 = scmp.eq.s32.totalorder %s26, 1
    %p222 = por %p220, %p221
    %p224 = scmp.ne.s32.totalorder %s209, %s223
    %p225 = scmp.eq.s32.totalorder %s26, 0
    %p226 = por %p224, %p225
    %s228 = sadd.s32 %s227, 1
    %p231 = scmp.eq.s32.totalorder %s20, 1
    %p232 = scmp.ne.s32.totalorder %s227, %s229
    %p233 = scmp.eq.s32.totalorder %s20, 0
    %p234 = por %p232, %p233
    %p235 = scmp.ne.s32.totalorder %s227, %s229
    %p236 = scmp.eq.s32.totalorder %s25, 1
    %p237 = por %p235, %p236
    %p238 = scmp.ne.s32.totalorder %s229, %s230
    %p239 = scmp.eq.s32.totalorder %s25, 0
    %p240 = por %p238, %p239
    %p241 = scmp.ne.s32.totalorder %s229, %s230
    %p242 = scmp.eq.s32.totalorder %s26, 1
    %p243 = por %p241, %p242
    %p245 = scmp.ne.s32.totalorder %s230, %s244
    %p246 = scmp.eq.s32.totalorder %s26, 0
    %p247 = por %p245, %p246
    %s249 = sadd.s32 %s248, 1
    %p252 = scmp.eq.s32.totalorder %s20, 1
    %p253 = scmp.ne.s32.totalorder %s248, %s250
    %p254 = scmp.eq.s32.totalorder %s20, 0
    %p255 = por %p253, %p254
    %p256 = scmp.ne.s32.totalorder %s248, %s250
    %p257 = scmp.eq.s32.totalorder %s25, 1
    %p258 = por %p256, %p257
    %p259 = scmp.ne.s32.totalorder %s250, %s251
    %p260 = scmp.eq.s32.totalorder %s25, 0
    %p261 = por %p259, %p260
    %p262 = scmp.ne.s32.totalorder %s250, %s251
    %p263 = scmp.eq.s32.totalorder %s26, 1
    %p264 = por %p262, %p263
    %p266 = scmp.ne.s32.totalorder %s251, %s265
    %p267 = scmp.eq.s32.totalorder %s26, 0
    %p268 = por %p266, %p267
    %s270 = sadd.s32 %s269, 1
    %p273 = scmp.eq.s32.totalorder %s20, 1
    %p274 = scmp.ne.s32.totalorder %s269, %s271
    %p275 = scmp.eq.s32.totalorder %s20, 0
    %p276 = por %p274, %p275
    %p277 = scmp.ne.s32.totalorder %s269, %s271
    %p278 = scmp.eq.s32.totalorder %s25, 1
    %p279 = por %p277, %p278
    %p280 = scmp.ne.s32.totalorder %s271, %s272
    %p281 = scmp.eq.s32.totalorder %s25, 0
    %p282 = por %p280, %p281
    %p283 = scmp.ne.s32.totalorder %s271, %s272
    %p284 = scmp.eq.s32.totalorder %s26, 1
    %p285 = por %p283, %p284
    %p287 = scmp.ne.s32.totalorder %s272, %s286
    %p288 = scmp.eq.s32.totalorder %s26, 0
    %p289 = por %p287, %p288
    %s291 = sadd.s32 %s290, 1
    %p294 = scmp.eq.s32.totalorder %s20, 1
    %p295 = scmp.ne.s32.totalorder %s290, %s292
    %p296 = scmp.eq.s32.totalorder %s20, 0
    %p297 = por %p295, %p296
    %p298 = scmp.ne.s32.totalorder %s290, %s292
    %p299 = scmp.eq.s32.totalorder %s25, 1
    %p300 = por %p298, %p299
    %p301 = scmp.ne.s32.totalorder %s292, %s293
    %p302 = scmp.eq.s32.totalorder %s25, 0
    %p303 = por %p301, %p302
    %p304 = scmp.ne.s32.totalorder %s292, %s293
    %p305 = scmp.eq.s32.totalorder %s26, 1
    %p306 = por %p304, %p305
    %p308 = scmp.ne.s32.totalorder %s293, %s307
    %p309 = scmp.eq.s32.totalorder %s26, 0
    %p310 = por %p308, %p309
    %s312 = sadd.s32 %s311, 1
    %p315 = scmp.eq.s32.totalorder %s20, 1
    %p316 = scmp.ne.s32.totalorder %s311, %s313
    %p317 = scmp.eq.s32.totalorder %s20, 0
    %p318 = por %p316, %p317
    %p319 = scmp.ne.s32.totalorder %s311, %s313
    %p320 = scmp.eq.s32.totalorder %s25, 1
    %p321 = por %p319, %p320
    %p322 = scmp.ne.s32.totalorder %s313, %s314
    %p323 = scmp.eq.s32.totalorder %s25, 0
    %p324 = por %p322, %p323
    %p325 = scmp.ne.s32.totalorder %s313, %s314
    %p326 = scmp.eq.s32.totalorder %s26, 1
    %p327 = por %p325, %p326
    %p329 = scmp.ne.s32.totalorder %s314, %s328
    %p330 = scmp.eq.s32.totalorder %s26, 0
    %p331 = por %p329, %p330
    %s332 = ssub.s32 %s20, %s27
    %p333 = scmp.eq.s32.totalorder %s332, 0
    %s335 = sadd.s32 %s334, 1
    %s336 = scalar_select %p333, %s334, %s335
    %p339 = pneg %p333
    %p340 = scmp.eq.s32.totalorder %s20, 1
    %p341 = por %p339, %p340
    %p342 = scmp.ne.s32.totalorder %s334, %s337
    %p343 = scmp.eq.s32.totalorder %s20, 0
    %p344 = por %p342, %p343
    %p345 = scmp.ne.s32.totalorder %s334, %s337
    %p346 = scmp.eq.s32.totalorder %s25, 1
    %p347 = por %p345, %p346
    %p348 = scmp.ne.s32.totalorder %s337, %s338
    %p349 = scmp.eq.s32.totalorder %s25, 0
    %p350 = por %p348, %p349
    %p351 = scmp.ne.s32.totalorder %s337, %s338
    %p352 = scmp.eq.s32.totalorder %s26, 1
    %p353 = por %p351, %p352
    %p355 = scmp.ne.s32.totalorder %s338, %s354
    %p356 = scmp.eq.s32.totalorder %s26, 0
    %p357 = por %p355, %p356
    %p358 = scmp.le.s32.totalorder 1, %s20
    %p359 = scmp.lt.s32.totalorder %s20, 3
    %p360 = pnand %p358, %p359
    %p361 = pneg %p360
    // Predicated region
    $region9: #{up_forward.1} parent=5 // pred_check
      _
    $region10: #{up_forward.1} parent=5 // pred_check_branch
      %363 = sbr.rel (%p360) target = $region12
    $region11: #{up_forward.1} parent=5 // pred_region
      %s364 = ssub.s32 %s20, 1
      // Predicated region
      $region13: #{up_forward.1} parent=11 // pred_check
        %p365 = pneg %p93
      $region14: #{up_forward.1} parent=11 // pred_check_branch
        %367 = sbr.rel (%p365) target = $region16
      $region15: #{up_forward.1} parent=11 // pred_region
        _
      $region16: #{up_forward.1} parent=11 // pred_fallthru
        _
      // Predicated region
      $region17: #{up_forward.1} parent=11 // pred_check
        %p368 = pneg %p114
      $region18: #{up_forward.1} parent=11 // pred_check_branch
        %370 = sbr.rel (%p368) target = $region20
      $region19: #{up_forward.1} parent=11 // pred_region
        _
      $region20: #{up_forward.1} parent=11 // pred_fallthru
        _
      // Predicated region
      $region21: #{up_forward.1} parent=11 // pred_check
        %p371 = pneg %p135
      $region22: #{up_forward.1} parent=11 // pred_check_branch
        %373 = sbr.rel (%p371) target = $region24
      $region23: #{up_forward.1} parent=11 // pred_region
        _
      $region24: #{up_forward.1} parent=11 // pred_fallthru
        _
      // Predicated region
      $region25: #{up_forward.1} parent=11 // pred_check
        %p374 = pneg %p156
      $region26: #{up_forward.1} parent=11 // pred_check_branch
        %376 = sbr.rel (%p374) target = $region28
      $region27: #{up_forward.1} parent=11 // pred_region
        _
      $region28: #{up_forward.1} parent=11 // pred_fallthru
        _
      // Predicated region
      $region29: #{up_forward.1} parent=11 // pred_check
        %p377 = pneg %p177
      $region30: #{up_forward.1} parent=11 // pred_check_branch
        %379 = sbr.rel (%p377) target = $region32
      $region31: #{up_forward.1} parent=11 // pred_region
        _
      $region32: #{up_forward.1} parent=11 // pred_fallthru
        _
      // Predicated region
      $region33: #{up_forward.1} parent=11 // pred_check
        %p380 = pneg %p198
      $region34: #{up_forward.1} parent=11 // pred_check_branch
        %382 = sbr.rel (%p380) target = $region36
      $region35: #{up_forward.1} parent=11 // pred_region
        _
      $region36: #{up_forward.1} parent=11 // pred_fallthru
        _
      // Predicated region
      $region37: #{up_forward.1} parent=11 // pred_check
        %p383 = pneg %p219
      $region38: #{up_forward.1} parent=11 // pred_check_branch
        %385 = sbr.rel (%p383) target = $region40
      $region39: #{up_forward.1} parent=11 // pred_region
        _
      $region40: #{up_forward.1} parent=11 // pred_fallthru
        _
      // Predicated region
      $region41: #{up_forward.1} parent=11 // pred_check
        %p386 = pneg %p240
      $region42: #{up_forward.1} parent=11 // pred_check_branch
        %388 = sbr.rel (%p386) target = $region44
      $region43: #{up_forward.1} parent=11 // pred_region
        _
      $region44: #{up_forward.1} parent=11 // pred_fallthru
        _
      // Predicated region
      $region45: #{up_forward.1} parent=11 // pred_check
        %p389 = pneg %p261
      $region46: #{up_forward.1} parent=11 // pred_check_branch
        %391 = sbr.rel (%p389) target = $region48
      $region47: #{up_forward.1} parent=11 // pred_region
        _
      $region48: #{up_forward.1} parent=11 // pred_fallthru
        _
      // Predicated region
      $region49: #{up_forward.1} parent=11 // pred_check
        %p392 = pneg %p282
      $region50: #{up_forward.1} parent=11 // pred_check_branch
        %394 = sbr.rel (%p392) target = $region52
      $region51: #{up_forward.1} parent=11 // pred_region
        _
      $region52: #{up_forward.1} parent=11 // pred_fallthru
        _
      // Predicated region
      $region53: #{up_forward.1} parent=11 // pred_check
        %p395 = pneg %p303
      $region54: #{up_forward.1} parent=11 // pred_check_branch
        %397 = sbr.rel (%p395) target = $region56
      $region55: #{up_forward.1} parent=11 // pred_region
        _
      $region56: #{up_forward.1} parent=11 // pred_fallthru
        _
      // Predicated region
      $region57: #{up_forward.1} parent=11 // pred_check
        %p398 = pneg %p324
      $region58: #{up_forward.1} parent=11 // pred_check_branch
        %400 = sbr.rel (%p398) target = $region60
      $region59: #{up_forward.1} parent=11 // pred_region
        _
      $region60: #{up_forward.1} parent=11 // pred_fallthru
        _
    $region12: #{up_forward.1} parent=5 // pred_fallthru
      _
    %p401 = scmp.lt.s32.totalorder %s20, 2
    // Predicated region
    $region61: #{up_forward.1} parent=5 // pred_check
      %p402 = pneg %p401
    $region62: #{up_forward.1} parent=5 // pred_check_branch
      %404 = sbr.rel (%p402) target = $region64
    $region63: #{up_forward.1} parent=5 // pred_region
      // Predicated region
      $region65: #{up_forward.1} parent=63 // pred_check
        %p405 = pneg %p40
      $region66: #{up_forward.1} parent=63 // pred_check_branch
        %407 = sbr.rel (%p405) target = $region68
      $region67: #{up_forward.1} parent=63 // pred_region
        %p408 = scmp.lt.s32.totalorder %s20, 1
        %s409 = scalar_select %p408, %s20, 1
        %s410 = smul.addr %s409, 8
        %s411 = smul.addr %s410, 8
        %s412 = scalar_lea.vmem %s0, %s411
      $region68: #{up_forward.1} parent=63 // pred_fallthru
        _
      // Predicated region
      $region69: #{up_forward.1} parent=63 // pred_check
        %p413 = pneg %p66
      $region70: #{up_forward.1} parent=63 // pred_check_branch
        %415 = sbr.rel (%p413) target = $region72
      $region71: #{up_forward.1} parent=63 // pred_region
        %p416 = scmp.lt.s32.totalorder %s20, 1
        %s417 = scalar_select %p416, %s20, 1
        %s418 = smul.addr %s417, 4
        %s419 = scalar_lea.vmem %s1, %s418
      $region72: #{up_forward.1} parent=63 // pred_fallthru
        _
    $region64: #{up_forward.1} parent=5 // pred_fallthru
      _
    %p420 = scmp.le.s32.totalorder 1, %s20
    %p421 = scmp.lt.s32.totalorder %s20, 3
    %p422 = pnand %p420, %p421
    %p423 = pneg %p422
    // Predicated region
    $region73: #{up_forward.1} parent=5 // pred_check
      _
    $region74: #{up_forward.1} parent=5 // pred_check_branch
      %425 = sbr.rel (%p422) target = $region76
    $region75: #{up_forward.1} parent=5 // pred_region
      %s426 = ssub.s32 %s20, 1
      %p427 = scmp.lt.s32.totalorder %s25, 1
      %s428 = scalar_select %p427, %s25, 1
      %s429 = smul.addr %s428, 8
      %s430 = smul.addr %s429, 8
      %s431 = scalar_lea.vmem %s0, %s430
      %p432 = pneg %p46
      %p433 = pneg %p43
      %p434 = scmp.lt.s32.totalorder %s25, 1
      %s435 = scalar_select %p434, %s25, 1
      %s436 = smul.addr %s435, 4
      %s437 = scalar_lea.vmem %s1, %s436
      %p438 = pneg %p72
      %p439 = pneg %p69
      %p440 = pneg %p93
      %p441 = pneg %p90
      %p442 = pneg %p114
      %p443 = pneg %p111
      %p444 = pneg %p135
      %p445 = pneg %p132
      %p446 = pneg %p156
      %p447 = pneg %p153
      %p448 = pneg %p177
      %p449 = pneg %p174
      %p450 = pneg %p198
      %p451 = pneg %p195
      %p452 = pneg %p219
      %p453 = pneg %p216
      %p454 = pneg %p240
      %p455 = pneg %p237
      %p456 = pneg %p261
      %p457 = pneg %p258
      %p458 = pneg %p282
      %p459 = pneg %p279
      %p460 = pneg %p303
      %p461 = pneg %p300
      %p462 = pneg %p324
      %p463 = pneg %p321
      %p464 = pneg %p350
      %p465 = pneg %p347
      %p466 = scmp.lt.s32.totalorder %s25, 1
      %s467 = scalar_select %p466, %s25, 1
      %s468 = smul.addr %s467, 8
      %s469 = smul.addr %s468, 4
      %s470 = scalar_lea.vmem %s14, %s469
      %p471 = scmp.lt.s32.totalorder %s25, 1
      %s472 = scalar_select %p471, %s25, 1
      %s473 = smul.addr %s472, 8
      %s474 = smul.addr %s473, 8
      %s475 = scalar_lea.vmem %s0, %s474
      %p476 = scmp.lt.s32.totalorder %s25, 1
      %s477 = scalar_select %p476, %s25, 1
      %s478 = smul.addr %s477, 4
      %s479 = scalar_lea.vmem %s1, %s478
      %p480 = scmp.lt.s32.totalorder %s25, 1
      %s481 = scalar_select %p480, %s25, 1
      %s482 = smul.addr %s481, 8
      %s483 = smul.addr %s482, 4
      %s484 = scalar_lea.vmem %s14, %s483
      %v486 = vld [vmem:[%s475] sm:$0xff]
      %v487 = vld [vmem:[%s475 + $0x8] sm:$0xff]
      %v488 = vld [vmem:[%s475 + $0x10] sm:$0xff]
      %v489 = vld [vmem:[%s475 + $0x18] sm:$0xff]
      %v490 = vld [vmem:[%s475 + $0x20] sm:$0xff]
      %v491 = vld [vmem:[%s475 + $0x28] sm:$0xff]
      %v492 = vld [vmem:[%s475 + $0x30] sm:$0xff]
      %v493 = vld [vmem:[%s475 + $0x38] sm:$0xff]
      %494 = vrot.lane.b32.xlu0 %v486, 33
      %v495 = vpop.permute.xlu0 %494
      %496 = vrot.lane.b32.xlu0 %v487, 33
      %v497 = vpop.permute.xlu0 %496
      %498 = vrot.lane.b32.xlu0 %v488, 33
      %v499 = vpop.permute.xlu0 %498
      %500 = vrot.lane.b32.xlu0 %v489, 33
      %v501 = vpop.permute.xlu0 %500
      %502 = vrot.lane.b32.xlu0 %v490, 33
      %v503 = vpop.permute.xlu0 %502
      %504 = vrot.lane.b32.xlu0 %v491, 33
      %v505 = vpop.permute.xlu0 %504
      %506 = vrot.lane.b32.xlu0 %v492, 33
      %v507 = vpop.permute.xlu0 %506
      %508 = vrot.lane.b32.xlu0 %v493, 33
      %v509 = vpop.permute.xlu0 %508
      %v510 = vlaneseq
      %v511 = vand.u32 %v510, 127
      %vm512 = vcmp.lt.s32.totalorder %v511, 33
      %v513 = vsel %vm512, %v507, %v509
      %v514 = vsel %vm512, %v505, %v507
      %v515 = vsel %vm512, %v503, %v505
      %v516 = vsel %vm512, %v501, %v503
      %v517 = vsel %vm512, %v499, %v501
      %v518 = vsel %vm512, %v497, %v499
      %v519 = vsel %vm512, %v495, %v497
      %v520 = vsel %vm512, %v509, %v495
      %v521 = vld [vmem:[%s2] sm:$0xff]
      %v522 = vld [vmem:[%s2 + $0x8] sm:$0xff]
      %v523 = vld [vmem:[%s2 + $0x10] sm:$0xff]
      %v524 = vld [vmem:[%s2 + $0x18] sm:$0xff]
      %v525 = vld [vmem:[%s2 + $0x20] sm:$0xff]
      %v526 = vld [vmem:[%s2 + $0x28] sm:$0xff]
      %v527 = vld [vmem:[%s2 + $0x30] sm:$0xff]
      %v528 = vld [vmem:[%s2 + $0x38] sm:$0xff]
      %v529 = vmul.f32 %v520, %v521
      %v530 = vmul.f32 %v519, %v522
      %v531 = vmul.f32 %v518, %v523
      %v532 = vmul.f32 %v517, %v524
      %v533 = vmul.f32 %v516, %v525
      %v534 = vmul.f32 %v515, %v526
      %v535 = vmul.f32 %v514, %v527
      %v536 = vmul.f32 %v513, %v528
      %v537 = vpack.c.bf16 %v529, %v529
      %v538 = vpack.c.bf16 %v530, %v530
      %v539 = vpack.c.bf16 %v531, %v531
      %v540 = vpack.c.bf16 %v532, %v532
      %v541 = vpack.c.bf16 %v533, %v533
      %v542 = vpack.c.bf16 %v534, %v534
      %v543 = vpack.c.bf16 %v535, %v535
      %v544 = vpack.c.bf16 %v536, %v536
      %v553 = vunpack.c.l.b16 %v537
      %v554 = vunpack.c.l.b16 %v538
      %v555 = vunpack.c.l.b16 %v539
      %v556 = vunpack.c.l.b16 %v540
      %v557 = vunpack.c.l.b16 %v541
      %v558 = vunpack.c.l.b16 %v542
      %v559 = vunpack.c.l.b16 %v543
      %v560 = vunpack.c.l.b16 %v544
      %v561 = vpack.c.b16 %v554, %v553
      %v562 = vpack.c.b16 %v556, %v555
      %v563 = vpack.c.b16 %v558, %v557
      %v564 = vpack.c.b16 %v560, %v559
      %569 = vst [vmem:[#allocation2] sm:$0xff] %v561
      %570 = vst [vmem:[#allocation2 + $0x8] sm:$0xff] %v562
      %571 = vst [vmem:[#allocation2 + $0x10] sm:$0xff] %v563
      %572 = vst [vmem:[#allocation2 + $0x18] sm:$0xff] %v564
      %573 = vrot.lane.b32.xlu0 %v486, 32
      %v574 = vpop.permute.xlu0 %573
      %575 = vrot.lane.b32.xlu0 %v487, 32
      %v576 = vpop.permute.xlu0 %575
      %577 = vrot.lane.b32.xlu0 %v488, 32
      %v578 = vpop.permute.xlu0 %577
      %579 = vrot.lane.b32.xlu0 %v489, 32
      %v580 = vpop.permute.xlu0 %579
      %581 = vrot.lane.b32.xlu0 %v490, 32
      %v582 = vpop.permute.xlu0 %581
      %583 = vrot.lane.b32.xlu0 %v491, 32
      %v584 = vpop.permute.xlu0 %583
      %585 = vrot.lane.b32.xlu0 %v492, 32
      %v586 = vpop.permute.xlu0 %585
      %587 = vrot.lane.b32.xlu0 %v493, 32
      %v588 = vpop.permute.xlu0 %587
      %vm589 = vcmp.lt.s32.totalorder %v511, 32
      %v590 = vsel %vm589, %v586, %v588
      %v591 = vsel %vm589, %v584, %v586
      %v592 = vsel %vm589, %v582, %v584
      %v593 = vsel %vm589, %v580, %v582
      %v594 = vsel %vm589, %v578, %v580
      %v595 = vsel %vm589, %v576, %v578
      %v596 = vsel %vm589, %v574, %v576
      %v597 = vsel %vm589, %v588, %v574
      %v598 = vld [vmem:[%s2 + $0x40] sm:$0xff]
      %v599 = vld [vmem:[%s2 + $0x48] sm:$0xff]
      %v600 = vld [vmem:[%s2 + $0x50] sm:$0xff]
      %v601 = vld [vmem:[%s2 + $0x58] sm:$0xff]
      %v602 = vld [vmem:[%s2 + $0x60] sm:$0xff]
      %v603 = vld [vmem:[%s2 + $0x68] sm:$0xff]
      %v604 = vld [vmem:[%s2 + $0x70] sm:$0xff]
      %v605 = vld [vmem:[%s2 + $0x78] sm:$0xff]
      %v606 = vmul.f32 %v597, %v598
      %v607 = vmul.f32 %v596, %v599
      %v608 = vmul.f32 %v595, %v600
      %v609 = vmul.f32 %v594, %v601
      %v610 = vmul.f32 %v593, %v602
      %v611 = vmul.f32 %v592, %v603
      %v612 = vmul.f32 %v591, %v604
      %v613 = vmul.f32 %v590, %v605
      %v614 = vpack.c.bf16 %v606, %v606
      %v615 = vpack.c.bf16 %v607, %v607
      %v616 = vpack.c.bf16 %v608, %v608
      %v617 = vpack.c.bf16 %v609, %v609
      %v618 = vpack.c.bf16 %v610, %v610
      %v619 = vpack.c.bf16 %v611, %v611
      %v620 = vpack.c.bf16 %v612, %v612
      %v621 = vpack.c.bf16 %v613, %v613
      %v630 = vunpack.c.l.b16 %v614
      %v631 = vunpack.c.l.b16 %v615
      %v632 = vunpack.c.l.b16 %v616
      %v633 = vunpack.c.l.b16 %v617
      %v634 = vunpack.c.l.b16 %v618
      %v635 = vunpack.c.l.b16 %v619
      %v636 = vunpack.c.l.b16 %v620
      %v637 = vunpack.c.l.b16 %v621
      %v638 = vpack.c.b16 %v631, %v630
      %v639 = vpack.c.b16 %v633, %v632
      %v640 = vpack.c.b16 %v635, %v634
      %v641 = vpack.c.b16 %v637, %v636
      %646 = vst [vmem:[#allocation2 + $0x20] sm:$0xff] %v638
      %647 = vst [vmem:[#allocation2 + $0x28] sm:$0xff] %v639
      %648 = vst [vmem:[#allocation2 + $0x30] sm:$0xff] %v640
      %649 = vst [vmem:[#allocation2 + $0x38] sm:$0xff] %v641
      %650 = vrot.lane.b32.xlu0 %v486, 31
      %v651 = vpop.permute.xlu0 %650
      %652 = vrot.lane.b32.xlu0 %v487, 31
      %v653 = vpop.permute.xlu0 %652
      %654 = vrot.lane.b32.xlu0 %v488, 31
      %v655 = vpop.permute.xlu0 %654
      %656 = vrot.lane.b32.xlu0 %v489, 31
      %v657 = vpop.permute.xlu0 %656
      %658 = vrot.lane.b32.xlu0 %v490, 31
      %v659 = vpop.permute.xlu0 %658
      %660 = vrot.lane.b32.xlu0 %v491, 31
      %v661 = vpop.permute.xlu0 %660
      %662 = vrot.lane.b32.xlu0 %v492, 31
      %v663 = vpop.permute.xlu0 %662
      %664 = vrot.lane.b32.xlu0 %v493, 31
      %v665 = vpop.permute.xlu0 %664
      %vm666 = vcmp.lt.s32.totalorder %v511, 31
      %v667 = vsel %vm666, %v663, %v665
      %v668 = vsel %vm666, %v661, %v663
      %v669 = vsel %vm666, %v659, %v661
      %v670 = vsel %vm666, %v657, %v659
      %v671 = vsel %vm666, %v655, %v657
      %v672 = vsel %vm666, %v653, %v655
      %v673 = vsel %vm666, %v651, %v653
      %v674 = vsel %vm666, %v665, %v651
      %v675 = vld [vmem:[%s2 + $0x80] sm:$0xff]
      %v676 = vld [vmem:[%s2 + $0x88] sm:$0xff]
      %v677 = vld [vmem:[%s2 + $0x90] sm:$0xff]
      %v678 = vld [vmem:[%s2 + $0x98] sm:$0xff]
      %v679 = vld [vmem:[%s2 + $0xa0] sm:$0xff]
      %v680 = vld [vmem:[%s2 + $0xa8] sm:$0xff]
      %v681 = vld [vmem:[%s2 + $0xb0] sm:$0xff]
      %v682 = vld [vmem:[%s2 + $0xb8] sm:$0xff]
      %v683 = vmul.f32 %v674, %v675
      %v684 = vmul.f32 %v673, %v676
      %v685 = vmul.f32 %v672, %v677
      %v686 = vmul.f32 %v671, %v678
      %v687 = vmul.f32 %v670, %v679
      %v688 = vmul.f32 %v669, %v680
      %v689 = vmul.f32 %v668, %v681
      %v690 = vmul.f32 %v667, %v682
      %v691 = vpack.c.bf16 %v683, %v683
      %v692 = vpack.c.bf16 %v684, %v684
      %v693 = vpack.c.bf16 %v685, %v685
      %v694 = vpack.c.bf16 %v686, %v686
      %v695 = vpack.c.bf16 %v687, %v687
      %v696 = vpack.c.bf16 %v688, %v688
      %v697 = vpack.c.bf16 %v689, %v689
      %v698 = vpack.c.bf16 %v690, %v690
      %v707 = vunpack.c.l.b16 %v691
      %v708 = vunpack.c.l.b16 %v692
      %v709 = vunpack.c.l.b16 %v693
      %v710 = vunpack.c.l.b16 %v694
      %v711 = vunpack.c.l.b16 %v695
      %v712 = vunpack.c.l.b16 %v696
      %v713 = vunpack.c.l.b16 %v697
      %v714 = vunpack.c.l.b16 %v698
      %v715 = vpack.c.b16 %v708, %v707
      %v716 = vpack.c.b16 %v710, %v709
      %v717 = vpack.c.b16 %v712, %v711
      %v718 = vpack.c.b16 %v714, %v713
      %723 = vst [vmem:[#allocation2 + $0x40] sm:$0xff] %v715
      %724 = vst [vmem:[#allocation2 + $0x48] sm:$0xff] %v716
      %725 = vst [vmem:[#allocation2 + $0x50] sm:$0xff] %v717
      %726 = vst [vmem:[#allocation2 + $0x58] sm:$0xff] %v718
      %727 = vrot.lane.b32.xlu0 %v486, 1
      %v728 = vpop.permute.xlu0 %727
      %729 = vrot.lane.b32.xlu0 %v487, 1
      %v730 = vpop.permute.xlu0 %729
      %731 = vrot.lane.b32.xlu0 %v488, 1
      %v732 = vpop.permute.xlu0 %731
      %733 = vrot.lane.b32.xlu0 %v489, 1
      %v734 = vpop.permute.xlu0 %733
      %735 = vrot.lane.b32.xlu0 %v490, 1
      %v736 = vpop.permute.xlu0 %735
      %737 = vrot.lane.b32.xlu0 %v491, 1
      %v738 = vpop.permute.xlu0 %737
      %739 = vrot.lane.b32.xlu0 %v492, 1
      %v740 = vpop.permute.xlu0 %739
      %741 = vrot.lane.b32.xlu0 %v493, 1
      %v742 = vpop.permute.xlu0 %741
      %vm743 = vcmp.lt.s32.totalorder %v511, 1
      %v744 = vsel %vm743, %v740, %v742
      %v745 = vsel %vm743, %v738, %v740
      %v746 = vsel %vm743, %v736, %v738
      %v747 = vsel %vm743, %v734, %v736
      %v748 = vsel %vm743, %v732, %v734
      %v749 = vsel %vm743, %v730, %v732
      %v750 = vsel %vm743, %v728, %v730
      %v751 = vsel %vm743, %v742, %v728
      %v752 = vld [vmem:[%s2 + $0xc0] sm:$0xff]
      %v753 = vld [vmem:[%s2 + $0xc8] sm:$0xff]
      %v754 = vld [vmem:[%s2 + $0xd0] sm:$0xff]
      %v755 = vld [vmem:[%s2 + $0xd8] sm:$0xff]
      %v756 = vld [vmem:[%s2 + $0xe0] sm:$0xff]
      %v757 = vld [vmem:[%s2 + $0xe8] sm:$0xff]
      %v758 = vld [vmem:[%s2 + $0xf0] sm:$0xff]
      %v759 = vld [vmem:[%s2 + $0xf8] sm:$0xff]
      %v760 = vmul.f32 %v751, %v752
      %v761 = vmul.f32 %v750, %v753
      %v762 = vmul.f32 %v749, %v754
      %v763 = vmul.f32 %v748, %v755
      %v764 = vmul.f32 %v747, %v756
      %v765 = vmul.f32 %v746, %v757
      %v766 = vmul.f32 %v745, %v758
      %v767 = vmul.f32 %v744, %v759
      %v768 = vpack.c.bf16 %v760, %v760
      %v769 = vpack.c.bf16 %v761, %v761
      %v770 = vpack.c.bf16 %v762, %v762
      %v771 = vpack.c.bf16 %v763, %v763
      %v772 = vpack.c.bf16 %v764, %v764
      %v773 = vpack.c.bf16 %v765, %v765
      %v774 = vpack.c.bf16 %v766, %v766
      %v775 = vpack.c.bf16 %v767, %v767
      %v784 = vunpack.c.l.b16 %v768
      %v785 = vunpack.c.l.b16 %v769
      %v786 = vunpack.c.l.b16 %v770
      %v787 = vunpack.c.l.b16 %v771
      %v788 = vunpack.c.l.b16 %v772
      %v789 = vunpack.c.l.b16 %v773
      %v790 = vunpack.c.l.b16 %v774
      %v791 = vunpack.c.l.b16 %v775
      %v792 = vpack.c.b16 %v785, %v784
      %v793 = vpack.c.b16 %v787, %v786
      %v794 = vpack.c.b16 %v789, %v788
      %v795 = vpack.c.b16 %v791, %v790
      %800 = vst [vmem:[#allocation2 + $0x60] sm:$0xff] %v792
      %801 = vst [vmem:[#allocation2 + $0x68] sm:$0xff] %v793
      %802 = vst [vmem:[#allocation2 + $0x70] sm:$0xff] %v794
      %803 = vst [vmem:[#allocation2 + $0x78] sm:$0xff] %v795
      %v804 = vpack.c.bf16 %v486, %v486
      %v805 = vpack.c.bf16 %v487, %v487
      %v806 = vpack.c.bf16 %v488, %v488
      %v807 = vpack.c.bf16 %v489, %v489
      %v808 = vpack.c.bf16 %v490, %v490
      %v809 = vpack.c.bf16 %v491, %v491
      %v810 = vpack.c.bf16 %v492, %v492
      %v811 = vpack.c.bf16 %v493, %v493
      %v820 = vunpack.c.l.b16 %v804
      %v821 = vunpack.c.l.b16 %v805
      %v822 = vunpack.c.l.b16 %v806
      %v823 = vunpack.c.l.b16 %v807
      %v824 = vunpack.c.l.b16 %v808
      %v825 = vunpack.c.l.b16 %v809
      %v826 = vunpack.c.l.b16 %v810
      %v827 = vunpack.c.l.b16 %v811
      %v828 = vpack.c.b16 %v821, %v820
      %v829 = vpack.c.b16 %v823, %v822
      %v830 = vpack.c.b16 %v825, %v824
      %v831 = vpack.c.b16 %v827, %v826
      %836 = vst [vmem:[#allocation2 + $0x80] sm:$0xff] %v828
      %837 = vst [vmem:[#allocation2 + $0x88] sm:$0xff] %v829
      %838 = vst [vmem:[#allocation2 + $0x90] sm:$0xff] %v830
      %839 = vst [vmem:[#allocation2 + $0x98] sm:$0xff] %v831
      %840 = vrot.lane.b32.xlu0 %v486, 127
      %v841 = vpop.permute.xlu0 %840
      %842 = vrot.lane.b32.xlu0 %v487, 127
      %v843 = vpop.permute.xlu0 %842
      %844 = vrot.lane.b32.xlu0 %v488, 127
      %v845 = vpop.permute.xlu0 %844
      %846 = vrot.lane.b32.xlu0 %v489, 127
      %v847 = vpop.permute.xlu0 %846
      %848 = vrot.lane.b32.xlu0 %v490, 127
      %v849 = vpop.permute.xlu0 %848
      %850 = vrot.lane.b32.xlu0 %v491, 127
      %v851 = vpop.permute.xlu0 %850
      %852 = vrot.lane.b32.xlu0 %v492, 127
      %v853 = vpop.permute.xlu0 %852
      %854 = vrot.lane.b32.xlu0 %v493, 127
      %v855 = vpop.permute.xlu0 %854
      %vm856 = vcmp.lt.s32.totalorder %v511, 127
      %v857 = vsel %vm856, %v853, %v855
      %v858 = vsel %vm856, %v851, %v853
      %v859 = vsel %vm856, %v849, %v851
      %v860 = vsel %vm856, %v847, %v849
      %v861 = vsel %vm856, %v845, %v847
      %v862 = vsel %vm856, %v843, %v845
      %v863 = vsel %vm856, %v841, %v843
      %v864 = vsel %vm856, %v855, %v841
      %v865 = vld [vmem:[%s2 + $0x140] sm:$0xff]
      %v866 = vld [vmem:[%s2 + $0x148] sm:$0xff]
      %v867 = vld [vmem:[%s2 + $0x150] sm:$0xff]
      %v868 = vld [vmem:[%s2 + $0x158] sm:$0xff]
      %v869 = vld [vmem:[%s2 + $0x160] sm:$0xff]
      %v870 = vld [vmem:[%s2 + $0x168] sm:$0xff]
      %v871 = vld [vmem:[%s2 + $0x170] sm:$0xff]
      %v872 = vld [vmem:[%s2 + $0x178] sm:$0xff]
      %v873 = vmul.f32 %v863, %v865
      %v874 = vmul.f32 %v862, %v866
      %v875 = vmul.f32 %v861, %v867
      %v876 = vmul.f32 %v860, %v868
      %v877 = vmul.f32 %v859, %v869
      %v878 = vmul.f32 %v858, %v870
      %v879 = vmul.f32 %v857, %v871
      %v880 = vmul.f32 %v864, %v872
      %v881 = vpack.c.bf16 %v873, %v873
      %v882 = vpack.c.bf16 %v874, %v874
      %v883 = vpack.c.bf16 %v875, %v875
      %v884 = vpack.c.bf16 %v876, %v876
      %v885 = vpack.c.bf16 %v877, %v877
      %v886 = vpack.c.bf16 %v878, %v878
      %v887 = vpack.c.bf16 %v879, %v879
      %v888 = vpack.c.bf16 %v880, %v880
      %v897 = vunpack.c.l.b16 %v881
      %v898 = vunpack.c.l.b16 %v882
      %v899 = vunpack.c.l.b16 %v883
      %v900 = vunpack.c.l.b16 %v884
      %v901 = vunpack.c.l.b16 %v885
      %v902 = vunpack.c.l.b16 %v886
      %v903 = vunpack.c.l.b16 %v887
      %v904 = vunpack.c.l.b16 %v888
      %v905 = vpack.c.b16 %v898, %v897
      %v906 = vpack.c.b16 %v900, %v899
      %v907 = vpack.c.b16 %v902, %v901
      %v908 = vpack.c.b16 %v904, %v903
      %913 = vst [vmem:[#allocation2 + $0xa0] sm:$0xff] %v905
      %914 = vst [vmem:[#allocation2 + $0xa8] sm:$0xff] %v906
      %915 = vst [vmem:[#allocation2 + $0xb0] sm:$0xff] %v907
      %916 = vst [vmem:[#allocation2 + $0xb8] sm:$0xff] %v908
      %917 = vrot.lane.b32.xlu0 %v486, 97
      %v918 = vpop.permute.xlu0 %917
      %919 = vrot.lane.b32.xlu0 %v487, 97
      %v920 = vpop.permute.xlu0 %919
      %921 = vrot.lane.b32.xlu0 %v488, 97
      %v922 = vpop.permute.xlu0 %921
      %923 = vrot.lane.b32.xlu0 %v489, 97
      %v924 = vpop.permute.xlu0 %923
      %925 = vrot.lane.b32.xlu0 %v490, 97
      %v926 = vpop.permute.xlu0 %925
      %927 = vrot.lane.b32.xlu0 %v491, 97
      %v928 = vpop.permute.xlu0 %927
      %929 = vrot.lane.b32.xlu0 %v492, 97
      %v930 = vpop.permute.xlu0 %929
      %931 = vrot.lane.b32.xlu0 %v493, 97
      %v932 = vpop.permute.xlu0 %931
      %vm933 = vcmp.lt.s32.totalorder %v511, 97
      %v934 = vsel %vm933, %v930, %v932
      %v935 = vsel %vm933, %v928, %v930
      %v936 = vsel %vm933, %v926, %v928
      %v937 = vsel %vm933, %v924, %v926
      %v938 = vsel %vm933, %v922, %v924
      %v939 = vsel %vm933, %v920, %v922
      %v940 = vsel %vm933, %v918, %v920
      %v941 = vsel %vm933, %v932, %v918
      %v942 = vld [vmem:[%s2 + $0x180] sm:$0xff]
      %v943 = vld [vmem:[%s2 + $0x188] sm:$0xff]
      %v944 = vld [vmem:[%s2 + $0x190] sm:$0xff]
      %v945 = vld [vmem:[%s2 + $0x198] sm:$0xff]
      %v946 = vld [vmem:[%s2 + $0x1a0] sm:$0xff]
      %v947 = vld [vmem:[%s2 + $0x1a8] sm:$0xff]
      %v948 = vld [vmem:[%s2 + $0x1b0] sm:$0xff]
      %v949 = vld [vmem:[%s2 + $0x1b8] sm:$0xff]
      %v950 = vmul.f32 %v940, %v942
      %v951 = vmul.f32 %v939, %v943
      %v952 = vmul.f32 %v938, %v944
      %v953 = vmul.f32 %v937, %v945
      %v954 = vmul.f32 %v936, %v946
      %v955 = vmul.f32 %v935, %v947
      %v956 = vmul.f32 %v934, %v948
      %v957 = vmul.f32 %v941, %v949
      %v958 = vpack.c.bf16 %v950, %v950
      %v959 = vpack.c.bf16 %v951, %v951
      %v960 = vpack.c.bf16 %v952, %v952
      %v961 = vpack.c.bf16 %v953, %v953
      %v962 = vpack.c.bf16 %v954, %v954
      %v963 = vpack.c.bf16 %v955, %v955
      %v964 = vpack.c.bf16 %v956, %v956
      %v965 = vpack.c.bf16 %v957, %v957
      %v974 = vunpack.c.l.b16 %v958
      %v975 = vunpack.c.l.b16 %v959
      %v976 = vunpack.c.l.b16 %v960
      %v977 = vunpack.c.l.b16 %v961
      %v978 = vunpack.c.l.b16 %v962
      %v979 = vunpack.c.l.b16 %v963
      %v980 = vunpack.c.l.b16 %v964
      %v981 = vunpack.c.l.b16 %v965
      %v982 = vpack.c.b16 %v975, %v974
      %v983 = vpack.c.b16 %v977, %v976
      %v984 = vpack.c.b16 %v979, %v978
      %v985 = vpack.c.b16 %v981, %v980
      %990 = vst [vmem:[#allocation2 + $0xc0] sm:$0xff] %v982
      %991 = vst [vmem:[#allocation2 + $0xc8] sm:$0xff] %v983
      %992 = vst [vmem:[#allocation2 + $0xd0] sm:$0xff] %v984
      %993 = vst [vmem:[#allocation2 + $0xd8] sm:$0xff] %v985
      %994 = vrot.lane.b32.xlu0 %v486, 96
      %v995 = vpop.permute.xlu0 %994
      %996 = vrot.lane.b32.xlu0 %v487, 96
      %v997 = vpop.permute.xlu0 %996
      %998 = vrot.lane.b32.xlu0 %v488, 96
      %v999 = vpop.permute.xlu0 %998
      %1000 = vrot.lane.b32.xlu0 %v489, 96
      %v1001 = vpop.permute.xlu0 %1000
      %1002 = vrot.lane.b32.xlu0 %v490, 96
      %v1003 = vpop.permute.xlu0 %1002
      %1004 = vrot.lane.b32.xlu0 %v491, 96
      %v1005 = vpop.permute.xlu0 %1004
      %1006 = vrot.lane.b32.xlu0 %v492, 96
      %v1007 = vpop.permute.xlu0 %1006
      %1008 = vrot.lane.b32.xlu0 %v493, 96
      %v1009 = vpop.permute.xlu0 %1008
      %vm1010 = vcmp.lt.s32.totalorder %v511, 96
      %v1011 = vsel %vm1010, %v1007, %v1009
      %v1012 = vsel %vm1010, %v1005, %v1007
      %v1013 = vsel %vm1010, %v1003, %v1005
      %v1014 = vsel %vm1010, %v1001, %v1003
      %v1015 = vsel %vm1010, %v999, %v1001
      %v1016 = vsel %vm1010, %v997, %v999
      %v1017 = vsel %vm1010, %v995, %v997
      %v1018 = vsel %vm1010, %v1009, %v995
      %v1019 = vld [vmem:[%s2 + $0x1c0] sm:$0xff]
      %v1020 = vld [vmem:[%s2 + $0x1c8] sm:$0xff]
      %v1021 = vld [vmem:[%s2 + $0x1d0] sm:$0xff]
      %v1022 = vld [vmem:[%s2 + $0x1d8] sm:$0xff]
      %v1023 = vld [vmem:[%s2 + $0x1e0] sm:$0xff]
      %v1024 = vld [vmem:[%s2 + $0x1e8] sm:$0xff]
      %v1025 = vld [vmem:[%s2 + $0x1f0] sm:$0xff]
      %v1026 = vld [vmem:[%s2 + $0x1f8] sm:$0xff]
      %v1027 = vmul.f32 %v1017, %v1019
      %v1028 = vmul.f32 %v1016, %v1020
      %v1029 = vmul.f32 %v1015, %v1021
      %v1030 = vmul.f32 %v1014, %v1022
      %v1031 = vmul.f32 %v1013, %v1023
      %v1032 = vmul.f32 %v1012, %v1024
      %v1033 = vmul.f32 %v1011, %v1025
      %v1034 = vmul.f32 %v1018, %v1026
      %v1035 = vpack.c.bf16 %v1027, %v1027
      %v1036 = vpack.c.bf16 %v1028, %v1028
      %v1037 = vpack.c.bf16 %v1029, %v1029
      %v1038 = vpack.c.bf16 %v1030, %v1030
      %v1039 = vpack.c.bf16 %v1031, %v1031
      %v1040 = vpack.c.bf16 %v1032, %v1032
      %v1041 = vpack.c.bf16 %v1033, %v1033
      %v1042 = vpack.c.bf16 %v1034, %v1034
      %v1051 = vunpack.c.l.b16 %v1035
      %v1052 = vunpack.c.l.b16 %v1036
      %v1053 = vunpack.c.l.b16 %v1037
      %v1054 = vunpack.c.l.b16 %v1038
      %v1055 = vunpack.c.l.b16 %v1039
      %v1056 = vunpack.c.l.b16 %v1040
      %v1057 = vunpack.c.l.b16 %v1041
      %v1058 = vunpack.c.l.b16 %v1042
      %v1059 = vpack.c.b16 %v1052, %v1051
      %v1060 = vpack.c.b16 %v1054, %v1053
      %v1061 = vpack.c.b16 %v1056, %v1055
      %v1062 = vpack.c.b16 %v1058, %v1057
      %1067 = vst [vmem:[#allocation2 + $0xe0] sm:$0xff] %v1059
      %1068 = vst [vmem:[#allocation2 + $0xe8] sm:$0xff] %v1060
      %1069 = vst [vmem:[#allocation2 + $0xf0] sm:$0xff] %v1061
      %1070 = vst [vmem:[#allocation2 + $0xf8] sm:$0xff] %v1062
      %1071 = vrot.lane.b32.xlu0 %v486, 95
      %v1072 = vpop.permute.xlu0 %1071
      %1073 = vrot.lane.b32.xlu0 %v487, 95
      %v1074 = vpop.permute.xlu0 %1073
      %1075 = vrot.lane.b32.xlu0 %v488, 95
      %v1076 = vpop.permute.xlu0 %1075
      %1077 = vrot.lane.b32.xlu0 %v489, 95
      %v1078 = vpop.permute.xlu0 %1077
      %1079 = vrot.lane.b32.xlu0 %v490, 95
      %v1080 = vpop.permute.xlu0 %1079
      %1081 = vrot.lane.b32.xlu0 %v491, 95
      %v1082 = vpop.permute.xlu0 %1081
      %1083 = vrot.lane.b32.xlu0 %v492, 95
      %v1084 = vpop.permute.xlu0 %1083
      %1085 = vrot.lane.b32.xlu0 %v493, 95
      %v1086 = vpop.permute.xlu0 %1085
      %vm1087 = vcmp.lt.s32.totalorder %v511, 95
      %v1088 = vsel %vm1087, %v1084, %v1086
      %v1089 = vsel %vm1087, %v1082, %v1084
      %v1090 = vsel %vm1087, %v1080, %v1082
      %v1091 = vsel %vm1087, %v1078, %v1080
      %v1092 = vsel %vm1087, %v1076, %v1078
      %v1093 = vsel %vm1087, %v1074, %v1076
      %v1094 = vsel %vm1087, %v1072, %v1074
      %v1095 = vsel %vm1087, %v1086, %v1072
      %v1096 = vld [vmem:[%s2 + $0x200] sm:$0xff]
      %v1097 = vld [vmem:[%s2 + $0x208] sm:$0xff]
      %v1098 = vld [vmem:[%s2 + $0x210] sm:$0xff]
      %v1099 = vld [vmem:[%s2 + $0x218] sm:$0xff]
      %v1100 = vld [vmem:[%s2 + $0x220] sm:$0xff]
      %v1101 = vld [vmem:[%s2 + $0x228] sm:$0xff]
      %v1102 = vld [vmem:[%s2 + $0x230] sm:$0xff]
      %v1103 = vld [vmem:[%s2 + $0x238] sm:$0xff]
      %v1104 = vmul.f32 %v1094, %v1096
      %v1105 = vmul.f32 %v1093, %v1097
      %v1106 = vmul.f32 %v1092, %v1098
      %v1107 = vmul.f32 %v1091, %v1099
      %v1108 = vmul.f32 %v1090, %v1100
      %v1109 = vmul.f32 %v1089, %v1101
      %v1110 = vmul.f32 %v1088, %v1102
      %v1111 = vmul.f32 %v1095, %v1103
      %v1112 = vpack.c.bf16 %v1104, %v1104
      %v1113 = vpack.c.bf16 %v1105, %v1105
      %v1114 = vpack.c.bf16 %v1106, %v1106
      %v1115 = vpack.c.bf16 %v1107, %v1107
      %v1116 = vpack.c.bf16 %v1108, %v1108
      %v1117 = vpack.c.bf16 %v1109, %v1109
      %v1118 = vpack.c.bf16 %v1110, %v1110
      %v1119 = vpack.c.bf16 %v1111, %v1111
      %v1128 = vunpack.c.l.b16 %v1112
      %v1129 = vunpack.c.l.b16 %v1113
      %v1130 = vunpack.c.l.b16 %v1114
      %v1131 = vunpack.c.l.b16 %v1115
      %v1132 = vunpack.c.l.b16 %v1116
      %v1133 = vunpack.c.l.b16 %v1117
      %v1134 = vunpack.c.l.b16 %v1118
      %v1135 = vunpack.c.l.b16 %v1119
      %v1136 = vpack.c.b16 %v1129, %v1128
      %v1137 = vpack.c.b16 %v1131, %v1130
      %v1138 = vpack.c.b16 %v1133, %v1132
      %v1139 = vpack.c.b16 %v1135, %v1134
      %1144 = vst [vmem:[#allocation2 + $0x100] sm:$0xff] %v1136
      %1145 = vst [vmem:[#allocation2 + $0x108] sm:$0xff] %v1137
      %1146 = vst [vmem:[#allocation2 + $0x110] sm:$0xff] %v1138
      %1147 = vst [vmem:[#allocation2 + $0x118] sm:$0xff] %v1139
      %v1148 = vld [vmem:[%s3] sm:$0xf]
      %v1149 = vld [vmem:[#allocation2] sm:$0xff]
      %v1150 = vld [vmem:[#allocation2 + $0x8] sm:$0xff]
      %v1151 = vld [vmem:[#allocation2 + $0x10] sm:$0xff]
      %v1152 = vld [vmem:[#allocation2 + $0x18] sm:$0xff]
      %v1153 = vld [vmem:[#allocation2 + $0x20] sm:$0xff]
      %v1154 = vld [vmem:[#allocation2 + $0x28] sm:$0xff]
      %v1155 = vld [vmem:[#allocation2 + $0x30] sm:$0xff]
      %v1156 = vld [vmem:[#allocation2 + $0x38] sm:$0xff]
      %v1157 = vld [vmem:[#allocation2 + $0x40] sm:$0xff]
      %v1158 = vld [vmem:[#allocation2 + $0x48] sm:$0xff]
      %v1159 = vld [vmem:[#allocation2 + $0x50] sm:$0xff]
      %v1160 = vld [vmem:[#allocation2 + $0x58] sm:$0xff]
      %v1161 = vld [vmem:[#allocation2 + $0x60] sm:$0xff]
      %v1162 = vld [vmem:[#allocation2 + $0x68] sm:$0xff]
      %v1163 = vld [vmem:[#allocation2 + $0x70] sm:$0xff]
      %v1164 = vld [vmem:[#allocation2 + $0x78] sm:$0xff]
      %v1165 = vld [vmem:[#allocation2 + $0x80] sm:$0xff]
      %v1166 = vld [vmem:[#allocation2 + $0x88] sm:$0xff]
      %v1167 = vld [vmem:[#allocation2 + $0x90] sm:$0xff]
      %v1168 = vld [vmem:[#allocation2 + $0x98] sm:$0xff]
      %v1169 = vld [vmem:[#allocation2 + $0xa0] sm:$0xff]
      %v1170 = vld [vmem:[#allocation2 + $0xa8] sm:$0xff]
      %v1171 = vld [vmem:[#allocation2 + $0xb0] sm:$0xff]
      %v1172 = vld [vmem:[#allocation2 + $0xb8] sm:$0xff]
      %v1173 = vld [vmem:[#allocation2 + $0xc0] sm:$0xff]
      %v1174 = vld [vmem:[#allocation2 + $0xc8] sm:$0xff]
      %v1175 = vld [vmem:[#allocation2 + $0xd0] sm:$0xff]
      %v1176 = vld [vmem:[#allocation2 + $0xd8] sm:$0xff]
      %v1177 = vld [vmem:[#allocation2 + $0xe0] sm:$0xff]
      %v1178 = vld [vmem:[#allocation2 + $0xe8] sm:$0xff]
      %v1179 = vld [vmem:[#allocation2 + $0xf0] sm:$0xff]
      %v1180 = vld [vmem:[#allocation2 + $0xf8] sm:$0xff]
      %v1181 = vld [vmem:[#allocation2 + $0x100] sm:$0xff]
      %v1182 = vld [vmem:[#allocation2 + $0x108] sm:$0xff]
      %v1183 = vld [vmem:[#allocation2 + $0x110] sm:$0xff]
      %v1184 = vld [vmem:[#allocation2 + $0x118] sm:$0xff]
      %v1221 = vunpack.c.l.b16 %v1149
      %v1222 = vunpack.c.h.b16 %v1149
      %v1223 = vunpack.c.l.b16 %v1150
      %v1224 = vunpack.c.h.b16 %v1150
      %v1225 = vunpack.c.l.b16 %v1151
      %v1226 = vunpack.c.h.b16 %v1151
      %v1227 = vunpack.c.l.b16 %v1152
      %v1228 = vunpack.c.h.b16 %v1152
      %v1229 = vunpack.c.l.b16 %v1153
      %v1230 = vunpack.c.h.b16 %v1153
      %v1231 = vunpack.c.l.b16 %v1154
      %v1232 = vunpack.c.h.b16 %v1154
      %v1233 = vunpack.c.l.b16 %v1155
      %v1234 = vunpack.c.h.b16 %v1155
      %v1235 = vunpack.c.l.b16 %v1156
      %v1236 = vunpack.c.h.b16 %v1156
      %v1237 = vunpack.c.l.b16 %v1157
      %v1238 = vunpack.c.h.b16 %v1157
      %v1239 = vunpack.c.l.b16 %v1158
      %v1240 = vunpack.c.h.b16 %v1158
      %v1241 = vunpack.c.l.b16 %v1159
      %v1242 = vunpack.c.h.b16 %v1159
      %v1243 = vunpack.c.l.b16 %v1160
      %v1244 = vunpack.c.h.b16 %v1160
      %v1245 = vunpack.c.l.b16 %v1161
      %v1246 = vunpack.c.h.b16 %v1161
      %v1247 = vunpack.c.l.b16 %v1162
      %v1248 = vunpack.c.h.b16 %v1162
      %v1249 = vunpack.c.l.b16 %v1163
      %v1250 = vunpack.c.h.b16 %v1163
      %v1251 = vunpack.c.l.b16 %v1164
      %v1252 = vunpack.c.h.b16 %v1164
      %v1253 = vunpack.c.l.b16 %v1165
      %v1254 = vunpack.c.h.b16 %v1165
      %v1255 = vunpack.c.l.b16 %v1166
      %v1256 = vunpack.c.h.b16 %v1166
      %v1257 = vunpack.c.l.b16 %v1167
      %v1258 = vunpack.c.h.b16 %v1167
      %v1259 = vunpack.c.l.b16 %v1168
      %v1260 = vunpack.c.h.b16 %v1168
      %v1261 = vunpack.c.l.b16 %v1169
      %v1262 = vunpack.c.h.b16 %v1169
      %v1263 = vunpack.c.l.b16 %v1170
      %v1264 = vunpack.c.h.b16 %v1170
      %v1265 = vunpack.c.l.b16 %v1171
      %v1266 = vunpack.c.h.b16 %v1171
      %v1267 = vunpack.c.l.b16 %v1172
      %v1268 = vunpack.c.h.b16 %v1172
      %v1269 = vunpack.c.l.b16 %v1173
      %v1270 = vunpack.c.h.b16 %v1173
      %v1271 = vunpack.c.l.b16 %v1174
      %v1272 = vunpack.c.h.b16 %v1174
      %v1273 = vunpack.c.l.b16 %v1175
      %v1274 = vunpack.c.h.b16 %v1175
      %v1275 = vunpack.c.l.b16 %v1176
      %v1276 = vunpack.c.h.b16 %v1176
      %v1277 = vunpack.c.l.b16 %v1177
      %v1278 = vunpack.c.h.b16 %v1177
      %v1279 = vunpack.c.l.b16 %v1178
      %v1280 = vunpack.c.h.b16 %v1178
      %v1281 = vunpack.c.l.b16 %v1179
      %v1282 = vunpack.c.h.b16 %v1179
      %v1283 = vunpack.c.l.b16 %v1180
      %v1284 = vunpack.c.h.b16 %v1180
      %v1285 = vunpack.c.l.b16 %v1181
      %v1286 = vunpack.c.h.b16 %v1181
      %v1287 = vunpack.c.l.b16 %v1182
      %v1288 = vunpack.c.h.b16 %v1182
      %v1289 = vunpack.c.l.b16 %v1183
      %v1290 = vunpack.c.h.b16 %v1183
      %v1291 = vunpack.c.l.b16 %v1184
      %v1292 = vunpack.c.h.b16 %v1184
      %v1293 = vpack.c.b16 %v1229, %v1221
      %v1294 = vpack.c.b16 %v1230, %v1222
      %v1295 = vpack.c.b16 %v1231, %v1223
      %v1296 = vpack.c.b16 %v1232, %v1224
      %v1297 = vpack.c.b16 %v1233, %v1225
      %v1298 = vpack.c.b16 %v1234, %v1226
      %v1299 = vpack.c.b16 %v1235, %v1227
      %v1300 = vpack.c.b16 %v1236, %v1228
      %v1301 = vpack.c.b16 %v1245, %v1237
      %v1302 = vpack.c.b16 %v1246, %v1238
      %v1303 = vpack.c.b16 %v1247, %v1239
      %v1304 = vpack.c.b16 %v1248, %v1240
      %v1305 = vpack.c.b16 %v1249, %v1241
      %v1306 = vpack.c.b16 %v1250, %v1242
      %v1307 = vpack.c.b16 %v1251, %v1243
      %v1308 = vpack.c.b16 %v1252, %v1244
      %v1309 = vpack.c.b16 %v1261, %v1253
      %v1310 = vpack.c.b16 %v1262, %v1254
      %v1311 = vpack.c.b16 %v1263, %v1255
      %v1312 = vpack.c.b16 %v1264, %v1256
      %v1313 = vpack.c.b16 %v1265, %v1257
      %v1314 = vpack.c.b16 %v1266, %v1258
      %v1315 = vpack.c.b16 %v1267, %v1259
      %v1316 = vpack.c.b16 %v1268, %v1260
      %v1317 = vpack.c.b16 %v1277, %v1269
      %v1318 = vpack.c.b16 %v1278, %v1270
      %v1319 = vpack.c.b16 %v1279, %v1271
      %v1320 = vpack.c.b16 %v1280, %v1272
      %v1321 = vpack.c.b16 %v1281, %v1273
      %v1322 = vpack.c.b16 %v1282, %v1274
      %v1323 = vpack.c.b16 %v1283, %v1275
      %v1324 = vpack.c.b16 %v1284, %v1276
      %v1325 = vpack.c.b16 %v1285, %v1285
      %v1326 = vpack.c.b16 %v1286, %v1286
      %v1327 = vpack.c.b16 %v1287, %v1287
      %v1328 = vpack.c.b16 %v1288, %v1288
      %v1329 = vpack.c.b16 %v1289, %v1289
      %v1330 = vpack.c.b16 %v1290, %v1290
      %v1331 = vpack.c.b16 %v1291, %v1291
      %v1332 = vpack.c.b16 %v1292, %v1292
      %vm1365 = vcmask 588800
      %v1367 = vsel %vm1365, %v1148, 0
      %vm1369 = vcmask 1043456
      %v1371 = vsel %vm1369, %v1325, 0
      %v1374 = vsel %vm1369, %v1326, 0
      %v1377 = vsel %vm1369, %v1327, 0
      %v1380 = vsel %vm1369, %v1328, 0
      %v1383 = vsel %vm1369, %v1329, 0
      %v1386 = vsel %vm1369, %v1330, 0
      %v1389 = vsel %vm1369, %v1331, 0
      %v1392 = vsel %vm1369, %v1332, 0
      %1394 = vmatprep.subr.bf16.mxu0 0
      %1395 = vmatpush1.bf16.msra.mxu0 0
      %1396 = vmatprep.subr.bf16.mxu0 0
      %1397 = vmatpush1.bf16.msra.mxu0 0
      %1398 = vmatprep.subr.bf16.mxu0 0
      %1399 = vmatpush1.bf16.msra.mxu0 0
      %1400 = vmatprep.subr.bf16.mxu0 %v1374
      %1401 = vmatpush1.bf16.msra.mxu0 %v1371
      %1402 = vmatprep.subr.bf16.mxu0 %v1318
      %1403 = vmatpush1.bf16.msra.mxu0 %v1317
      %1404 = vmatprep.subr.bf16.mxu0 %v1310
      %1405 = vmatpush1.bf16.msra.mxu0 %v1309
      %1406 = vmatprep.subr.bf16.mxu0 %v1302
      %1407 = vmatpush1.bf16.msra.mxu0 %v1301
      %1408 = vmatprep.subr.bf16.mxu0 %v1294
      %1409 = vmatpush1.bf16.msra.mxu0 %v1293
      %1410 = vmatprep.subr.bf16.mxu0 0
      %1411 = vmatpush2.bf16.msra.mxu0 0
      %1412 = vmatprep.subr.bf16.mxu0 0
      %1413 = vmatpush2.bf16.msra.mxu0 0
      %1414 = vmatprep.subr.bf16.mxu0 0
      %1415 = vmatpush2.bf16.msra.mxu0 0
      %1416 = vmatprep.subr.bf16.mxu0 0
      %1417 = vmatpush2.bf16.msra.mxu0 0
      %1418 = vmatprep.subr.bf16.mxu0 0
      %1419 = vmatpush2.bf16.msra.mxu0 0
      %1420 = vmatprep.subr.bf16.mxu0 0
      %1421 = vmatpush2.bf16.msra.mxu0 0
      %1422 = vmatprep.subr.bf16.mxu0 0
      %1423 = vmatpush2.bf16.msra.mxu0 0
      %1424 = vmatprep.subr.bf16.mxu0 0
      %1425 = vmatpush2.bf16.msra.mxu0 0
      %1426 = vmatprep.mubr.bf16.mxu0 0
      %1427 = vmatmul.mubr.bf16.gmra.mxu0 %v1367
      %v1428 = vpop.f32.mrf.mxu0
      %v1429 = vadd.f32 0.0, %v1428
      %v1430 = vpop.f32.mrf.mxu0
      %v1431 = vadd.f32 0.0, %v1430
      %v1432 = vpop.f32.mrf.mxu0
      %v1433 = vpop.f32.mrf.mxu0
      %1434 = vdwg.mxu0
      %1435 = vmatprep.subr.bf16.mxu0 0
      %1436 = vmatpush1.bf16.msra.mxu0 0
      %1437 = vmatprep.subr.bf16.mxu0 0
      %1438 = vmatpush1.bf16.msra.mxu0 0
      %1439 = vmatprep.subr.bf16.mxu0 0
      %1440 = vmatpush1.bf16.msra.mxu0 0
      %1441 = vmatprep.subr.bf16.mxu0 %v1380
      %1442 = vmatpush1.bf16.msra.mxu0 %v1377
      %1443 = vmatprep.subr.bf16.mxu0 %v1320
      %1444 = vmatpush1.bf16.msra.mxu0 %v1319
      %1445 = vmatprep.subr.bf16.mxu0 %v1312
      %1446 = vmatpush1.bf16.msra.mxu0 %v1311
      %1447 = vmatprep.subr.bf16.mxu0 %v1304
      %1448 = vmatpush1.bf16.msra.mxu0 %v1303
      %1449 = vmatprep.subr.bf16.mxu0 %v1296
      %1450 = vmatpush1.bf16.msra.mxu0 %v1295
      %1451 = vmatprep.subr.bf16.mxu0 0
      %1452 = vmatpush2.bf16.msra.mxu0 0
      %1453 = vmatprep.subr.bf16.mxu0 0
      %1454 = vmatpush2.bf16.msra.mxu0 0
      %1455 = vmatprep.subr.bf16.mxu0 0
      %1456 = vmatpush2.bf16.msra.mxu0 0
      %1457 = vmatprep.subr.bf16.mxu0 0
      %1458 = vmatpush2.bf16.msra.mxu0 0
      %1459 = vmatprep.subr.bf16.mxu0 0
      %1460 = vmatpush2.bf16.msra.mxu0 0
      %1461 = vmatprep.subr.bf16.mxu0 0
      %1462 = vmatpush2.bf16.msra.mxu0 0
      %1463 = vmatprep.subr.bf16.mxu0 0
      %1464 = vmatpush2.bf16.msra.mxu0 0
      %1465 = vmatprep.subr.bf16.mxu0 0
      %1466 = vmatpush2.bf16.msra.mxu0 0
      %1467 = vmatprep.mubr.bf16.mxu0 0
      %1468 = vmatmul.mubr.bf16.gmra.mxu0 %v1367
      %v1469 = vpop.f32.mrf.mxu0
      %v1470 = vadd.f32 0.0, %v1469
      %v1471 = vpop.f32.mrf.mxu0
      %v1472 = vadd.f32 0.0, %v1471
      %v1473 = vpop.f32.mrf.mxu0
      %v1474 = vpop.f32.mrf.mxu0
      %1475 = vdwg.mxu0
      %1476 = vmatprep.subr.bf16.mxu0 0
      %1477 = vmatpush1.bf16.msra.mxu0 0
      %1478 = vmatprep.subr.bf16.mxu0 0
      %1479 = vmatpush1.bf16.msra.mxu0 0
      %1480 = vmatprep.subr.bf16.mxu0 0
      %1481 = vmatpush1.bf16.msra.mxu0 0
      %1482 = vmatprep.subr.bf16.mxu0 %v1386
      %1483 = vmatpush1.bf16.msra.mxu0 %v1383
      %1484 = vmatprep.subr.bf16.mxu0 %v1322
      %1485 = vmatpush1.bf16.msra.mxu0 %v1321
      %1486 = vmatprep.subr.bf16.mxu0 %v1314
      %1487 = vmatpush1.bf16.msra.mxu0 %v1313
      %1488 = vmatprep.subr.bf16.mxu0 %v1306
      %1489 = vmatpush1.bf16.msra.mxu0 %v1305
      %1490 = vmatprep.subr.bf16.mxu0 %v1298
      %1491 = vmatpush1.bf16.msra.mxu0 %v1297
      %1492 = vmatprep.subr.bf16.mxu0 0
      %1493 = vmatpush2.bf16.msra.mxu0 0
      %1494 = vmatprep.subr.bf16.mxu0 0
      %1495 = vmatpush2.bf16.msra.mxu0 0
      %1496 = vmatprep.subr.bf16.mxu0 0
      %1497 = vmatpush2.bf16.msra.mxu0 0
      %1498 = vmatprep.subr.bf16.mxu0 0
      %1499 = vmatpush2.bf16.msra.mxu0 0
      %1500 = vmatprep.subr.bf16.mxu0 0
      %1501 = vmatpush2.bf16.msra.mxu0 0
      %1502 = vmatprep.subr.bf16.mxu0 0
      %1503 = vmatpush2.bf16.msra.mxu0 0
      %1504 = vmatprep.subr.bf16.mxu0 0
      %1505 = vmatpush2.bf16.msra.mxu0 0
      %1506 = vmatprep.subr.bf16.mxu0 0
      %1507 = vmatpush2.bf16.msra.mxu0 0
      %1508 = vmatprep.mubr.bf16.mxu0 0
      %1509 = vmatmul.mubr.bf16.gmra.mxu0 %v1367
      %v1510 = vpop.f32.mrf.mxu0
      %v1511 = vadd.f32 0.0, %v1510
      %v1512 = vpop.f32.mrf.mxu0
      %v1513 = vadd.f32 0.0, %v1512
      %v1514 = vpop.f32.mrf.mxu0
      %v1515 = vpop.f32.mrf.mxu0
      %1516 = vdwg.mxu0
      %1517 = vmatprep.subr.bf16.mxu0 0
      %1518 = vmatpush1.bf16.msra.mxu0 0
      %1519 = vmatprep.subr.bf16.mxu0 0
      %1520 = vmatpush1.bf16.msra.mxu0 0
      %1521 = vmatprep.subr.bf16.mxu0 0
      %1522 = vmatpush1.bf16.msra.mxu0 0
      %1523 = vmatprep.subr.bf16.mxu0 %v1392
      %1524 = vmatpush1.bf16.msra.mxu0 %v1389
      %1525 = vmatprep.subr.bf16.mxu0 %v1324
      %1526 = vmatpush1.bf16.msra.mxu0 %v1323
      %1527 = vmatprep.subr.bf16.mxu0 %v1316
      %1528 = vmatpush1.bf16.msra.mxu0 %v1315
      %1529 = vmatprep.subr.bf16.mxu0 %v1308
      %1530 = vmatpush1.bf16.msra.mxu0 %v1307
      %1531 = vmatprep.subr.bf16.mxu0 %v1300
      %1532 = vmatpush1.bf16.msra.mxu0 %v1299
      %1533 = vmatprep.subr.bf16.mxu0 0
      %1534 = vmatpush2.bf16.msra.mxu0 0
      %1535 = vmatprep.subr.bf16.mxu0 0
      %1536 = vmatpush2.bf16.msra.mxu0 0
      %1537 = vmatprep.subr.bf16.mxu0 0
      %1538 = vmatpush2.bf16.msra.mxu0 0
      %1539 = vmatprep.subr.bf16.mxu0 0
      %1540 = vmatpush2.bf16.msra.mxu0 0
      %1541 = vmatprep.subr.bf16.mxu0 0
      %1542 = vmatpush2.bf16.msra.mxu0 0
      %1543 = vmatprep.subr.bf16.mxu0 0
      %1544 = vmatpush2.bf16.msra.mxu0 0
      %1545 = vmatprep.subr.bf16.mxu0 0
      %1546 = vmatpush2.bf16.msra.mxu0 0
      %1547 = vmatprep.subr.bf16.mxu0 0
      %1548 = vmatpush2.bf16.msra.mxu0 0
      %1549 = vmatprep.mubr.bf16.mxu0 0
      %1550 = vmatmul.mubr.bf16.gmra.mxu0 %v1367
      %v1551 = vpop.f32.mrf.mxu0
      %v1552 = vadd.f32 0.0, %v1551
      %v1553 = vpop.f32.mrf.mxu0
      %v1554 = vadd.f32 0.0, %v1553
      %v1555 = vpop.f32.mrf.mxu0
      %v1556 = vpop.f32.mrf.mxu0
      %1557 = vdwg.mxu0
      %v1558 = vld [vmem:[%s4] sm:$0xff]
      %v1559 = vld [vmem:[%s5] sm:$0xff]
      %v1560 = vadd.f32 %v1429, %v1431
      %v1561 = vadd.f32 %v1560, %v1470
      %v1562 = vadd.f32 %v1561, %v1472
      %v1563 = vadd.f32 %v1562, %v1511
      %v1564 = vadd.f32 %v1563, %v1513
      %v1565 = vadd.f32 %v1564, %v1552
      %v1566 = vadd.f32 %v1565, %v1554
      %1567 = vadd.xlane.f32.xlu0 %v1566
      %v1568 = vpop.xlane.xlu0 %1567
      %v1569 = vrot.slane %v1568, 4
      %v1570 = vadd.f32 %v1568, %v1569
      %v1571 = vrot.slane %v1570, 2
      %v1572 = vadd.f32 %v1570, %v1571
      %v1573 = vrot.slane %v1572, 1
      %v1574 = vadd.f32 %v1572, %v1573
      %s1575 = vtos %v1574
      %s1576 = smul.f32 %s1575, 0.00012207031
      %v1577 = vmul.f32 %v1429, %v1429
      %v1578 = vmul.f32 %v1431, %v1431
      %v1579 = vmul.f32 %v1470, %v1470
      %v1580 = vmul.f32 %v1472, %v1472
      %v1581 = vmul.f32 %v1511, %v1511
      %v1582 = vmul.f32 %v1513, %v1513
      %v1583 = vmul.f32 %v1552, %v1552
      %v1584 = vmul.f32 %v1554, %v1554
      %v1585 = vadd.f32 %v1577, %v1578
      %v1586 = vadd.f32 %v1585, %v1579
      %v1587 = vadd.f32 %v1586, %v1580
      %v1588 = vadd.f32 %v1587, %v1581
      %v1589 = vadd.f32 %v1588, %v1582
      %v1590 = vadd.f32 %v1589, %v1583
      %v1591 = vadd.f32 %v1590, %v1584
      %1592 = vadd.xlane.f32.xlu0 %v1591
      %v1593 = vpop.xlane.xlu0 %1592
      %v1594 = vrot.slane %v1593, 4
      %v1595 = vadd.f32 %v1593, %v1594
      %v1596 = vrot.slane %v1595, 2
      %v1597 = vadd.f32 %v1595, %v1596
      %v1598 = vrot.slane %v1597, 1
      %v1599 = vadd.f32 %v1597, %v1598
      %s1600 = vtos %v1599
      %s1601 = smul.f32 %s1600, 0.00012207031
      %s1602 = smul.f32 %s1576, %s1576
      %s1603 = ssub.f32 %s1601, %s1602
      %s1604 = smax.f32 %s1603, 0.0
      %s1605 = sadd.f32 %s1604, 1e-05
      %v1606 = vstv %s1605
      %v1607 = vrsqrt.pop %v1606
      %s1608 = vtos %v1607
      %v1609 = vstv %s1608
      %v1610 = vmul.f32 %v1558, %v1609
      %v1611 = vstv %s1576
      %v1612 = vmul.f32 %v1611, %v1610
      %v1613 = vsub.f32 %v1559, %v1612
      %1615 = vset.pattern.permute.xlu0 0
      %1616 = vperm.xlu0 %1615, %v1610
      %v1617 = vpop.permute.xlu0 %1616
      %v1619 = vmul.f32 %v1429, %v1617
      %v1620 = vmul.f32 %v1431, %v1617
      %v1621 = vmul.f32 %v1470, %v1617
      %v1622 = vmul.f32 %v1472, %v1617
      %v1623 = vmul.f32 %v1511, %v1617
      %v1624 = vmul.f32 %v1513, %v1617
      %v1625 = vmul.f32 %v1552, %v1617
      %v1626 = vmul.f32 %v1554, %v1617
      %1628 = vset.pattern.permute.xlu0 0
      %1629 = vperm.xlu0 %1628, %v1613
      %v1630 = vpop.permute.xlu0 %1629
      %v1632 = vadd.f32 %v1619, %v1630
      %v1633 = vadd.f32 %v1620, %v1630
      %v1634 = vadd.f32 %v1621, %v1630
      %v1635 = vadd.f32 %v1622, %v1630
      %v1636 = vadd.f32 %v1623, %v1630
      %v1637 = vadd.f32 %v1624, %v1630
      %v1638 = vadd.f32 %v1625, %v1630
      %v1639 = vadd.f32 %v1626, %v1630
      %v1640 = vmul.f32 %v1632, 0.70710677
      %v1641 = vmul.f32 %v1633, 0.70710677
      %v1642 = vmul.f32 %v1634, 0.70710677
      %v1643 = vmul.f32 %v1635, 0.70710677
      %v1644 = vmul.f32 %v1636, 0.70710677
      %v1645 = vmul.f32 %v1637, 0.70710677
      %v1646 = vmul.f32 %v1638, 0.70710677
      %v1647 = vmul.f32 %v1639, 0.70710677
      %v1648 = vand.u32 2147483647, %v1640
      %v1649 = vand.u32 2147483647, %v1641
      %v1650 = vand.u32 2147483647, %v1642
      %v1651 = vand.u32 2147483647, %v1643
      %v1652 = vand.u32 2147483647, %v1644
      %v1653 = vand.u32 2147483647, %v1645
      %v1654 = vand.u32 2147483647, %v1646
      %v1655 = vand.u32 2147483647, %v1647
      %v1656 = vmul.f32 %v1648, 0.3275911
      %v1657 = vmul.f32 %v1649, 0.3275911
      %v1658 = vmul.f32 %v1650, 0.3275911
      %v1659 = vmul.f32 %v1651, 0.3275911
      %v1660 = vmul.f32 %v1652, 0.3275911
      %v1661 = vmul.f32 %v1653, 0.3275911
      %v1662 = vmul.f32 %v1654, 0.3275911
      %v1663 = vmul.f32 %v1655, 0.3275911
      %v1664 = vadd.f32 %v1656, 1.0
      %v1665 = vadd.f32 %v1657, 1.0
      %v1666 = vadd.f32 %v1658, 1.0
      %v1667 = vadd.f32 %v1659, 1.0
      %v1668 = vadd.f32 %v1660, 1.0
      %v1669 = vadd.f32 %v1661, 1.0
      %v1670 = vadd.f32 %v1662, 1.0
      %v1671 = vadd.f32 %v1663, 1.0
      %v1672 = vrcp.pop %v1664
      %v1673 = vmul.f32 1.0, %v1672
      %v1674 = vrcp.pop %v1665
      %v1675 = vmul.f32 1.0, %v1674
      %v1676 = vrcp.pop %v1666
      %v1677 = vmul.f32 1.0, %v1676
      %v1678 = vrcp.pop %v1667
      %v1679 = vmul.f32 1.0, %v1678
      %v1680 = vrcp.pop %v1668
      %v1681 = vmul.f32 1.0, %v1680
      %v1682 = vrcp.pop %v1669
      %v1683 = vmul.f32 1.0, %v1682
      %v1684 = vrcp.pop %v1670
      %v1685 = vmul.f32 1.0, %v1684
      %v1686 = vrcp.pop %v1671
      %v1687 = vmul.f32 1.0, %v1686
      %v1688 = vmul.f32 %v1673, 1.0614054
      %v1689 = vmul.f32 %v1675, 1.0614054
      %v1690 = vmul.f32 %v1677, 1.0614054
      %v1691 = vmul.f32 %v1679, 1.0614054
      %v1692 = vmul.f32 %v1681, 1.0614054
      %v1693 = vmul.f32 %v1683, 1.0614054
      %v1694 = vmul.f32 %v1685, 1.0614054
      %v1695 = vmul.f32 %v1687, 1.0614054
      %v1696 = vsub.f32 %v1688, 1.4531521
      %v1697 = vsub.f32 %v1689, 1.4531521
      %v1698 = vsub.f32 %v1690, 1.4531521
      %v1699 = vsub.f32 %v1691, 1.4531521
      %v1700 = vsub.f32 %v1692, 1.4531521
      %v1701 = vsub.f32 %v1693, 1.4531521
      %v1702 = vsub.f32 %v1694, 1.4531521
      %v1703 = vsub.f32 %v1695, 1.4531521
      %v1704 = vmul.f32 %v1696, %v1673
      %v1705 = vmul.f32 %v1697, %v1675
      %v1706 = vmul.f32 %v1698, %v1677
      %v1707 = vmul.f32 %v1699, %v1679
      %v1708 = vmul.f32 %v1700, %v1681
      %v1709 = vmul.f32 %v1701, %v1683
      %v1710 = vmul.f32 %v1702, %v1685
      %v1711 = vmul.f32 %v1703, %v1687
      %v1712 = vadd.f32 %v1704, 1.4214138
      %v1713 = vadd.f32 %v1705, 1.4214138
      %v1714 = vadd.f32 %v1706, 1.4214138
      %v1715 = vadd.f32 %v1707, 1.4214138
      %v1716 = vadd.f32 %v1708, 1.4214138
      %v1717 = vadd.f32 %v1709, 1.4214138
      %v1718 = vadd.f32 %v1710, 1.4214138
      %v1719 = vadd.f32 %v1711, 1.4214138
      %v1720 = vmul.f32 %v1712, %v1673
      %v1721 = vmul.f32 %v1713, %v1675
      %v1722 = vmul.f32 %v1714, %v1677
      %v1723 = vmul.f32 %v1715, %v1679
      %v1724 = vmul.f32 %v1716, %v1681
      %v1725 = vmul.f32 %v1717, %v1683
      %v1726 = vmul.f32 %v1718, %v1685
      %v1727 = vmul.f32 %v1719, %v1687
      %v1728 = vsub.f32 %v1720, 0.28449672
      %v1729 = vsub.f32 %v1721, 0.28449672
      %v1730 = vsub.f32 %v1722, 0.28449672
      %v1731 = vsub.f32 %v1723, 0.28449672
      %v1732 = vsub.f32 %v1724, 0.28449672
      %v1733 = vsub.f32 %v1725, 0.28449672
      %v1734 = vsub.f32 %v1726, 0.28449672
      %v1735 = vsub.f32 %v1727, 0.28449672
      %v1736 = vmul.f32 %v1728, %v1673
      %v1737 = vmul.f32 %v1729, %v1675
      %v1738 = vmul.f32 %v1730, %v1677
      %v1739 = vmul.f32 %v1731, %v1679
      %v1740 = vmul.f32 %v1732, %v1681
      %v1741 = vmul.f32 %v1733, %v1683
      %v1742 = vmul.f32 %v1734, %v1685
      %v1743 = vmul.f32 %v1735, %v1687
      %v1744 = vadd.f32 %v1736, 0.2548296
      %v1745 = vadd.f32 %v1737, 0.2548296
      %v1746 = vadd.f32 %v1738, 0.2548296
      %v1747 = vadd.f32 %v1739, 0.2548296
      %v1748 = vadd.f32 %v1740, 0.2548296
      %v1749 = vadd.f32 %v1741, 0.2548296
      %v1750 = vadd.f32 %v1742, 0.2548296
      %v1751 = vadd.f32 %v1743, 0.2548296
      %v1752 = vmul.f32 %v1744, %v1673
      %v1753 = vmul.f32 %v1745, %v1675
      %v1754 = vmul.f32 %v1746, %v1677
      %v1755 = vmul.f32 %v1747, %v1679
      %v1756 = vmul.f32 %v1748, %v1681
      %v1757 = vmul.f32 %v1749, %v1683
      %v1758 = vmul.f32 %v1750, %v1685
      %v1759 = vmul.f32 %v1751, %v1687
      %v1760 = vmul.f32 %v1752, 0.5
      %v1761 = vmul.f32 %v1753, 0.5
      %v1762 = vmul.f32 %v1754, 0.5
      %v1763 = vmul.f32 %v1755, 0.5
      %v1764 = vmul.f32 %v1756, 0.5
      %v1765 = vmul.f32 %v1757, 0.5
      %v1766 = vmul.f32 %v1758, 0.5
      %v1767 = vmul.f32 %v1759, 0.5
      %v1768 = vsub.f32 0.0, %v1648
      %v1769 = vsub.f32 0.0, %v1649
      %v1770 = vsub.f32 0.0, %v1650
      %v1771 = vsub.f32 0.0, %v1651
      %v1772 = vsub.f32 0.0, %v1652
      %v1773 = vsub.f32 0.0, %v1653
      %v1774 = vsub.f32 0.0, %v1654
      %v1775 = vsub.f32 0.0, %v1655
      %v1776 = vmul.f32 %v1768, %v1648
      %v1777 = vmul.f32 %v1769, %v1649
      %v1778 = vmul.f32 %v1770, %v1650
      %v1779 = vmul.f32 %v1771, %v1651
      %v1780 = vmul.f32 %v1772, %v1652
      %v1781 = vmul.f32 %v1773, %v1653
      %v1782 = vmul.f32 %v1774, %v1654
      %v1783 = vmul.f32 %v1775, %v1655
      %v1784 = vmul.f32 %v1776, 1.442695
      %v1785 = vpow.pop %v1784
      %v1786 = vmul.f32 %v1777, 1.442695
      %v1787 = vpow.pop %v1786
      %v1788 = vmul.f32 %v1778, 1.442695
      %v1789 = vpow.pop %v1788
      %v1790 = vmul.f32 %v1779, 1.442695
      %v1791 = vpow.pop %v1790
      %v1792 = vmul.f32 %v1780, 1.442695
      %v1793 = vpow.pop %v1792
      %v1794 = vmul.f32 %v1781, 1.442695
      %v1795 = vpow.pop %v1794
      %v1796 = vmul.f32 %v1782, 1.442695
      %v1797 = vpow.pop %v1796
      %v1798 = vmul.f32 %v1783, 1.442695
      %v1799 = vpow.pop %v1798
      %v1800 = vmul.f32 %v1760, %v1785
      %v1801 = vmul.f32 %v1761, %v1787
      %v1802 = vmul.f32 %v1762, %v1789
      %v1803 = vmul.f32 %v1763, %v1791
      %v1804 = vmul.f32 %v1764, %v1793
      %v1805 = vmul.f32 %v1765, %v1795
      %v1806 = vmul.f32 %v1766, %v1797
      %v1807 = vmul.f32 %v1767, %v1799
      %vm1808 = vcmp.ge.f32.partialorder %v1640, 0.0
      %vm1809 = vcmp.ge.f32.partialorder %v1641, 0.0
      %vm1810 = vcmp.ge.f32.partialorder %v1642, 0.0
      %vm1811 = vcmp.ge.f32.partialorder %v1643, 0.0
      %vm1812 = vcmp.ge.f32.partialorder %v1644, 0.0
      %vm1813 = vcmp.ge.f32.partialorder %v1645, 0.0
      %vm1814 = vcmp.ge.f32.partialorder %v1646, 0.0
      %vm1815 = vcmp.ge.f32.partialorder %v1647, 0.0
      %v1816 = vsub.f32 1.0, %v1800
      %v1817 = vsub.f32 1.0, %v1801
      %v1818 = vsub.f32 1.0, %v1802
      %v1819 = vsub.f32 1.0, %v1803
      %v1820 = vsub.f32 1.0, %v1804
      %v1821 = vsub.f32 1.0, %v1805
      %v1822 = vsub.f32 1.0, %v1806
      %v1823 = vsub.f32 1.0, %v1807
      %v1824 = vsel %vm1808, %v1816, %v1800
      %v1825 = vsel %vm1809, %v1817, %v1801
      %v1826 = vsel %vm1810, %v1818, %v1802
      %v1827 = vsel %vm1811, %v1819, %v1803
      %v1828 = vsel %vm1812, %v1820, %v1804
      %v1829 = vsel %vm1813, %v1821, %v1805
      %v1830 = vsel %vm1814, %v1822, %v1806
      %v1831 = vsel %vm1815, %v1823, %v1807
      %v1832 = vmul.f32 %v1632, %v1824
      %v1833 = vmul.f32 %v1633, %v1825
      %v1834 = vmul.f32 %v1634, %v1826
      %v1835 = vmul.f32 %v1635, %v1827
      %v1836 = vmul.f32 %v1636, %v1828
      %v1837 = vmul.f32 %v1637, %v1829
      %v1838 = vmul.f32 %v1638, %v1830
      %v1839 = vmul.f32 %v1639, %v1831
      %1840 = vrot.lane.b32.xlu0 %v1832, 33
      %v1841 = vpop.permute.xlu0 %1840
      %1842 = vrot.lane.b32.xlu0 %v1833, 33
      %v1843 = vpop.permute.xlu0 %1842
      %1844 = vrot.lane.b32.xlu0 %v1834, 33
      %v1845 = vpop.permute.xlu0 %1844
      %1846 = vrot.lane.b32.xlu0 %v1835, 33
      %v1847 = vpop.permute.xlu0 %1846
      %1848 = vrot.lane.b32.xlu0 %v1836, 33
      %v1849 = vpop.permute.xlu0 %1848
      %1850 = vrot.lane.b32.xlu0 %v1837, 33
      %v1851 = vpop.permute.xlu0 %1850
      %1852 = vrot.lane.b32.xlu0 %v1838, 33
      %v1853 = vpop.permute.xlu0 %1852
      %1854 = vrot.lane.b32.xlu0 %v1839, 33
      %v1855 = vpop.permute.xlu0 %1854
      %v1856 = vsel %vm512, %v1853, %v1855
      %v1857 = vsel %vm512, %v1851, %v1853
      %v1858 = vsel %vm512, %v1849, %v1851
      %v1859 = vsel %vm512, %v1847, %v1849
      %v1860 = vsel %vm512, %v1845, %v1847
      %v1861 = vsel %vm512, %v1843, %v1845
      %v1862 = vsel %vm512, %v1841, %v1843
      %v1863 = vsel %vm512, %v1855, %v1841
      %v1864 = vld [vmem:[%s2] sm:$0xff]
      %v1865 = vld [vmem:[%s2 + $0x8] sm:$0xff]
      %v1866 = vld [vmem:[%s2 + $0x10] sm:$0xff]
      %v1867 = vld [vmem:[%s2 + $0x18] sm:$0xff]
      %v1868 = vld [vmem:[%s2 + $0x20] sm:$0xff]
      %v1869 = vld [vmem:[%s2 + $0x28] sm:$0xff]
      %v1870 = vld [vmem:[%s2 + $0x30] sm:$0xff]
      %v1871 = vld [vmem:[%s2 + $0x38] sm:$0xff]
      %v1872 = vmul.f32 %v1863, %v1864
      %v1873 = vmul.f32 %v1862, %v1865
      %v1874 = vmul.f32 %v1861, %v1866
      %v1875 = vmul.f32 %v1860, %v1867
      %v1876 = vmul.f32 %v1859, %v1868
      %v1877 = vmul.f32 %v1858, %v1869
      %v1878 = vmul.f32 %v1857, %v1870
      %v1879 = vmul.f32 %v1856, %v1871
      %v1880 = vpack.c.bf16 %v1872, %v1872
      %v1881 = vpack.c.bf16 %v1873, %v1873
      %v1882 = vpack.c.bf16 %v1874, %v1874
      %v1883 = vpack.c.bf16 %v1875, %v1875
      %v1884 = vpack.c.bf16 %v1876, %v1876
      %v1885 = vpack.c.bf16 %v1877, %v1877
      %v1886 = vpack.c.bf16 %v1878, %v1878
      %v1887 = vpack.c.bf16 %v1879, %v1879
      %v1896 = vunpack.c.l.b16 %v1880
      %v1897 = vunpack.c.l.b16 %v1881
      %v1898 = vunpack.c.l.b16 %v1882
      %v1899 = vunpack.c.l.b16 %v1883
      %v1900 = vunpack.c.l.b16 %v1884
      %v1901 = vunpack.c.l.b16 %v1885
      %v1902 = vunpack.c.l.b16 %v1886
      %v1903 = vunpack.c.l.b16 %v1887
      %v1904 = vpack.c.b16 %v1897, %v1896
      %v1905 = vpack.c.b16 %v1899, %v1898
      %v1906 = vpack.c.b16 %v1901, %v1900
      %v1907 = vpack.c.b16 %v1903, %v1902
      %1912 = vst [vmem:[#allocation2] sm:$0xff] %v1904
      %1913 = vst [vmem:[#allocation2 + $0x8] sm:$0xff] %v1905
      %1914 = vst [vmem:[#allocation2 + $0x10] sm:$0xff] %v1906
      %1915 = vst [vmem:[#allocation2 + $0x18] sm:$0xff] %v1907
      %1916 = vrot.lane.b32.xlu0 %v1832, 32
      %v1917 = vpop.permute.xlu0 %1916
      %1918 = vrot.lane.b32.xlu0 %v1833, 32
      %v1919 = vpop.permute.xlu0 %1918
      %1920 = vrot.lane.b32.xlu0 %v1834, 32
      %v1921 = vpop.permute.xlu0 %1920
      %1922 = vrot.lane.b32.xlu0 %v1835, 32
      %v1923 = vpop.permute.xlu0 %1922
      %1924 = vrot.lane.b32.xlu0 %v1836, 32
      %v1925 = vpop.permute.xlu0 %1924
      %1926 = vrot.lane.b32.xlu0 %v1837, 32
      %v1927 = vpop.permute.xlu0 %1926
      %1928 = vrot.lane.b32.xlu0 %v1838, 32
      %v1929 = vpop.permute.xlu0 %1928
      %1930 = vrot.lane.b32.xlu0 %v1839, 32
      %v1931 = vpop.permute.xlu0 %1930
      %v1932 = vsel %vm589, %v1929, %v1931
      %v1933 = vsel %vm589, %v1927, %v1929
      %v1934 = vsel %vm589, %v1925, %v1927
      %v1935 = vsel %vm589, %v1923, %v1925
      %v1936 = vsel %vm589, %v1921, %v1923
      %v1937 = vsel %vm589, %v1919, %v1921
      %v1938 = vsel %vm589, %v1917, %v1919
      %v1939 = vsel %vm589, %v1931, %v1917
      %v1940 = vld [vmem:[%s2 + $0x40] sm:$0xff]
      %v1941 = vld [vmem:[%s2 + $0x48] sm:$0xff]
      %v1942 = vld [vmem:[%s2 + $0x50] sm:$0xff]
      %v1943 = vld [vmem:[%s2 + $0x58] sm:$0xff]
      %v1944 = vld [vmem:[%s2 + $0x60] sm:$0xff]
      %v1945 = vld [vmem:[%s2 + $0x68] sm:$0xff]
      %v1946 = vld [vmem:[%s2 + $0x70] sm:$0xff]
      %v1947 = vld [vmem:[%s2 + $0x78] sm:$0xff]
      %v1948 = vmul.f32 %v1939, %v1940
      %v1949 = vmul.f32 %v1938, %v1941
      %v1950 = vmul.f32 %v1937, %v1942
      %v1951 = vmul.f32 %v1936, %v1943
      %v1952 = vmul.f32 %v1935, %v1944
      %v1953 = vmul.f32 %v1934, %v1945
      %v1954 = vmul.f32 %v1933, %v1946
      %v1955 = vmul.f32 %v1932, %v1947
      %v1956 = vpack.c.bf16 %v1948, %v1948
      %v1957 = vpack.c.bf16 %v1949, %v1949
      %v1958 = vpack.c.bf16 %v1950, %v1950
      %v1959 = vpack.c.bf16 %v1951, %v1951
      %v1960 = vpack.c.bf16 %v1952, %v1952
      %v1961 = vpack.c.bf16 %v1953, %v1953
      %v1962 = vpack.c.bf16 %v1954, %v1954
      %v1963 = vpack.c.bf16 %v1955, %v1955
      %v1972 = vunpack.c.l.b16 %v1956
      %v1973 = vunpack.c.l.b16 %v1957
      %v1974 = vunpack.c.l.b16 %v1958
      %v1975 = vunpack.c.l.b16 %v1959
      %v1976 = vunpack.c.l.b16 %v1960
      %v1977 = vunpack.c.l.b16 %v1961
      %v1978 = vunpack.c.l.b16 %v1962
      %v1979 = vunpack.c.l.b16 %v1963
      %v1980 = vpack.c.b16 %v1973, %v1972
      %v1981 = vpack.c.b16 %v1975, %v1974
      %v1982 = vpack.c.b16 %v1977, %v1976
      %v1983 = vpack.c.b16 %v1979, %v1978
      %1988 = vst [vmem:[#allocation2 + $0x20] sm:$0xff] %v1980
      %1989 = vst [vmem:[#allocation2 + $0x28] sm:$0xff] %v1981
      %1990 = vst [vmem:[#allocation2 + $0x30] sm:$0xff] %v1982
      %1991 = vst [vmem:[#allocation2 + $0x38] sm:$0xff] %v1983
      %1992 = vrot.lane.b32.xlu0 %v1832, 31
      %v1993 = vpop.permute.xlu0 %1992
      %1994 = vrot.lane.b32.xlu0 %v1833, 31
      %v1995 = vpop.permute.xlu0 %1994
      %1996 = vrot.lane.b32.xlu0 %v1834, 31
      %v1997 = vpop.permute.xlu0 %1996
      %1998 = vrot.lane.b32.xlu0 %v1835, 31
      %v1999 = vpop.permute.xlu0 %1998
      %2000 = vrot.lane.b32.xlu0 %v1836, 31
      %v2001 = vpop.permute.xlu0 %2000
      %2002 = vrot.lane.b32.xlu0 %v1837, 31
      %v2003 = vpop.permute.xlu0 %2002
      %2004 = vrot.lane.b32.xlu0 %v1838, 31
      %v2005 = vpop.permute.xlu0 %2004
      %2006 = vrot.lane.b32.xlu0 %v1839, 31
      %v2007 = vpop.permute.xlu0 %2006
      %v2008 = vsel %vm666, %v2005, %v2007
      %v2009 = vsel %vm666, %v2003, %v2005
      %v2010 = vsel %vm666, %v2001, %v2003
      %v2011 = vsel %vm666, %v1999, %v2001
      %v2012 = vsel %vm666, %v1997, %v1999
      %v2013 = vsel %vm666, %v1995, %v1997
      %v2014 = vsel %vm666, %v1993, %v1995
      %v2015 = vsel %vm666, %v2007, %v1993
      %v2016 = vld [vmem:[%s2 + $0x80] sm:$0xff]
      %v2017 = vld [vmem:[%s2 + $0x88] sm:$0xff]
      %v2018 = vld [vmem:[%s2 + $0x90] sm:$0xff]
      %v2019 = vld [vmem:[%s2 + $0x98] sm:$0xff]
      %v2020 = vld [vmem:[%s2 + $0xa0] sm:$0xff]
      %v2021 = vld [vmem:[%s2 + $0xa8] sm:$0xff]
      %v2022 = vld [vmem:[%s2 + $0xb0] sm:$0xff]
      %v2023 = vld [vmem:[%s2 + $0xb8] sm:$0xff]
      %v2024 = vmul.f32 %v2015, %v2016
      %v2025 = vmul.f32 %v2014, %v2017
      %v2026 = vmul.f32 %v2013, %v2018
      %v2027 = vmul.f32 %v2012, %v2019
      %v2028 = vmul.f32 %v2011, %v2020
      %v2029 = vmul.f32 %v2010, %v2021
      %v2030 = vmul.f32 %v2009, %v2022
      %v2031 = vmul.f32 %v2008, %v2023
      %v2032 = vpack.c.bf16 %v2024, %v2024
      %v2033 = vpack.c.bf16 %v2025, %v2025
      %v2034 = vpack.c.bf16 %v2026, %v2026
      %v2035 = vpack.c.bf16 %v2027, %v2027
      %v2036 = vpack.c.bf16 %v2028, %v2028
      %v2037 = vpack.c.bf16 %v2029, %v2029
      %v2038 = vpack.c.bf16 %v2030, %v2030
      %v2039 = vpack.c.bf16 %v2031, %v2031
      %v2048 = vunpack.c.l.b16 %v2032
      %v2049 = vunpack.c.l.b16 %v2033
      %v2050 = vunpack.c.l.b16 %v2034
      %v2051 = vunpack.c.l.b16 %v2035
      %v2052 = vunpack.c.l.b16 %v2036
      %v2053 = vunpack.c.l.b16 %v2037
      %v2054 = vunpack.c.l.b16 %v2038
      %v2055 = vunpack.c.l.b16 %v2039
      %v2056 = vpack.c.b16 %v2049, %v2048
      %v2057 = vpack.c.b16 %v2051, %v2050
      %v2058 = vpack.c.b16 %v2053, %v2052
      %v2059 = vpack.c.b16 %v2055, %v2054
      %2064 = vst [vmem:[#allocation2 + $0x40] sm:$0xff] %v2056
      %2065 = vst [vmem:[#allocation2 + $0x48] sm:$0xff] %v2057
      %2066 = vst [vmem:[#allocation2 + $0x50] sm:$0xff] %v2058
      %2067 = vst [vmem:[#allocation2 + $0x58] sm:$0xff] %v2059
      %2068 = vrot.lane.b32.xlu0 %v1832, 1
      %v2069 = vpop.permute.xlu0 %2068
      %2070 = vrot.lane.b32.xlu0 %v1833, 1
      %v2071 = vpop.permute.xlu0 %2070
      %2072 = vrot.lane.b32.xlu0 %v1834, 1
      %v2073 = vpop.permute.xlu0 %2072
      %2074 = vrot.lane.b32.xlu0 %v1835, 1
      %v2075 = vpop.permute.xlu0 %2074
      %2076 = vrot.lane.b32.xlu0 %v1836, 1
      %v2077 = vpop.permute.xlu0 %2076
      %2078 = vrot.lane.b32.xlu0 %v1837, 1
      %v2079 = vpop.permute.xlu0 %2078
      %2080 = vrot.lane.b32.xlu0 %v1838, 1
      %v2081 = vpop.permute.xlu0 %2080
      %2082 = vrot.lane.b32.xlu0 %v1839, 1
      %v2083 = vpop.permute.xlu0 %2082
      %v2084 = vsel %vm743, %v2081, %v2083
      %v2085 = vsel %vm743, %v2079, %v2081
      %v2086 = vsel %vm743, %v2077, %v2079
      %v2087 = vsel %vm743, %v2075, %v2077
      %v2088 = vsel %vm743, %v2073, %v2075
      %v2089 = vsel %vm743, %v2071, %v2073
      %v2090 = vsel %vm743, %v2069, %v2071
      %v2091 = vsel %vm743, %v2083, %v2069
      %v2092 = vld [vmem:[%s2 + $0xc0] sm:$0xff]
      %v2093 = vld [vmem:[%s2 + $0xc8] sm:$0xff]
      %v2094 = vld [vmem:[%s2 + $0xd0] sm:$0xff]
      %v2095 = vld [vmem:[%s2 + $0xd8] sm:$0xff]
      %v2096 = vld [vmem:[%s2 + $0xe0] sm:$0xff]
      %v2097 = vld [vmem:[%s2 + $0xe8] sm:$0xff]
      %v2098 = vld [vmem:[%s2 + $0xf0] sm:$0xff]
      %v2099 = vld [vmem:[%s2 + $0xf8] sm:$0xff]
      %v2100 = vmul.f32 %v2091, %v2092
      %v2101 = vmul.f32 %v2090, %v2093
      %v2102 = vmul.f32 %v2089, %v2094
      %v2103 = vmul.f32 %v2088, %v2095
      %v2104 = vmul.f32 %v2087, %v2096
      %v2105 = vmul.f32 %v2086, %v2097
      %v2106 = vmul.f32 %v2085, %v2098
      %v2107 = vmul.f32 %v2084, %v2099
      %v2108 = vpack.c.bf16 %v2100, %v2100
      %v2109 = vpack.c.bf16 %v2101, %v2101
      %v2110 = vpack.c.bf16 %v2102, %v2102
      %v2111 = vpack.c.bf16 %v2103, %v2103
      %v2112 = vpack.c.bf16 %v2104, %v2104
      %v2113 = vpack.c.bf16 %v2105, %v2105
      %v2114 = vpack.c.bf16 %v2106, %v2106
      %v2115 = vpack.c.bf16 %v2107, %v2107
      %v2124 = vunpack.c.l.b16 %v2108
      %v2125 = vunpack.c.l.b16 %v2109
      %v2126 = vunpack.c.l.b16 %v2110
      %v2127 = vunpack.c.l.b16 %v2111
      %v2128 = vunpack.c.l.b16 %v2112
      %v2129 = vunpack.c.l.b16 %v2113
      %v2130 = vunpack.c.l.b16 %v2114
      %v2131 = vunpack.c.l.b16 %v2115
      %v2132 = vpack.c.b16 %v2125, %v2124
      %v2133 = vpack.c.b16 %v2127, %v2126
      %v2134 = vpack.c.b16 %v2129, %v2128
      %v2135 = vpack.c.b16 %v2131, %v2130
      %2140 = vst [vmem:[#allocation2 + $0x60] sm:$0xff] %v2132
      %2141 = vst [vmem:[#allocation2 + $0x68] sm:$0xff] %v2133
      %2142 = vst [vmem:[#allocation2 + $0x70] sm:$0xff] %v2134
      %2143 = vst [vmem:[#allocation2 + $0x78] sm:$0xff] %v2135
      %v2144 = vpack.c.bf16 %v1832, %v1832
      %v2145 = vpack.c.bf16 %v1833, %v1833
      %v2146 = vpack.c.bf16 %v1834, %v1834
      %v2147 = vpack.c.bf16 %v1835, %v1835
      %v2148 = vpack.c.bf16 %v1836, %v1836
      %v2149 = vpack.c.bf16 %v1837, %v1837
      %v2150 = vpack.c.bf16 %v1838, %v1838
      %v2151 = vpack.c.bf16 %v1839, %v1839
      %v2160 = vunpack.c.l.b16 %v2144
      %v2161 = vunpack.c.l.b16 %v2145
      %v2162 = vunpack.c.l.b16 %v2146
      %v2163 = vunpack.c.l.b16 %v2147
      %v2164 = vunpack.c.l.b16 %v2148
      %v2165 = vunpack.c.l.b16 %v2149
      %v2166 = vunpack.c.l.b16 %v2150
      %v2167 = vunpack.c.l.b16 %v2151
      %v2168 = vpack.c.b16 %v2161, %v2160
      %v2169 = vpack.c.b16 %v2163, %v2162
      %v2170 = vpack.c.b16 %v2165, %v2164
      %v2171 = vpack.c.b16 %v2167, %v2166
      %2176 = vst [vmem:[#allocation2 + $0x80] sm:$0xff] %v2168
      %2177 = vst [vmem:[#allocation2 + $0x88] sm:$0xff] %v2169
      %2178 = vst [vmem:[#allocation2 + $0x90] sm:$0xff] %v2170
      %2179 = vst [vmem:[#allocation2 + $0x98] sm:$0xff] %v2171
      %2180 = vrot.lane.b32.xlu0 %v1832, 127
      %v2181 = vpop.permute.xlu0 %2180
      %2182 = vrot.lane.b32.xlu0 %v1833, 127
      %v2183 = vpop.permute.xlu0 %2182
      %2184 = vrot.lane.b32.xlu0 %v1834, 127
      %v2185 = vpop.permute.xlu0 %2184
      %2186 = vrot.lane.b32.xlu0 %v1835, 127
      %v2187 = vpop.permute.xlu0 %2186
      %2188 = vrot.lane.b32.xlu0 %v1836, 127
      %v2189 = vpop.permute.xlu0 %2188
      %2190 = vrot.lane.b32.xlu0 %v1837, 127
      %v2191 = vpop.permute.xlu0 %2190
      %2192 = vrot.lane.b32.xlu0 %v1838, 127
      %v2193 = vpop.permute.xlu0 %2192
      %2194 = vrot.lane.b32.xlu0 %v1839, 127
      %v2195 = vpop.permute.xlu0 %2194
      %v2196 = vsel %vm856, %v2193, %v2195
      %v2197 = vsel %vm856, %v2191, %v2193
      %v2198 = vsel %vm856, %v2189, %v2191
      %v2199 = vsel %vm856, %v2187, %v2189
      %v2200 = vsel %vm856, %v2185, %v2187
      %v2201 = vsel %vm856, %v2183, %v2185
      %v2202 = vsel %vm856, %v2181, %v2183
      %v2203 = vsel %vm856, %v2195, %v2181
      %v2204 = vld [vmem:[%s2 + $0x140] sm:$0xff]
      %v2205 = vld [vmem:[%s2 + $0x148] sm:$0xff]
      %v2206 = vld [vmem:[%s2 + $0x150] sm:$0xff]
      %v2207 = vld [vmem:[%s2 + $0x158] sm:$0xff]
      %v2208 = vld [vmem:[%s2 + $0x160] sm:$0xff]
      %v2209 = vld [vmem:[%s2 + $0x168] sm:$0xff]
      %v2210 = vld [vmem:[%s2 + $0x170] sm:$0xff]
      %v2211 = vld [vmem:[%s2 + $0x178] sm:$0xff]
      %v2212 = vmul.f32 %v2202, %v2204
      %v2213 = vmul.f32 %v2201, %v2205
      %v2214 = vmul.f32 %v2200, %v2206
      %v2215 = vmul.f32 %v2199, %v2207
      %v2216 = vmul.f32 %v2198, %v2208
      %v2217 = vmul.f32 %v2197, %v2209
      %v2218 = vmul.f32 %v2196, %v2210
      %v2219 = vmul.f32 %v2203, %v2211
      %v2220 = vpack.c.bf16 %v2212, %v2212
      %v2221 = vpack.c.bf16 %v2213, %v2213
      %v2222 = vpack.c.bf16 %v2214, %v2214
      %v2223 = vpack.c.bf16 %v2215, %v2215
      %v2224 = vpack.c.bf16 %v2216, %v2216
      %v2225 = vpack.c.bf16 %v2217, %v2217
      %v2226 = vpack.c.bf16 %v2218, %v2218
      %v2227 = vpack.c.bf16 %v2219, %v2219
      %v2236 = vunpack.c.l.b16 %v2220
      %v2237 = vunpack.c.l.b16 %v2221
      %v2238 = vunpack.c.l.b16 %v2222
      %v2239 = vunpack.c.l.b16 %v2223
      %v2240 = vunpack.c.l.b16 %v2224
      %v2241 = vunpack.c.l.b16 %v2225
      %v2242 = vunpack.c.l.b16 %v2226
      %v2243 = vunpack.c.l.b16 %v2227
      %v2244 = vpack.c.b16 %v2237, %v2236
      %v2245 = vpack.c.b16 %v2239, %v2238
      %v2246 = vpack.c.b16 %v2241, %v2240
      %v2247 = vpack.c.b16 %v2243, %v2242
      %2252 = vst [vmem:[#allocation2 + $0xa0] sm:$0xff] %v2244
      %2253 = vst [vmem:[#allocation2 + $0xa8] sm:$0xff] %v2245
      %2254 = vst [vmem:[#allocation2 + $0xb0] sm:$0xff] %v2246
      %2255 = vst [vmem:[#allocation2 + $0xb8] sm:$0xff] %v2247
      %2256 = vrot.lane.b32.xlu0 %v1832, 97
      %v2257 = vpop.permute.xlu0 %2256
      %2258 = vrot.lane.b32.xlu0 %v1833, 97
      %v2259 = vpop.permute.xlu0 %2258
      %2260 = vrot.lane.b32.xlu0 %v1834, 97
      %v2261 = vpop.permute.xlu0 %2260
      %2262 = vrot.lane.b32.xlu0 %v1835, 97
      %v2263 = vpop.permute.xlu0 %2262
      %2264 = vrot.lane.b32.xlu0 %v1836, 97
      %v2265 = vpop.permute.xlu0 %2264
      %2266 = vrot.lane.b32.xlu0 %v1837, 97
      %v2267 = vpop.permute.xlu0 %2266
      %2268 = vrot.lane.b32.xlu0 %v1838, 97
      %v2269 = vpop.permute.xlu0 %2268
      %2270 = vrot.lane.b32.xlu0 %v1839, 97
      %v2271 = vpop.permute.xlu0 %2270
      %v2272 = vsel %vm933, %v2269, %v2271
      %v2273 = vsel %vm933, %v2267, %v2269
      %v2274 = vsel %vm933, %v2265, %v2267
      %v2275 = vsel %vm933, %v2263, %v2265
      %v2276 = vsel %vm933, %v2261, %v2263
      %v2277 = vsel %vm933, %v2259, %v2261
      %v2278 = vsel %vm933, %v2257, %v2259
      %v2279 = vsel %vm933, %v2271, %v2257
      %v2280 = vld [vmem:[%s2 + $0x180] sm:$0xff]
      %v2281 = vld [vmem:[%s2 + $0x188] sm:$0xff]
      %v2282 = vld [vmem:[%s2 + $0x190] sm:$0xff]
      %v2283 = vld [vmem:[%s2 + $0x198] sm:$0xff]
      %v2284 = vld [vmem:[%s2 + $0x1a0] sm:$0xff]
      %v2285 = vld [vmem:[%s2 + $0x1a8] sm:$0xff]
      %v2286 = vld [vmem:[%s2 + $0x1b0] sm:$0xff]
      %v2287 = vld [vmem:[%s2 + $0x1b8] sm:$0xff]
      %v2288 = vmul.f32 %v2278, %v2280
      %v2289 = vmul.f32 %v2277, %v2281
      %v2290 = vmul.f32 %v2276, %v2282
      %v2291 = vmul.f32 %v2275, %v2283
      %v2292 = vmul.f32 %v2274, %v2284
      %v2293 = vmul.f32 %v2273, %v2285
      %v2294 = vmul.f32 %v2272, %v2286
      %v2295 = vmul.f32 %v2279, %v2287
      %v2296 = vpack.c.bf16 %v2288, %v2288
      %v2297 = vpack.c.bf16 %v2289, %v2289
      %v2298 = vpack.c.bf16 %v2290, %v2290
      %v2299 = vpack.c.bf16 %v2291, %v2291
      %v2300 = vpack.c.bf16 %v2292, %v2292
      %v2301 = vpack.c.bf16 %v2293, %v2293
      %v2302 = vpack.c.bf16 %v2294, %v2294
      %v2303 = vpack.c.bf16 %v2295, %v2295
      %v2312 = vunpack.c.l.b16 %v2296
      %v2313 = vunpack.c.l.b16 %v2297
      %v2314 = vunpack.c.l.b16 %v2298
      %v2315 = vunpack.c.l.b16 %v2299
      %v2316 = vunpack.c.l.b16 %v2300
      %v2317 = vunpack.c.l.b16 %v2301
      %v2318 = vunpack.c.l.b16 %v2302
      %v2319 = vunpack.c.l.b16 %v2303
      %v2320 = vpack.c.b16 %v2313, %v2312
      %v2321 = vpack.c.b16 %v2315, %v2314
      %v2322 = vpack.c.b16 %v2317, %v2316
      %v2323 = vpack.c.b16 %v2319, %v2318
      %2328 = vst [vmem:[#allocation2 + $0xc0] sm:$0xff] %v2320
      %2329 = vst [vmem:[#allocation2 + $0xc8] sm:$0xff] %v2321
      %2330 = vst [vmem:[#allocation2 + $0xd0] sm:$0xff] %v2322
      %2331 = vst [vmem:[#allocation2 + $0xd8] sm:$0xff] %v2323
      %2332 = vrot.lane.b32.xlu0 %v1832, 96
      %v2333 = vpop.permute.xlu0 %2332
      %2334 = vrot.lane.b32.xlu0 %v1833, 96
      %v2335 = vpop.permute.xlu0 %2334
      %2336 = vrot.lane.b32.xlu0 %v1834, 96
      %v2337 = vpop.permute.xlu0 %2336
      %2338 = vrot.lane.b32.xlu0 %v1835, 96
      %v2339 = vpop.permute.xlu0 %2338
      %2340 = vrot.lane.b32.xlu0 %v1836, 96
      %v2341 = vpop.permute.xlu0 %2340
      %2342 = vrot.lane.b32.xlu0 %v1837, 96
      %v2343 = vpop.permute.xlu0 %2342
      %2344 = vrot.lane.b32.xlu0 %v1838, 96
      %v2345 = vpop.permute.xlu0 %2344
      %2346 = vrot.lane.b32.xlu0 %v1839, 96
      %v2347 = vpop.permute.xlu0 %2346
      %v2348 = vsel %vm1010, %v2345, %v2347
      %v2349 = vsel %vm1010, %v2343, %v2345
      %v2350 = vsel %vm1010, %v2341, %v2343
      %v2351 = vsel %vm1010, %v2339, %v2341
      %v2352 = vsel %vm1010, %v2337, %v2339
      %v2353 = vsel %vm1010, %v2335, %v2337
      %v2354 = vsel %vm1010, %v2333, %v2335
      %v2355 = vsel %vm1010, %v2347, %v2333
      %v2356 = vld [vmem:[%s2 + $0x1c0] sm:$0xff]
      %v2357 = vld [vmem:[%s2 + $0x1c8] sm:$0xff]
      %v2358 = vld [vmem:[%s2 + $0x1d0] sm:$0xff]
      %v2359 = vld [vmem:[%s2 + $0x1d8] sm:$0xff]
      %v2360 = vld [vmem:[%s2 + $0x1e0] sm:$0xff]
      %v2361 = vld [vmem:[%s2 + $0x1e8] sm:$0xff]
      %v2362 = vld [vmem:[%s2 + $0x1f0] sm:$0xff]
      %v2363 = vld [vmem:[%s2 + $0x1f8] sm:$0xff]
      %v2364 = vmul.f32 %v2354, %v2356
      %v2365 = vmul.f32 %v2353, %v2357
      %v2366 = vmul.f32 %v2352, %v2358
      %v2367 = vmul.f32 %v2351, %v2359
      %v2368 = vmul.f32 %v2350, %v2360
      %v2369 = vmul.f32 %v2349, %v2361
      %v2370 = vmul.f32 %v2348, %v2362
      %v2371 = vmul.f32 %v2355, %v2363
      %v2372 = vpack.c.bf16 %v2364, %v2364
      %v2373 = vpack.c.bf16 %v2365, %v2365
      %v2374 = vpack.c.bf16 %v2366, %v2366
      %v2375 = vpack.c.bf16 %v2367, %v2367
      %v2376 = vpack.c.bf16 %v2368, %v2368
      %v2377 = vpack.c.bf16 %v2369, %v2369
      %v2378 = vpack.c.bf16 %v2370, %v2370
      %v2379 = vpack.c.bf16 %v2371, %v2371
      %v2388 = vunpack.c.l.b16 %v2372
      %v2389 = vunpack.c.l.b16 %v2373
      %v2390 = vunpack.c.l.b16 %v2374
      %v2391 = vunpack.c.l.b16 %v2375
      %v2392 = vunpack.c.l.b16 %v2376
      %v2393 = vunpack.c.l.b16 %v2377
      %v2394 = vunpack.c.l.b16 %v2378
      %v2395 = vunpack.c.l.b16 %v2379
      %v2396 = vpack.c.b16 %v2389, %v2388
      %v2397 = vpack.c.b16 %v2391, %v2390
      %v2398 = vpack.c.b16 %v2393, %v2392
      %v2399 = vpack.c.b16 %v2395, %v2394
      %2404 = vst [vmem:[#allocation2 + $0xe0] sm:$0xff] %v2396
      %2405 = vst [vmem:[#allocation2 + $0xe8] sm:$0xff] %v2397
      %2406 = vst [vmem:[#allocation2 + $0xf0] sm:$0xff] %v2398
      %2407 = vst [vmem:[#allocation2 + $0xf8] sm:$0xff] %v2399
      %2408 = vrot.lane.b32.xlu0 %v1832, 95
      %v2409 = vpop.permute.xlu0 %2408
      %2410 = vrot.lane.b32.xlu0 %v1833, 95
      %v2411 = vpop.permute.xlu0 %2410
      %2412 = vrot.lane.b32.xlu0 %v1834, 95
      %v2413 = vpop.permute.xlu0 %2412
      %2414 = vrot.lane.b32.xlu0 %v1835, 95
      %v2415 = vpop.permute.xlu0 %2414
      %2416 = vrot.lane.b32.xlu0 %v1836, 95
      %v2417 = vpop.permute.xlu0 %2416
      %2418 = vrot.lane.b32.xlu0 %v1837, 95
      %v2419 = vpop.permute.xlu0 %2418
      %2420 = vrot.lane.b32.xlu0 %v1838, 95
      %v2421 = vpop.permute.xlu0 %2420
      %2422 = vrot.lane.b32.xlu0 %v1839, 95
      %v2423 = vpop.permute.xlu0 %2422
      %v2424 = vsel %vm1087, %v2421, %v2423
      %v2425 = vsel %vm1087, %v2419, %v2421
      %v2426 = vsel %vm1087, %v2417, %v2419
      %v2427 = vsel %vm1087, %v2415, %v2417
      %v2428 = vsel %vm1087, %v2413, %v2415
      %v2429 = vsel %vm1087, %v2411, %v2413
      %v2430 = vsel %vm1087, %v2409, %v2411
      %v2431 = vsel %vm1087, %v2423, %v2409
      %v2432 = vld [vmem:[%s2 + $0x200] sm:$0xff]
      %v2433 = vld [vmem:[%s2 + $0x208] sm:$0xff]
      %v2434 = vld [vmem:[%s2 + $0x210] sm:$0xff]
      %v2435 = vld [vmem:[%s2 + $0x218] sm:$0xff]
      %v2436 = vld [vmem:[%s2 + $0x220] sm:$0xff]
      %v2437 = vld [vmem:[%s2 + $0x228] sm:$0xff]
      %v2438 = vld [vmem:[%s2 + $0x230] sm:$0xff]
      %v2439 = vld [vmem:[%s2 + $0x238] sm:$0xff]
      %v2440 = vmul.f32 %v2430, %v2432
      %v2441 = vmul.f32 %v2429, %v2433
      %v2442 = vmul.f32 %v2428, %v2434
      %v2443 = vmul.f32 %v2427, %v2435
      %v2444 = vmul.f32 %v2426, %v2436
      %v2445 = vmul.f32 %v2425, %v2437
      %v2446 = vmul.f32 %v2424, %v2438
      %v2447 = vmul.f32 %v2431, %v2439
      %v2448 = vpack.c.bf16 %v2440, %v2440
      %v2449 = vpack.c.bf16 %v2441, %v2441
      %v2450 = vpack.c.bf16 %v2442, %v2442
      %v2451 = vpack.c.bf16 %v2443, %v2443
      %v2452 = vpack.c.bf16 %v2444, %v2444
      %v2453 = vpack.c.bf16 %v2445, %v2445
      %v2454 = vpack.c.bf16 %v2446, %v2446
      %v2455 = vpack.c.bf16 %v2447, %v2447
      %v2464 = vunpack.c.l.b16 %v2448
      %v2465 = vunpack.c.l.b16 %v2449
      %v2466 = vunpack.c.l.b16 %v2450
      %v2467 = vunpack.c.l.b16 %v2451
      %v2468 = vunpack.c.l.b16 %v2452
      %v2469 = vunpack.c.l.b16 %v2453
      %v2470 = vunpack.c.l.b16 %v2454
      %v2471 = vunpack.c.l.b16 %v2455
      %v2472 = vpack.c.b16 %v2465, %v2464
      %v2473 = vpack.c.b16 %v2467, %v2466
      %v2474 = vpack.c.b16 %v2469, %v2468
      %v2475 = vpack.c.b16 %v2471, %v2470
      %2480 = vst [vmem:[#allocation2 + $0x100] sm:$0xff] %v2472
      %2481 = vst [vmem:[#allocation2 + $0x108] sm:$0xff] %v2473
      %2482 = vst [vmem:[#allocation2 + $0x110] sm:$0xff] %v2474
      %2483 = vst [vmem:[#allocation2 + $0x118] sm:$0xff] %v2475
      %v2484 = vld [vmem:[%s6] sm:$0xf]
      %v2485 = vld [vmem:[#allocation2] sm:$0xff]
      %v2486 = vld [vmem:[#allocation2 + $0x8] sm:$0xff]
      %v2487 = vld [vmem:[#allocation2 + $0x10] sm:$0xff]
      %v2488 = vld [vmem:[#allocation2 + $0x18] sm:$0xff]
      %v2489 = vld [vmem:[#allocation2 + $0x20] sm:$0xff]
      %v2490 = vld [vmem:[#allocation2 + $0x28] sm:$0xff]
      %v2491 = vld [vmem:[#allocation2 + $0x30] sm:$0xff]
      %v2492 = vld [vmem:[#allocation2 + $0x38] sm:$0xff]
      %v2493 = vld [vmem:[#allocation2 + $0x40] sm:$0xff]
      %v2494 = vld [vmem:[#allocation2 + $0x48] sm:$0xff]
      %v2495 = vld [vmem:[#allocation2 + $0x50] sm:$0xff]
      %v2496 = vld [vmem:[#allocation2 + $0x58] sm:$0xff]
      %v2497 = vld [vmem:[#allocation2 + $0x60] sm:$0xff]
      %v2498 = vld [vmem:[#allocation2 + $0x68] sm:$0xff]
      %v2499 = vld [vmem:[#allocation2 + $0x70] sm:$0xff]
      %v2500 = vld [vmem:[#allocation2 + $0x78] sm:$0xff]
      %v2501 = vld [vmem:[#allocation2 + $0x80] sm:$0xff]
      %v2502 = vld [vmem:[#allocation2 + $0x88] sm:$0xff]
      %v2503 = vld [vmem:[#allocation2 + $0x90] sm:$0xff]
      %v2504 = vld [vmem:[#allocation2 + $0x98] sm:$0xff]
      %v2505 = vld [vmem:[#allocation2 + $0xa0] sm:$0xff]
      %v2506 = vld [vmem:[#allocation2 + $0xa8] sm:$0xff]
      %v2507 = vld [vmem:[#allocation2 + $0xb0] sm:$0xff]
      %v2508 = vld [vmem:[#allocation2 + $0xb8] sm:$0xff]
      %v2509 = vld [vmem:[#allocation2 + $0xc0] sm:$0xff]
      %v2510 = vld [vmem:[#allocation2 + $0xc8] sm:$0xff]
      %v2511 = vld [vmem:[#allocation2 + $0xd0] sm:$0xff]
      %v2512 = vld [vmem:[#allocation2 + $0xd8] sm:$0xff]
      %v2513 = vld [vmem:[#allocation2 + $0xe0] sm:$0xff]
      %v2514 = vld [vmem:[#allocation2 + $0xe8] sm:$0xff]
      %v2515 = vld [vmem:[#allocation2 + $0xf0] sm:$0xff]
      %v2516 = vld [vmem:[#allocation2 + $0xf8] sm:$0xff]
      %v2517 = vld [vmem:[#allocation2 + $0x100] sm:$0xff]
      %v2518 = vld [vmem:[#allocation2 + $0x108] sm:$0xff]
      %v2519 = vld [vmem:[#allocation2 + $0x110] sm:$0xff]
      %v2520 = vld [vmem:[#allocation2 + $0x118] sm:$0xff]
      %v2557 = vunpack.c.l.b16 %v2485
      %v2558 = vunpack.c.h.b16 %v2485
      %v2559 = vunpack.c.l.b16 %v2486
      %v2560 = vunpack.c.h.b16 %v2486
      %v2561 = vunpack.c.l.b16 %v2487
      %v2562 = vunpack.c.h.b16 %v2487
      %v2563 = vunpack.c.l.b16 %v2488
      %v2564 = vunpack.c.h.b16 %v2488
      %v2565 = vunpack.c.l.b16 %v2489
      %v2566 = vunpack.c.h.b16 %v2489
      %v2567 = vunpack.c.l.b16 %v2490
      %v2568 = vunpack.c.h.b16 %v2490
      %v2569 = vunpack.c.l.b16 %v2491
      %v2570 = vunpack.c.h.b16 %v2491
      %v2571 = vunpack.c.l.b16 %v2492
      %v2572 = vunpack.c.h.b16 %v2492
      %v2573 = vunpack.c.l.b16 %v2493
      %v2574 = vunpack.c.h.b16 %v2493
      %v2575 = vunpack.c.l.b16 %v2494
      %v2576 = vunpack.c.h.b16 %v2494
      %v2577 = vunpack.c.l.b16 %v2495
      %v2578 = vunpack.c.h.b16 %v2495
      %v2579 = vunpack.c.l.b16 %v2496
      %v2580 = vunpack.c.h.b16 %v2496
      %v2581 = vunpack.c.l.b16 %v2497
      %v2582 = vunpack.c.h.b16 %v2497
      %v2583 = vunpack.c.l.b16 %v2498
      %v2584 = vunpack.c.h.b16 %v2498
      %v2585 = vunpack.c.l.b16 %v2499
      %v2586 = vunpack.c.h.b16 %v2499
      %v2587 = vunpack.c.l.b16 %v2500
      %v2588 = vunpack.c.h.b16 %v2500
      %v2589 = vunpack.c.l.b16 %v2501
      %v2590 = vunpack.c.h.b16 %v2501
      %v2591 = vunpack.c.l.b16 %v2502
      %v2592 = vunpack.c.h.b16 %v2502
      %v2593 = vunpack.c.l.b16 %v2503
      %v2594 = vunpack.c.h.b16 %v2503
      %v2595 = vunpack.c.l.b16 %v2504
      %v2596 = vunpack.c.h.b16 %v2504
      %v2597 = vunpack.c.l.b16 %v2505
      %v2598 = vunpack.c.h.b16 %v2505
      %v2599 = vunpack.c.l.b16 %v2506
      %v2600 = vunpack.c.h.b16 %v2506
      %v2601 = vunpack.c.l.b16 %v2507
      %v2602 = vunpack.c.h.b16 %v2507
      %v2603 = vunpack.c.l.b16 %v2508
      %v2604 = vunpack.c.h.b16 %v2508
      %v2605 = vunpack.c.l.b16 %v2509
      %v2606 = vunpack.c.h.b16 %v2509
      %v2607 = vunpack.c.l.b16 %v2510
      %v2608 = vunpack.c.h.b16 %v2510
      %v2609 = vunpack.c.l.b16 %v2511
      %v2610 = vunpack.c.h.b16 %v2511
      %v2611 = vunpack.c.l.b16 %v2512
      %v2612 = vunpack.c.h.b16 %v2512
      %v2613 = vunpack.c.l.b16 %v2513
      %v2614 = vunpack.c.h.b16 %v2513
      %v2615 = vunpack.c.l.b16 %v2514
      %v2616 = vunpack.c.h.b16 %v2514
      %v2617 = vunpack.c.l.b16 %v2515
      %v2618 = vunpack.c.h.b16 %v2515
      %v2619 = vunpack.c.l.b16 %v2516
      %v2620 = vunpack.c.h.b16 %v2516
      %v2621 = vunpack.c.l.b16 %v2517
      %v2622 = vunpack.c.h.b16 %v2517
      %v2623 = vunpack.c.l.b16 %v2518
      %v2624 = vunpack.c.h.b16 %v2518
      %v2625 = vunpack.c.l.b16 %v2519
      %v2626 = vunpack.c.h.b16 %v2519
      %v2627 = vunpack.c.l.b16 %v2520
      %v2628 = vunpack.c.h.b16 %v2520
      %v2629 = vpack.c.b16 %v2565, %v2557
      %v2630 = vpack.c.b16 %v2566, %v2558
      %v2631 = vpack.c.b16 %v2567, %v2559
      %v2632 = vpack.c.b16 %v2568, %v2560
      %v2633 = vpack.c.b16 %v2569, %v2561
      %v2634 = vpack.c.b16 %v2570, %v2562
      %v2635 = vpack.c.b16 %v2571, %v2563
      %v2636 = vpack.c.b16 %v2572, %v2564
      %v2637 = vpack.c.b16 %v2581, %v2573
      %v2638 = vpack.c.b16 %v2582, %v2574
      %v2639 = vpack.c.b16 %v2583, %v2575
      %v2640 = vpack.c.b16 %v2584, %v2576
      %v2641 = vpack.c.b16 %v2585, %v2577
      %v2642 = vpack.c.b16 %v2586, %v2578
      %v2643 = vpack.c.b16 %v2587, %v2579
      %v2644 = vpack.c.b16 %v2588, %v2580
      %v2645 = vpack.c.b16 %v2597, %v2589
      %v2646 = vpack.c.b16 %v2598, %v2590
      %v2647 = vpack.c.b16 %v2599, %v2591
      %v2648 = vpack.c.b16 %v2600, %v2592
      %v2649 = vpack.c.b16 %v2601, %v2593
      %v2650 = vpack.c.b16 %v2602, %v2594
      %v2651 = vpack.c.b16 %v2603, %v2595
      %v2652 = vpack.c.b16 %v2604, %v2596
      %v2653 = vpack.c.b16 %v2613, %v2605
      %v2654 = vpack.c.b16 %v2614, %v2606
      %v2655 = vpack.c.b16 %v2615, %v2607
      %v2656 = vpack.c.b16 %v2616, %v2608
      %v2657 = vpack.c.b16 %v2617, %v2609
      %v2658 = vpack.c.b16 %v2618, %v2610
      %v2659 = vpack.c.b16 %v2619, %v2611
      %v2660 = vpack.c.b16 %v2620, %v2612
      %v2661 = vpack.c.b16 %v2621, %v2621
      %v2662 = vpack.c.b16 %v2622, %v2622
      %v2663 = vpack.c.b16 %v2623, %v2623
      %v2664 = vpack.c.b16 %v2624, %v2624
      %v2665 = vpack.c.b16 %v2625, %v2625
      %v2666 = vpack.c.b16 %v2626, %v2626
      %v2667 = vpack.c.b16 %v2627, %v2627
      %v2668 = vpack.c.b16 %v2628, %v2628
      %v2702 = vsel %vm1365, %v2484, 0
      %v2705 = vsel %vm1369, %v2661, 0
      %v2708 = vsel %vm1369, %v2662, 0
      %v2711 = vsel %vm1369, %v2663, 0
      %v2714 = vsel %vm1369, %v2664, 0
      %v2717 = vsel %vm1369, %v2665, 0
      %v2720 = vsel %vm1369, %v2666, 0
      %v2723 = vsel %vm1369, %v2667, 0
      %v2726 = vsel %vm1369, %v2668, 0
      %2728 = vmatprep.subr.bf16.mxu0 0
      %2729 = vmatpush1.bf16.msra.mxu0 0
      %2730 = vmatprep.subr.bf16.mxu0 0
      %2731 = vmatpush1.bf16.msra.mxu0 0
      %2732 = vmatprep.subr.bf16.mxu0 0
      %2733 = vmatpush1.bf16.msra.mxu0 0
      %2734 = vmatprep.subr.bf16.mxu0 %v2708
      %2735 = vmatpush1.bf16.msra.mxu0 %v2705
      %2736 = vmatprep.subr.bf16.mxu0 %v2654
      %2737 = vmatpush1.bf16.msra.mxu0 %v2653
      %2738 = vmatprep.subr.bf16.mxu0 %v2646
      %2739 = vmatpush1.bf16.msra.mxu0 %v2645
      %2740 = vmatprep.subr.bf16.mxu0 %v2638
      %2741 = vmatpush1.bf16.msra.mxu0 %v2637
      %2742 = vmatprep.subr.bf16.mxu0 %v2630
      %2743 = vmatpush1.bf16.msra.mxu0 %v2629
      %2744 = vmatprep.subr.bf16.mxu0 0
      %2745 = vmatpush2.bf16.msra.mxu0 0
      %2746 = vmatprep.subr.bf16.mxu0 0
      %2747 = vmatpush2.bf16.msra.mxu0 0
      %2748 = vmatprep.subr.bf16.mxu0 0
      %2749 = vmatpush2.bf16.msra.mxu0 0
      %2750 = vmatprep.subr.bf16.mxu0 0
      %2751 = vmatpush2.bf16.msra.mxu0 0
      %2752 = vmatprep.subr.bf16.mxu0 0
      %2753 = vmatpush2.bf16.msra.mxu0 0
      %2754 = vmatprep.subr.bf16.mxu0 0
      %2755 = vmatpush2.bf16.msra.mxu0 0
      %2756 = vmatprep.subr.bf16.mxu0 0
      %2757 = vmatpush2.bf16.msra.mxu0 0
      %2758 = vmatprep.subr.bf16.mxu0 0
      %2759 = vmatpush2.bf16.msra.mxu0 0
      %2760 = vmatprep.mubr.bf16.mxu0 0
      %2761 = vmatmul.mubr.bf16.gmra.mxu0 %v2702
      %v2762 = vpop.f32.mrf.mxu0
      %v2763 = vadd.f32 0.0, %v2762
      %v2764 = vpop.f32.mrf.mxu0
      %v2765 = vadd.f32 0.0, %v2764
      %v2766 = vpop.f32.mrf.mxu0
      %v2767 = vpop.f32.mrf.mxu0
      %2768 = vdwg.mxu0
      %2769 = vmatprep.subr.bf16.mxu0 0
      %2770 = vmatpush1.bf16.msra.mxu0 0
      %2771 = vmatprep.subr.bf16.mxu0 0
      %2772 = vmatpush1.bf16.msra.mxu0 0
      %2773 = vmatprep.subr.bf16.mxu0 0
      %2774 = vmatpush1.bf16.msra.mxu0 0
      %2775 = vmatprep.subr.bf16.mxu0 %v2714
      %2776 = vmatpush1.bf16.msra.mxu0 %v2711
      %2777 = vmatprep.subr.bf16.mxu0 %v2656
      %2778 = vmatpush1.bf16.msra.mxu0 %v2655
      %2779 = vmatprep.subr.bf16.mxu0 %v2648
      %2780 = vmatpush1.bf16.msra.mxu0 %v2647
      %2781 = vmatprep.subr.bf16.mxu0 %v2640
      %2782 = vmatpush1.bf16.msra.mxu0 %v2639
      %2783 = vmatprep.subr.bf16.mxu0 %v2632
      %2784 = vmatpush1.bf16.msra.mxu0 %v2631
      %2785 = vmatprep.subr.bf16.mxu0 0
      %2786 = vmatpush2.bf16.msra.mxu0 0
      %2787 = vmatprep.subr.bf16.mxu0 0
      %2788 = vmatpush2.bf16.msra.mxu0 0
      %2789 = vmatprep.subr.bf16.mxu0 0
      %2790 = vmatpush2.bf16.msra.mxu0 0
      %2791 = vmatprep.subr.bf16.mxu0 0
      %2792 = vmatpush2.bf16.msra.mxu0 0
      %2793 = vmatprep.subr.bf16.mxu0 0
      %2794 = vmatpush2.bf16.msra.mxu0 0
      %2795 = vmatprep.subr.bf16.mxu0 0
      %2796 = vmatpush2.bf16.msra.mxu0 0
      %2797 = vmatprep.subr.bf16.mxu0 0
      %2798 = vmatpush2.bf16.msra.mxu0 0
      %2799 = vmatprep.subr.bf16.mxu0 0
      %2800 = vmatpush2.bf16.msra.mxu0 0
      %2801 = vmatprep.mubr.bf16.mxu0 0
      %2802 = vmatmul.mubr.bf16.gmra.mxu0 %v2702
      %v2803 = vpop.f32.mrf.mxu0
      %v2804 = vadd.f32 0.0, %v2803
      %v2805 = vpop.f32.mrf.mxu0
      %v2806 = vadd.f32 0.0, %v2805
      %v2807 = vpop.f32.mrf.mxu0
      %v2808 = vpop.f32.mrf.mxu0
      %2809 = vdwg.mxu0
      %2810 = vmatprep.subr.bf16.mxu0 0
      %2811 = vmatpush1.bf16.msra.mxu0 0
      %2812 = vmatprep.subr.bf16.mxu0 0
      %2813 = vmatpush1.bf16.msra.mxu0 0
      %2814 = vmatprep.subr.bf16.mxu0 0
      %2815 = vmatpush1.bf16.msra.mxu0 0
      %2816 = vmatprep.subr.bf16.mxu0 %v2720
      %2817 = vmatpush1.bf16.msra.mxu0 %v2717
      %2818 = vmatprep.subr.bf16.mxu0 %v2658
      %2819 = vmatpush1.bf16.msra.mxu0 %v2657
      %2820 = vmatprep.subr.bf16.mxu0 %v2650
      %2821 = vmatpush1.bf16.msra.mxu0 %v2649
      %2822 = vmatprep.subr.bf16.mxu0 %v2642
      %2823 = vmatpush1.bf16.msra.mxu0 %v2641
      %2824 = vmatprep.subr.bf16.mxu0 %v2634
      %2825 = vmatpush1.bf16.msra.mxu0 %v2633
      %2826 = vmatprep.subr.bf16.mxu0 0
      %2827 = vmatpush2.bf16.msra.mxu0 0
      %2828 = vmatprep.subr.bf16.mxu0 0
      %2829 = vmatpush2.bf16.msra.mxu0 0
      %2830 = vmatprep.subr.bf16.mxu0 0
      %2831 = vmatpush2.bf16.msra.mxu0 0
      %2832 = vmatprep.subr.bf16.mxu0 0
      %2833 = vmatpush2.bf16.msra.mxu0 0
      %2834 = vmatprep.subr.bf16.mxu0 0
      %2835 = vmatpush2.bf16.msra.mxu0 0
      %2836 = vmatprep.subr.bf16.mxu0 0
      %2837 = vmatpush2.bf16.msra.mxu0 0
      %2838 = vmatprep.subr.bf16.mxu0 0
      %2839 = vmatpush2.bf16.msra.mxu0 0
      %2840 = vmatprep.subr.bf16.mxu0 0
      %2841 = vmatpush2.bf16.msra.mxu0 0
      %2842 = vmatprep.mubr.bf16.mxu0 0
      %2843 = vmatmul.mubr.bf16.gmra.mxu0 %v2702
      %v2844 = vpop.f32.mrf.mxu0
      %v2845 = vadd.f32 0.0, %v2844
      %v2846 = vpop.f32.mrf.mxu0
      %v2847 = vadd.f32 0.0, %v2846
      %v2848 = vpop.f32.mrf.mxu0
      %v2849 = vpop.f32.mrf.mxu0
      %2850 = vdwg.mxu0
      %2851 = vmatprep.subr.bf16.mxu0 0
      %2852 = vmatpush1.bf16.msra.mxu0 0
      %2853 = vmatprep.subr.bf16.mxu0 0
      %2854 = vmatpush1.bf16.msra.mxu0 0
      %2855 = vmatprep.subr.bf16.mxu0 0
      %2856 = vmatpush1.bf16.msra.mxu0 0
      %2857 = vmatprep.subr.bf16.mxu0 %v2726
      %2858 = vmatpush1.bf16.msra.mxu0 %v2723
      %2859 = vmatprep.subr.bf16.mxu0 %v2660
      %2860 = vmatpush1.bf16.msra.mxu0 %v2659
      %2861 = vmatprep.subr.bf16.mxu0 %v2652
      %2862 = vmatpush1.bf16.msra.mxu0 %v2651
      %2863 = vmatprep.subr.bf16.mxu0 %v2644
      %2864 = vmatpush1.bf16.msra.mxu0 %v2643
      %2865 = vmatprep.subr.bf16.mxu0 %v2636
      %2866 = vmatpush1.bf16.msra.mxu0 %v2635
      %2867 = vmatprep.subr.bf16.mxu0 0
      %2868 = vmatpush2.bf16.msra.mxu0 0
      %2869 = vmatprep.subr.bf16.mxu0 0
      %2870 = vmatpush2.bf16.msra.mxu0 0
      %2871 = vmatprep.subr.bf16.mxu0 0
      %2872 = vmatpush2.bf16.msra.mxu0 0
      %2873 = vmatprep.subr.bf16.mxu0 0
      %2874 = vmatpush2.bf16.msra.mxu0 0
      %2875 = vmatprep.subr.bf16.mxu0 0
      %2876 = vmatpush2.bf16.msra.mxu0 0
      %2877 = vmatprep.subr.bf16.mxu0 0
      %2878 = vmatpush2.bf16.msra.mxu0 0
      %2879 = vmatprep.subr.bf16.mxu0 0
      %2880 = vmatpush2.bf16.msra.mxu0 0
      %2881 = vmatprep.subr.bf16.mxu0 0
      %2882 = vmatpush2.bf16.msra.mxu0 0
      %2883 = vmatprep.mubr.bf16.mxu0 0
      %2884 = vmatmul.mubr.bf16.gmra.mxu0 %v2702
      %v2885 = vpop.f32.mrf.mxu0
      %v2886 = vadd.f32 0.0, %v2885
      %v2887 = vpop.f32.mrf.mxu0
      %v2888 = vadd.f32 0.0, %v2887
      %v2889 = vpop.f32.mrf.mxu0
      %v2890 = vpop.f32.mrf.mxu0
      %2891 = vdwg.mxu0
      %v2892 = vld [vmem:[%s7] sm:$0xff]
      %v2893 = vld [vmem:[%s8] sm:$0xff]
      %v2894 = vadd.f32 %v2763, %v2765
      %v2895 = vadd.f32 %v2894, %v2804
      %v2896 = vadd.f32 %v2895, %v2806
      %v2897 = vadd.f32 %v2896, %v2845
      %v2898 = vadd.f32 %v2897, %v2847
      %v2899 = vadd.f32 %v2898, %v2886
      %v2900 = vadd.f32 %v2899, %v2888
      %2901 = vadd.xlane.f32.xlu0 %v2900
      %v2902 = vpop.xlane.xlu0 %2901
      %v2903 = vrot.slane %v2902, 4
      %v2904 = vadd.f32 %v2902, %v2903
      %v2905 = vrot.slane %v2904, 2
      %v2906 = vadd.f32 %v2904, %v2905
      %v2907 = vrot.slane %v2906, 1
      %v2908 = vadd.f32 %v2906, %v2907
      %s2909 = vtos %v2908
      %s2910 = smul.f32 %s2909, 0.00012207031
      %v2911 = vmul.f32 %v2763, %v2763
      %v2912 = vmul.f32 %v2765, %v2765
      %v2913 = vmul.f32 %v2804, %v2804
      %v2914 = vmul.f32 %v2806, %v2806
      %v2915 = vmul.f32 %v2845, %v2845
      %v2916 = vmul.f32 %v2847, %v2847
      %v2917 = vmul.f32 %v2886, %v2886
      %v2918 = vmul.f32 %v2888, %v2888
      %v2919 = vadd.f32 %v2911, %v2912
      %v2920 = vadd.f32 %v2919, %v2913
      %v2921 = vadd.f32 %v2920, %v2914
      %v2922 = vadd.f32 %v2921, %v2915
      %v2923 = vadd.f32 %v2922, %v2916
      %v2924 = vadd.f32 %v2923, %v2917
      %v2925 = vadd.f32 %v2924, %v2918
      %2926 = vadd.xlane.f32.xlu0 %v2925
      %v2927 = vpop.xlane.xlu0 %2926
      %v2928 = vrot.slane %v2927, 4
      %v2929 = vadd.f32 %v2927, %v2928
      %v2930 = vrot.slane %v2929, 2
      %v2931 = vadd.f32 %v2929, %v2930
      %v2932 = vrot.slane %v2931, 1
      %v2933 = vadd.f32 %v2931, %v2932
      %s2934 = vtos %v2933
      %s2935 = smul.f32 %s2934, 0.00012207031
      %s2936 = smul.f32 %s2910, %s2910
      %s2937 = ssub.f32 %s2935, %s2936
      %s2938 = smax.f32 %s2937, 0.0
      %s2939 = sadd.f32 %s2938, 1e-05
      %v2940 = vstv %s2939
      %v2941 = vrsqrt.pop %v2940
      %s2942 = vtos %v2941
      %v2943 = vstv %s2942
      %v2944 = vmul.f32 %v2892, %v2943
      %v2945 = vstv %s2910
      %v2946 = vmul.f32 %v2945, %v2944
      %v2947 = vsub.f32 %v2893, %v2946
      %2949 = vset.pattern.permute.xlu0 0
      %2950 = vperm.xlu0 %2949, %v2944
      %v2951 = vpop.permute.xlu0 %2950
      %v2953 = vmul.f32 %v2763, %v2951
      %v2954 = vmul.f32 %v2765, %v2951
      %v2955 = vmul.f32 %v2804, %v2951
      %v2956 = vmul.f32 %v2806, %v2951
      %v2957 = vmul.f32 %v2845, %v2951
      %v2958 = vmul.f32 %v2847, %v2951
      %v2959 = vmul.f32 %v2886, %v2951
      %v2960 = vmul.f32 %v2888, %v2951
      %2962 = vset.pattern.permute.xlu0 0
      %2963 = vperm.xlu0 %2962, %v2947
      %v2964 = vpop.permute.xlu0 %2963
      %v2966 = vadd.f32 %v2953, %v2964
      %v2967 = vadd.f32 %v2954, %v2964
      %v2968 = vadd.f32 %v2955, %v2964
      %v2969 = vadd.f32 %v2956, %v2964
      %v2970 = vadd.f32 %v2957, %v2964
      %v2971 = vadd.f32 %v2958, %v2964
      %v2972 = vadd.f32 %v2959, %v2964
      %v2973 = vadd.f32 %v2960, %v2964
      %v2974 = vadd.f32 %v486, %v2966
      %v2975 = vadd.f32 %v487, %v2967
      %v2976 = vadd.f32 %v488, %v2968
      %v2977 = vadd.f32 %v489, %v2969
      %v2978 = vadd.f32 %v490, %v2970
      %v2979 = vadd.f32 %v491, %v2971
      %v2980 = vadd.f32 %v492, %v2972
      %v2981 = vadd.f32 %v493, %v2973
      %v2982 = vmul.f32 %v2974, 0.70710677
      %v2983 = vmul.f32 %v2975, 0.70710677
      %v2984 = vmul.f32 %v2976, 0.70710677
      %v2985 = vmul.f32 %v2977, 0.70710677
      %v2986 = vmul.f32 %v2978, 0.70710677
      %v2987 = vmul.f32 %v2979, 0.70710677
      %v2988 = vmul.f32 %v2980, 0.70710677
      %v2989 = vmul.f32 %v2981, 0.70710677
      %v2990 = vand.u32 2147483647, %v2982
      %v2991 = vand.u32 2147483647, %v2983
      %v2992 = vand.u32 2147483647, %v2984
      %v2993 = vand.u32 2147483647, %v2985
      %v2994 = vand.u32 2147483647, %v2986
      %v2995 = vand.u32 2147483647, %v2987
      %v2996 = vand.u32 2147483647, %v2988
      %v2997 = vand.u32 2147483647, %v2989
      %v2998 = vmul.f32 %v2990, 0.3275911
      %v2999 = vmul.f32 %v2991, 0.3275911
      %v3000 = vmul.f32 %v2992, 0.3275911
      %v3001 = vmul.f32 %v2993, 0.3275911
      %v3002 = vmul.f32 %v2994, 0.3275911
      %v3003 = vmul.f32 %v2995, 0.3275911
      %v3004 = vmul.f32 %v2996, 0.3275911
      %v3005 = vmul.f32 %v2997, 0.3275911
      %v3006 = vadd.f32 %v2998, 1.0
      %v3007 = vadd.f32 %v2999, 1.0
      %v3008 = vadd.f32 %v3000, 1.0
      %v3009 = vadd.f32 %v3001, 1.0
      %v3010 = vadd.f32 %v3002, 1.0
      %v3011 = vadd.f32 %v3003, 1.0
      %v3012 = vadd.f32 %v3004, 1.0
      %v3013 = vadd.f32 %v3005, 1.0
      %v3014 = vrcp.pop %v3006
      %v3015 = vmul.f32 1.0, %v3014
      %v3016 = vrcp.pop %v3007
      %v3017 = vmul.f32 1.0, %v3016
      %v3018 = vrcp.pop %v3008
      %v3019 = vmul.f32 1.0, %v3018
      %v3020 = vrcp.pop %v3009
      %v3021 = vmul.f32 1.0, %v3020
      %v3022 = vrcp.pop %v3010
      %v3023 = vmul.f32 1.0, %v3022
      %v3024 = vrcp.pop %v3011
      %v3025 = vmul.f32 1.0, %v3024
      %v3026 = vrcp.pop %v3012
      %v3027 = vmul.f32 1.0, %v3026
      %v3028 = vrcp.pop %v3013
      %v3029 = vmul.f32 1.0, %v3028
      %v3030 = vmul.f32 %v3015, 1.0614054
      %v3031 = vmul.f32 %v3017, 1.0614054
      %v3032 = vmul.f32 %v3019, 1.0614054
      %v3033 = vmul.f32 %v3021, 1.0614054
      %v3034 = vmul.f32 %v3023, 1.0614054
      %v3035 = vmul.f32 %v3025, 1.0614054
      %v3036 = vmul.f32 %v3027, 1.0614054
      %v3037 = vmul.f32 %v3029, 1.0614054
      %v3038 = vsub.f32 %v3030, 1.4531521
      %v3039 = vsub.f32 %v3031, 1.4531521
      %v3040 = vsub.f32 %v3032, 1.4531521
      %v3041 = vsub.f32 %v3033, 1.4531521
      %v3042 = vsub.f32 %v3034, 1.4531521
      %v3043 = vsub.f32 %v3035, 1.4531521
      %v3044 = vsub.f32 %v3036, 1.4531521
      %v3045 = vsub.f32 %v3037, 1.4531521
      %v3046 = vmul.f32 %v3038, %v3015
      %v3047 = vmul.f32 %v3039, %v3017
      %v3048 = vmul.f32 %v3040, %v3019
      %v3049 = vmul.f32 %v3041, %v3021
      %v3050 = vmul.f32 %v3042, %v3023
      %v3051 = vmul.f32 %v3043, %v3025
      %v3052 = vmul.f32 %v3044, %v3027
      %v3053 = vmul.f32 %v3045, %v3029
      %v3054 = vadd.f32 %v3046, 1.4214138
      %v3055 = vadd.f32 %v3047, 1.4214138
      %v3056 = vadd.f32 %v3048, 1.4214138
      %v3057 = vadd.f32 %v3049, 1.4214138
      %v3058 = vadd.f32 %v3050, 1.4214138
      %v3059 = vadd.f32 %v3051, 1.4214138
      %v3060 = vadd.f32 %v3052, 1.4214138
      %v3061 = vadd.f32 %v3053, 1.4214138
      %v3062 = vmul.f32 %v3054, %v3015
      %v3063 = vmul.f32 %v3055, %v3017
      %v3064 = vmul.f32 %v3056, %v3019
      %v3065 = vmul.f32 %v3057, %v3021
      %v3066 = vmul.f32 %v3058, %v3023
      %v3067 = vmul.f32 %v3059, %v3025
      %v3068 = vmul.f32 %v3060, %v3027
      %v3069 = vmul.f32 %v3061, %v3029
      %v3070 = vsub.f32 %v3062, 0.28449672
      %v3071 = vsub.f32 %v3063, 0.28449672
      %v3072 = vsub.f32 %v3064, 0.28449672
      %v3073 = vsub.f32 %v3065, 0.28449672
      %v3074 = vsub.f32 %v3066, 0.28449672
      %v3075 = vsub.f32 %v3067, 0.28449672
      %v3076 = vsub.f32 %v3068, 0.28449672
      %v3077 = vsub.f32 %v3069, 0.28449672
      %v3078 = vmul.f32 %v3070, %v3015
      %v3079 = vmul.f32 %v3071, %v3017
      %v3080 = vmul.f32 %v3072, %v3019
      %v3081 = vmul.f32 %v3073, %v3021
      %v3082 = vmul.f32 %v3074, %v3023
      %v3083 = vmul.f32 %v3075, %v3025
      %v3084 = vmul.f32 %v3076, %v3027
      %v3085 = vmul.f32 %v3077, %v3029
      %v3086 = vadd.f32 %v3078, 0.2548296
      %v3087 = vadd.f32 %v3079, 0.2548296
      %v3088 = vadd.f32 %v3080, 0.2548296
      %v3089 = vadd.f32 %v3081, 0.2548296
      %v3090 = vadd.f32 %v3082, 0.2548296
      %v3091 = vadd.f32 %v3083, 0.2548296
      %v3092 = vadd.f32 %v3084, 0.2548296
      %v3093 = vadd.f32 %v3085, 0.2548296
      %v3094 = vmul.f32 %v3086, %v3015
      %v3095 = vmul.f32 %v3087, %v3017
      %v3096 = vmul.f32 %v3088, %v3019
      %v3097 = vmul.f32 %v3089, %v3021
      %v3098 = vmul.f32 %v3090, %v3023
      %v3099 = vmul.f32 %v3091, %v3025
      %v3100 = vmul.f32 %v3092, %v3027
      %v3101 = vmul.f32 %v3093, %v3029
      %v3102 = vmul.f32 %v3094, 0.5
      %v3103 = vmul.f32 %v3095, 0.5
      %v3104 = vmul.f32 %v3096, 0.5
      %v3105 = vmul.f32 %v3097, 0.5
      %v3106 = vmul.f32 %v3098, 0.5
      %v3107 = vmul.f32 %v3099, 0.5
      %v3108 = vmul.f32 %v3100, 0.5
      %v3109 = vmul.f32 %v3101, 0.5
      %v3110 = vsub.f32 0.0, %v2990
      %v3111 = vsub.f32 0.0, %v2991
      %v3112 = vsub.f32 0.0, %v2992
      %v3113 = vsub.f32 0.0, %v2993
      %v3114 = vsub.f32 0.0, %v2994
      %v3115 = vsub.f32 0.0, %v2995
      %v3116 = vsub.f32 0.0, %v2996
      %v3117 = vsub.f32 0.0, %v2997
      %v3118 = vmul.f32 %v3110, %v2990
      %v3119 = vmul.f32 %v3111, %v2991
      %v3120 = vmul.f32 %v3112, %v2992
      %v3121 = vmul.f32 %v3113, %v2993
      %v3122 = vmul.f32 %v3114, %v2994
      %v3123 = vmul.f32 %v3115, %v2995
      %v3124 = vmul.f32 %v3116, %v2996
      %v3125 = vmul.f32 %v3117, %v2997
      %v3126 = vmul.f32 %v3118, 1.442695
      %v3127 = vpow.pop %v3126
      %v3128 = vmul.f32 %v3119, 1.442695
      %v3129 = vpow.pop %v3128
      %v3130 = vmul.f32 %v3120, 1.442695
      %v3131 = vpow.pop %v3130
      %v3132 = vmul.f32 %v3121, 1.442695
      %v3133 = vpow.pop %v3132
      %v3134 = vmul.f32 %v3122, 1.442695
      %v3135 = vpow.pop %v3134
      %v3136 = vmul.f32 %v3123, 1.442695
      %v3137 = vpow.pop %v3136
      %v3138 = vmul.f32 %v3124, 1.442695
      %v3139 = vpow.pop %v3138
      %v3140 = vmul.f32 %v3125, 1.442695
      %v3141 = vpow.pop %v3140
      %v3142 = vmul.f32 %v3102, %v3127
      %v3143 = vmul.f32 %v3103, %v3129
      %v3144 = vmul.f32 %v3104, %v3131
      %v3145 = vmul.f32 %v3105, %v3133
      %v3146 = vmul.f32 %v3106, %v3135
      %v3147 = vmul.f32 %v3107, %v3137
      %v3148 = vmul.f32 %v3108, %v3139
      %v3149 = vmul.f32 %v3109, %v3141
      %vm3150 = vcmp.ge.f32.partialorder %v2982, 0.0
      %vm3151 = vcmp.ge.f32.partialorder %v2983, 0.0
      %vm3152 = vcmp.ge.f32.partialorder %v2984, 0.0
      %vm3153 = vcmp.ge.f32.partialorder %v2985, 0.0
      %vm3154 = vcmp.ge.f32.partialorder %v2986, 0.0
      %vm3155 = vcmp.ge.f32.partialorder %v2987, 0.0
      %vm3156 = vcmp.ge.f32.partialorder %v2988, 0.0
      %vm3157 = vcmp.ge.f32.partialorder %v2989, 0.0
      %v3158 = vsub.f32 1.0, %v3142
      %v3159 = vsub.f32 1.0, %v3143
      %v3160 = vsub.f32 1.0, %v3144
      %v3161 = vsub.f32 1.0, %v3145
      %v3162 = vsub.f32 1.0, %v3146
      %v3163 = vsub.f32 1.0, %v3147
      %v3164 = vsub.f32 1.0, %v3148
      %v3165 = vsub.f32 1.0, %v3149
      %v3166 = vsel %vm3150, %v3158, %v3142
      %v3167 = vsel %vm3151, %v3159, %v3143
      %v3168 = vsel %vm3152, %v3160, %v3144
      %v3169 = vsel %vm3153, %v3161, %v3145
      %v3170 = vsel %vm3154, %v3162, %v3146
      %v3171 = vsel %vm3155, %v3163, %v3147
      %v3172 = vsel %vm3156, %v3164, %v3148
      %v3173 = vsel %vm3157, %v3165, %v3149
      %v3174 = vmul.f32 %v2974, %v3166
      %v3175 = vmul.f32 %v2975, %v3167
      %v3176 = vmul.f32 %v2976, %v3168
      %v3177 = vmul.f32 %v2977, %v3169
      %v3178 = vmul.f32 %v2978, %v3170
      %v3179 = vmul.f32 %v2979, %v3171
      %v3180 = vmul.f32 %v2980, %v3172
      %v3181 = vmul.f32 %v2981, %v3173
      %3182 = vrot.lane.b32.xlu0 %v3174, 33
      %v3183 = vpop.permute.xlu0 %3182
      %3184 = vrot.lane.b32.xlu0 %v3175, 33
      %v3185 = vpop.permute.xlu0 %3184
      %3186 = vrot.lane.b32.xlu0 %v3176, 33
      %v3187 = vpop.permute.xlu0 %3186
      %3188 = vrot.lane.b32.xlu0 %v3177, 33
      %v3189 = vpop.permute.xlu0 %3188
      %3190 = vrot.lane.b32.xlu0 %v3178, 33
      %v3191 = vpop.permute.xlu0 %3190
      %3192 = vrot.lane.b32.xlu0 %v3179, 33
      %v3193 = vpop.permute.xlu0 %3192
      %3194 = vrot.lane.b32.xlu0 %v3180, 33
      %v3195 = vpop.permute.xlu0 %3194
      %3196 = vrot.lane.b32.xlu0 %v3181, 33
      %v3197 = vpop.permute.xlu0 %3196
      %v3198 = vsel %vm512, %v3195, %v3197
      %v3199 = vsel %vm512, %v3193, %v3195
      %v3200 = vsel %vm512, %v3191, %v3193
      %v3201 = vsel %vm512, %v3189, %v3191
      %v3202 = vsel %vm512, %v3187, %v3189
      %v3203 = vsel %vm512, %v3185, %v3187
      %v3204 = vsel %vm512, %v3183, %v3185
      %v3205 = vsel %vm512, %v3197, %v3183
      %v3206 = vld [vmem:[%s2] sm:$0xff]
      %v3207 = vld [vmem:[%s2 + $0x8] sm:$0xff]
      %v3208 = vld [vmem:[%s2 + $0x10] sm:$0xff]
      %v3209 = vld [vmem:[%s2 + $0x18] sm:$0xff]
      %v3210 = vld [vmem:[%s2 + $0x20] sm:$0xff]
      %v3211 = vld [vmem:[%s2 + $0x28] sm:$0xff]
      %v3212 = vld [vmem:[%s2 + $0x30] sm:$0xff]
      %v3213 = vld [vmem:[%s2 + $0x38] sm:$0xff]
      %v3214 = vmul.f32 %v3205, %v3206
      %v3215 = vmul.f32 %v3204, %v3207
      %v3216 = vmul.f32 %v3203, %v3208
      %v3217 = vmul.f32 %v3202, %v3209
      %v3218 = vmul.f32 %v3201, %v3210
      %v3219 = vmul.f32 %v3200, %v3211
      %v3220 = vmul.f32 %v3199, %v3212
      %v3221 = vmul.f32 %v3198, %v3213
      %v3222 = vpack.c.bf16 %v3214, %v3214
      %v3223 = vpack.c.bf16 %v3215, %v3215
      %v3224 = vpack.c.bf16 %v3216, %v3216
      %v3225 = vpack.c.bf16 %v3217, %v3217
      %v3226 = vpack.c.bf16 %v3218, %v3218
      %v3227 = vpack.c.bf16 %v3219, %v3219
      %v3228 = vpack.c.bf16 %v3220, %v3220
      %v3229 = vpack.c.bf16 %v3221, %v3221
      %v3238 = vunpack.c.l.b16 %v3222
      %v3239 = vunpack.c.l.b16 %v3223
      %v3240 = vunpack.c.l.b16 %v3224
      %v3241 = vunpack.c.l.b16 %v3225
      %v3242 = vunpack.c.l.b16 %v3226
      %v3243 = vunpack.c.l.b16 %v3227
      %v3244 = vunpack.c.l.b16 %v3228
      %v3245 = vunpack.c.l.b16 %v3229
      %v3246 = vpack.c.b16 %v3239, %v3238
      %v3247 = vpack.c.b16 %v3241, %v3240
      %v3248 = vpack.c.b16 %v3243, %v3242
      %v3249 = vpack.c.b16 %v3245, %v3244
      %3254 = vst [vmem:[#allocation2] sm:$0xff] %v3246
      %3255 = vst [vmem:[#allocation2 + $0x8] sm:$0xff] %v3247
      %3256 = vst [vmem:[#allocation2 + $0x10] sm:$0xff] %v3248
      %3257 = vst [vmem:[#allocation2 + $0x18] sm:$0xff] %v3249
      %3258 = vrot.lane.b32.xlu0 %v3174, 32
      %v3259 = vpop.permute.xlu0 %3258
      %3260 = vrot.lane.b32.xlu0 %v3175, 32
      %v3261 = vpop.permute.xlu0 %3260
      %3262 = vrot.lane.b32.xlu0 %v3176, 32
      %v3263 = vpop.permute.xlu0 %3262
      %3264 = vrot.lane.b32.xlu0 %v3177, 32
      %v3265 = vpop.permute.xlu0 %3264
      %3266 = vrot.lane.b32.xlu0 %v3178, 32
      %v3267 = vpop.permute.xlu0 %3266
      %3268 = vrot.lane.b32.xlu0 %v3179, 32
      %v3269 = vpop.permute.xlu0 %3268
      %3270 = vrot.lane.b32.xlu0 %v3180, 32
      %v3271 = vpop.permute.xlu0 %3270
      %3272 = vrot.lane.b32.xlu0 %v3181, 32
      %v3273 = vpop.permute.xlu0 %3272
      %v3274 = vsel %vm589, %v3271, %v3273
      %v3275 = vsel %vm589, %v3269, %v3271
      %v3276 = vsel %vm589, %v3267, %v3269
      %v3277 = vsel %vm589, %v3265, %v3267
      %v3278 = vsel %vm589, %v3263, %v3265
      %v3279 = vsel %vm589, %v3261, %v3263
      %v3280 = vsel %vm589, %v3259, %v3261
      %v3281 = vsel %vm589, %v3273, %v3259
      %v3282 = vld [vmem:[%s2 + $0x40] sm:$0xff]
      %v3283 = vld [vmem:[%s2 + $0x48] sm:$0xff]
      %v3284 = vld [vmem:[%s2 + $0x50] sm:$0xff]
      %v3285 = vld [vmem:[%s2 + $0x58] sm:$0xff]
      %v3286 = vld [vmem:[%s2 + $0x60] sm:$0xff]
      %v3287 = vld [vmem:[%s2 + $0x68] sm:$0xff]
      %v3288 = vld [vmem:[%s2 + $0x70] sm:$0xff]
      %v3289 = vld [vmem:[%s2 + $0x78] sm:$0xff]
      %v3290 = vmul.f32 %v3281, %v3282
      %v3291 = vmul.f32 %v3280, %v3283
      %v3292 = vmul.f32 %v3279, %v3284
      %v3293 = vmul.f32 %v3278, %v3285
      %v3294 = vmul.f32 %v3277, %v3286
      %v3295 = vmul.f32 %v3276, %v3287
      %v3296 = vmul.f32 %v3275, %v3288
      %v3297 = vmul.f32 %v3274, %v3289
      %v3298 = vpack.c.bf16 %v3290, %v3290
      %v3299 = vpack.c.bf16 %v3291, %v3291
      %v3300 = vpack.c.bf16 %v3292, %v3292
      %v3301 = vpack.c.bf16 %v3293, %v3293
      %v3302 = vpack.c.bf16 %v3294, %v3294
      %v3303 = vpack.c.bf16 %v3295, %v3295
      %v3304 = vpack.c.bf16 %v3296, %v3296
      %v3305 = vpack.c.bf16 %v3297, %v3297
      %v3314 = vunpack.c.l.b16 %v3298
      %v3315 = vunpack.c.l.b16 %v3299
      %v3316 = vunpack.c.l.b16 %v3300
      %v3317 = vunpack.c.l.b16 %v3301
      %v3318 = vunpack.c.l.b16 %v3302
      %v3319 = vunpack.c.l.b16 %v3303
      %v3320 = vunpack.c.l.b16 %v3304
      %v3321 = vunpack.c.l.b16 %v3305
      %v3322 = vpack.c.b16 %v3315, %v3314
      %v3323 = vpack.c.b16 %v3317, %v3316
      %v3324 = vpack.c.b16 %v3319, %v3318
      %v3325 = vpack.c.b16 %v3321, %v3320
      %3330 = vst [vmem:[#allocation2 + $0x20] sm:$0xff] %v3322
      %3331 = vst [vmem:[#allocation2 + $0x28] sm:$0xff] %v3323
      %3332 = vst [vmem:[#allocation2 + $0x30] sm:$0xff] %v3324
      %3333 = vst [vmem:[#allocation2 + $0x38] sm:$0xff] %v3325
      %3334 = vrot.lane.b32.xlu0 %v3174, 31
      %v3335 = vpop.permute.xlu0 %3334
      %3336 = vrot.lane.b32.xlu0 %v3175, 31
      %v3337 = vpop.permute.xlu0 %3336
      %3338 = vrot.lane.b32.xlu0 %v3176, 31
      %v3339 = vpop.permute.xlu0 %3338
      %3340 = vrot.lane.b32.xlu0 %v3177, 31
      %v3341 = vpop.permute.xlu0 %3340
      %3342 = vrot.lane.b32.xlu0 %v3178, 31
      %v3343 = vpop.permute.xlu0 %3342
      %3344 = vrot.lane.b32.xlu0 %v3179, 31
      %v3345 = vpop.permute.xlu0 %3344
      %3346 = vrot.lane.b32.xlu0 %v3180, 31
      %v3347 = vpop.permute.xlu0 %3346
      %3348 = vrot.lane.b32.xlu0 %v3181, 31
      %v3349 = vpop.permute.xlu0 %3348
      %v3350 = vsel %vm666, %v3347, %v3349
      %v3351 = vsel %vm666, %v3345, %v3347
      %v3352 = vsel %vm666, %v3343, %v3345
      %v3353 = vsel %vm666, %v3341, %v3343
      %v3354 = vsel %vm666, %v3339, %v3341
      %v3355 = vsel %vm666, %v3337, %v3339
      %v3356 = vsel %vm666, %v3335, %v3337
      %v3357 = vsel %vm666, %v3349, %v3335
      %v3358 = vld [vmem:[%s2 + $0x80] sm:$0xff]
      %v3359 = vld [vmem:[%s2 + $0x88] sm:$0xff]
      %v3360 = vld [vmem:[%s2 + $0x90] sm:$0xff]
      %v3361 = vld [vmem:[%s2 + $0x98] sm:$0xff]
      %v3362 = vld [vmem:[%s2 + $0xa0] sm:$0xff]
      %v3363 = vld [vmem:[%s2 + $0xa8] sm:$0xff]
      %v3364 = vld [vmem:[%s2 + $0xb0] sm:$0xff]
      %v3365 = vld [vmem:[%s2 + $0xb8] sm:$0xff]
      %v3366 = vmul.f32 %v3357, %v3358
      %v3367 = vmul.f32 %v3356, %v3359
      %v3368 = vmul.f32 %v3355, %v3360
      %v3369 = vmul.f32 %v3354, %v3361
      %v3370 = vmul.f32 %v3353, %v3362
      %v3371 = vmul.f32 %v3352, %v3363
      %v3372 = vmul.f32 %v3351, %v3364
      %v3373 = vmul.f32 %v3350, %v3365
      %v3374 = vpack.c.bf16 %v3366, %v3366
      %v3375 = vpack.c.bf16 %v3367, %v3367
      %v3376 = vpack.c.bf16 %v3368, %v3368
      %v3377 = vpack.c.bf16 %v3369, %v3369
      %v3378 = vpack.c.bf16 %v3370, %v3370
      %v3379 = vpack.c.bf16 %v3371, %v3371
      %v3380 = vpack.c.bf16 %v3372, %v3372
      %v3381 = vpack.c.bf16 %v3373, %v3373
      %v3390 = vunpack.c.l.b16 %v3374
      %v3391 = vunpack.c.l.b16 %v3375
      %v3392 = vunpack.c.l.b16 %v3376
      %v3393 = vunpack.c.l.b16 %v3377
      %v3394 = vunpack.c.l.b16 %v3378
      %v3395 = vunpack.c.l.b16 %v3379
      %v3396 = vunpack.c.l.b16 %v3380
      %v3397 = vunpack.c.l.b16 %v3381
      %v3398 = vpack.c.b16 %v3391, %v3390
      %v3399 = vpack.c.b16 %v3393, %v3392
      %v3400 = vpack.c.b16 %v3395, %v3394
      %v3401 = vpack.c.b16 %v3397, %v3396
      %3406 = vst [vmem:[#allocation2 + $0x40] sm:$0xff] %v3398
      %3407 = vst [vmem:[#allocation2 + $0x48] sm:$0xff] %v3399
      %3408 = vst [vmem:[#allocation2 + $0x50] sm:$0xff] %v3400
      %3409 = vst [vmem:[#allocation2 + $0x58] sm:$0xff] %v3401
      %3410 = vrot.lane.b32.xlu0 %v3174, 1
      %v3411 = vpop.permute.xlu0 %3410
      %3412 = vrot.lane.b32.xlu0 %v3175, 1
      %v3413 = vpop.permute.xlu0 %3412
      %3414 = vrot.lane.b32.xlu0 %v3176, 1
      %v3415 = vpop.permute.xlu0 %3414
      %3416 = vrot.lane.b32.xlu0 %v3177, 1
      %v3417 = vpop.permute.xlu0 %3416
      %3418 = vrot.lane.b32.xlu0 %v3178, 1
      %v3419 = vpop.permute.xlu0 %3418
      %3420 = vrot.lane.b32.xlu0 %v3179, 1
      %v3421 = vpop.permute.xlu0 %3420
      %3422 = vrot.lane.b32.xlu0 %v3180, 1
      %v3423 = vpop.permute.xlu0 %3422
      %3424 = vrot.lane.b32.xlu0 %v3181, 1
      %v3425 = vpop.permute.xlu0 %3424
      %v3426 = vsel %vm743, %v3423, %v3425
      %v3427 = vsel %vm743, %v3421, %v3423
      %v3428 = vsel %vm743, %v3419, %v3421
      %v3429 = vsel %vm743, %v3417, %v3419
      %v3430 = vsel %vm743, %v3415, %v3417
      %v3431 = vsel %vm743, %v3413, %v3415
      %v3432 = vsel %vm743, %v3411, %v3413
      %v3433 = vsel %vm743, %v3425, %v3411
      %v3434 = vld [vmem:[%s2 + $0xc0] sm:$0xff]
      %v3435 = vld [vmem:[%s2 + $0xc8] sm:$0xff]
      %v3436 = vld [vmem:[%s2 + $0xd0] sm:$0xff]
      %v3437 = vld [vmem:[%s2 + $0xd8] sm:$0xff]
      %v3438 = vld [vmem:[%s2 + $0xe0] sm:$0xff]
      %v3439 = vld [vmem:[%s2 + $0xe8] sm:$0xff]
      %v3440 = vld [vmem:[%s2 + $0xf0] sm:$0xff]
      %v3441 = vld [vmem:[%s2 + $0xf8] sm:$0xff]
      %v3442 = vmul.f32 %v3433, %v3434
      %v3443 = vmul.f32 %v3432, %v3435
      %v3444 = vmul.f32 %v3431, %v3436
      %v3445 = vmul.f32 %v3430, %v3437
      %v3446 = vmul.f32 %v3429, %v3438
      %v3447 = vmul.f32 %v3428, %v3439
      %v3448 = vmul.f32 %v3427, %v3440
      %v3449 = vmul.f32 %v3426, %v3441
      %v3450 = vpack.c.bf16 %v3442, %v3442
      %v3451 = vpack.c.bf16 %v3443, %v3443
      %v3452 = vpack.c.bf16 %v3444, %v3444
      %v3453 = vpack.c.bf16 %v3445, %v3445
      %v3454 = vpack.c.bf16 %v3446, %v3446
      %v3455 = vpack.c.bf16 %v3447, %v3447
      %v3456 = vpack.c.bf16 %v3448, %v3448
      %v3457 = vpack.c.bf16 %v3449, %v3449
      %v3466 = vunpack.c.l.b16 %v3450
      %v3467 = vunpack.c.l.b16 %v3451
      %v3468 = vunpack.c.l.b16 %v3452
      %v3469 = vunpack.c.l.b16 %v3453
      %v3470 = vunpack.c.l.b16 %v3454
      %v3471 = vunpack.c.l.b16 %v3455
      %v3472 = vunpack.c.l.b16 %v3456
      %v3473 = vunpack.c.l.b16 %v3457
      %v3474 = vpack.c.b16 %v3467, %v3466
      %v3475 = vpack.c.b16 %v3469, %v3468
      %v3476 = vpack.c.b16 %v3471, %v3470
      %v3477 = vpack.c.b16 %v3473, %v3472
      %3482 = vst [vmem:[#allocation2 + $0x60] sm:$0xff] %v3474
      %3483 = vst [vmem:[#allocation2 + $0x68] sm:$0xff] %v3475
      %3484 = vst [vmem:[#allocation2 + $0x70] sm:$0xff] %v3476
      %3485 = vst [vmem:[#allocation2 + $0x78] sm:$0xff] %v3477
      %v3486 = vpack.c.bf16 %v3174, %v3174
      %v3487 = vpack.c.bf16 %v3175, %v3175
      %v3488 = vpack.c.bf16 %v3176, %v3176
      %v3489 = vpack.c.bf16 %v3177, %v3177
      %v3490 = vpack.c.bf16 %v3178, %v3178
      %v3491 = vpack.c.bf16 %v3179, %v3179
      %v3492 = vpack.c.bf16 %v3180, %v3180
      %v3493 = vpack.c.bf16 %v3181, %v3181
      %v3502 = vunpack.c.l.b16 %v3486
      %v3503 = vunpack.c.l.b16 %v3487
      %v3504 = vunpack.c.l.b16 %v3488
      %v3505 = vunpack.c.l.b16 %v3489
      %v3506 = vunpack.c.l.b16 %v3490
      %v3507 = vunpack.c.l.b16 %v3491
      %v3508 = vunpack.c.l.b16 %v3492
      %v3509 = vunpack.c.l.b16 %v3493
      %v3510 = vpack.c.b16 %v3503, %v3502
      %v3511 = vpack.c.b16 %v3505, %v3504
      %v3512 = vpack.c.b16 %v3507, %v3506
      %v3513 = vpack.c.b16 %v3509, %v3508
      %3518 = vst [vmem:[#allocation2 + $0x80] sm:$0xff] %v3510
      %3519 = vst [vmem:[#allocation2 + $0x88] sm:$0xff] %v3511
      %3520 = vst [vmem:[#allocation2 + $0x90] sm:$0xff] %v3512
      %3521 = vst [vmem:[#allocation2 + $0x98] sm:$0xff] %v3513
      %3522 = vrot.lane.b32.xlu0 %v3174, 127
      %v3523 = vpop.permute.xlu0 %3522
      %3524 = vrot.lane.b32.xlu0 %v3175, 127
      %v3525 = vpop.permute.xlu0 %3524
      %3526 = vrot.lane.b32.xlu0 %v3176, 127
      %v3527 = vpop.permute.xlu0 %3526
      %3528 = vrot.lane.b32.xlu0 %v3177, 127
      %v3529 = vpop.permute.xlu0 %3528
      %3530 = vrot.lane.b32.xlu0 %v3178, 127
      %v3531 = vpop.permute.xlu0 %3530
      %3532 = vrot.lane.b32.xlu0 %v3179, 127
      %v3533 = vpop.permute.xlu0 %3532
      %3534 = vrot.lane.b32.xlu0 %v3180, 127
      %v3535 = vpop.permute.xlu0 %3534
      %3536 = vrot.lane.b32.xlu0 %v3181, 127
      %v3537 = vpop.permute.xlu0 %3536
      %v3538 = vsel %vm856, %v3535, %v3537
      %v3539 = vsel %vm856, %v3533, %v3535
      %v3540 = vsel %vm856, %v3531, %v3533
      %v3541 = vsel %vm856, %v3529, %v3531
      %v3542 = vsel %vm856, %v3527, %v3529
      %v3543 = vsel %vm856, %v3525, %v3527
      %v3544 = vsel %vm856, %v3523, %v3525
      %v3545 = vsel %vm856, %v3537, %v3523
      %v3546 = vld [vmem:[%s2 + $0x140] sm:$0xff]
      %v3547 = vld [vmem:[%s2 + $0x148] sm:$0xff]
      %v3548 = vld [vmem:[%s2 + $0x150] sm:$0xff]
      %v3549 = vld [vmem:[%s2 + $0x158] sm:$0xff]
      %v3550 = vld [vmem:[%s2 + $0x160] sm:$0xff]
      %v3551 = vld [vmem:[%s2 + $0x168] sm:$0xff]
      %v3552 = vld [vmem:[%s2 + $0x170] sm:$0xff]
      %v3553 = vld [vmem:[%s2 + $0x178] sm:$0xff]
      %v3554 = vmul.f32 %v3544, %v3546
      %v3555 = vmul.f32 %v3543, %v3547
      %v3556 = vmul.f32 %v3542, %v3548
      %v3557 = vmul.f32 %v3541, %v3549
      %v3558 = vmul.f32 %v3540, %v3550
      %v3559 = vmul.f32 %v3539, %v3551
      %v3560 = vmul.f32 %v3538, %v3552
      %v3561 = vmul.f32 %v3545, %v3553
      %v3562 = vpack.c.bf16 %v3554, %v3554
      %v3563 = vpack.c.bf16 %v3555, %v3555
      %v3564 = vpack.c.bf16 %v3556, %v3556
      %v3565 = vpack.c.bf16 %v3557, %v3557
      %v3566 = vpack.c.bf16 %v3558, %v3558
      %v3567 = vpack.c.bf16 %v3559, %v3559
      %v3568 = vpack.c.bf16 %v3560, %v3560
      %v3569 = vpack.c.bf16 %v3561, %v3561
      %v3578 = vunpack.c.l.b16 %v3562
      %v3579 = vunpack.c.l.b16 %v3563
      %v3580 = vunpack.c.l.b16 %v3564
      %v3581 = vunpack.c.l.b16 %v3565
      %v3582 = vunpack.c.l.b16 %v3566
      %v3583 = vunpack.c.l.b16 %v3567
      %v3584 = vunpack.c.l.b16 %v3568
      %v3585 = vunpack.c.l.b16 %v3569
      %v3586 = vpack.c.b16 %v3579, %v3578
      %v3587 = vpack.c.b16 %v3581, %v3580
      %v3588 = vpack.c.b16 %v3583, %v3582
      %v3589 = vpack.c.b16 %v3585, %v3584
      %3594 = vst [vmem:[#allocation2 + $0xa0] sm:$0xff] %v3586
      %3595 = vst [vmem:[#allocation2 + $0xa8] sm:$0xff] %v3587
      %3596 = vst [vmem:[#allocation2 + $0xb0] sm:$0xff] %v3588
      %3597 = vst [vmem:[#allocation2 + $0xb8] sm:$0xff] %v3589
      %3598 = vrot.lane.b32.xlu0 %v3174, 97
      %v3599 = vpop.permute.xlu0 %3598
      %3600 = vrot.lane.b32.xlu0 %v3175, 97
      %v3601 = vpop.permute.xlu0 %3600
      %3602 = vrot.lane.b32.xlu0 %v3176, 97
      %v3603 = vpop.permute.xlu0 %3602
      %3604 = vrot.lane.b32.xlu0 %v3177, 97
      %v3605 = vpop.permute.xlu0 %3604
      %3606 = vrot.lane.b32.xlu0 %v3178, 97
      %v3607 = vpop.permute.xlu0 %3606
      %3608 = vrot.lane.b32.xlu0 %v3179, 97
      %v3609 = vpop.permute.xlu0 %3608
      %3610 = vrot.lane.b32.xlu0 %v3180, 97
      %v3611 = vpop.permute.xlu0 %3610
      %3612 = vrot.lane.b32.xlu0 %v3181, 97
      %v3613 = vpop.permute.xlu0 %3612
      %v3614 = vsel %vm933, %v3611, %v3613
      %v3615 = vsel %vm933, %v3609, %v3611
      %v3616 = vsel %vm933, %v3607, %v3609
      %v3617 = vsel %vm933, %v3605, %v3607
      %v3618 = vsel %vm933, %v3603, %v3605
      %v3619 = vsel %vm933, %v3601, %v3603
      %v3620 = vsel %vm933, %v3599, %v3601
      %v3621 = vsel %vm933, %v3613, %v3599
      %v3622 = vld [vmem:[%s2 + $0x180] sm:$0xff]
      %v3623 = vld [vmem:[%s2 + $0x188] sm:$0xff]
      %v3624 = vld [vmem:[%s2 + $0x190] sm:$0xff]
      %v3625 = vld [vmem:[%s2 + $0x198] sm:$0xff]
      %v3626 = vld [vmem:[%s2 + $0x1a0] sm:$0xff]
      %v3627 = vld [vmem:[%s2 + $0x1a8] sm:$0xff]
      %v3628 = vld [vmem:[%s2 + $0x1b0] sm:$0xff]
      %v3629 = vld [vmem:[%s2 + $0x1b8] sm:$0xff]
      %v3630 = vmul.f32 %v3620, %v3622
      %v3631 = vmul.f32 %v3619, %v3623
      %v3632 = vmul.f32 %v3618, %v3624
      %v3633 = vmul.f32 %v3617, %v3625
      %v3634 = vmul.f32 %v3616, %v3626
      %v3635 = vmul.f32 %v3615, %v3627
      %v3636 = vmul.f32 %v3614, %v3628
      %v3637 = vmul.f32 %v3621, %v3629
      %v3638 = vpack.c.bf16 %v3630, %v3630
      %v3639 = vpack.c.bf16 %v3631, %v3631
      %v3640 = vpack.c.bf16 %v3632, %v3632
      %v3641 = vpack.c.bf16 %v3633, %v3633
      %v3642 = vpack.c.bf16 %v3634, %v3634
      %v3643 = vpack.c.bf16 %v3635, %v3635
      %v3644 = vpack.c.bf16 %v3636, %v3636
      %v3645 = vpack.c.bf16 %v3637, %v3637
      %v3654 = vunpack.c.l.b16 %v3638
      %v3655 = vunpack.c.l.b16 %v3639
      %v3656 = vunpack.c.l.b16 %v3640
      %v3657 = vunpack.c.l.b16 %v3641
      %v3658 = vunpack.c.l.b16 %v3642
      %v3659 = vunpack.c.l.b16 %v3643
      %v3660 = vunpack.c.l.b16 %v3644
      %v3661 = vunpack.c.l.b16 %v3645
      %v3662 = vpack.c.b16 %v3655, %v3654
      %v3663 = vpack.c.b16 %v3657, %v3656
      %v3664 = vpack.c.b16 %v3659, %v3658
      %v3665 = vpack.c.b16 %v3661, %v3660
      %3670 = vst [vmem:[#allocation2 + $0xc0] sm:$0xff] %v3662
      %3671 = vst [vmem:[#allocation2 + $0xc8] sm:$0xff] %v3663
      %3672 = vst [vmem:[#allocation2 + $0xd0] sm:$0xff] %v3664
      %3673 = vst [vmem:[#allocation2 + $0xd8] sm:$0xff] %v3665
      %3674 = vrot.lane.b32.xlu0 %v3174, 96
      %v3675 = vpop.permute.xlu0 %3674
      %3676 = vrot.lane.b32.xlu0 %v3175, 96
      %v3677 = vpop.permute.xlu0 %3676
      %3678 = vrot.lane.b32.xlu0 %v3176, 96
      %v3679 = vpop.permute.xlu0 %3678
      %3680 = vrot.lane.b32.xlu0 %v3177, 96
      %v3681 = vpop.permute.xlu0 %3680
      %3682 = vrot.lane.b32.xlu0 %v3178, 96
      %v3683 = vpop.permute.xlu0 %3682
      %3684 = vrot.lane.b32.xlu0 %v3179, 96
      %v3685 = vpop.permute.xlu0 %3684
      %3686 = vrot.lane.b32.xlu0 %v3180, 96
      %v3687 = vpop.permute.xlu0 %3686
      %3688 = vrot.lane.b32.xlu0 %v3181, 96
      %v3689 = vpop.permute.xlu0 %3688
      %v3690 = vsel %vm1010, %v3687, %v3689
      %v3691 = vsel %vm1010, %v3685, %v3687
      %v3692 = vsel %vm1010, %v3683, %v3685
      %v3693 = vsel %vm1010, %v3681, %v3683
      %v3694 = vsel %vm1010, %v3679, %v3681
      %v3695 = vsel %vm1010, %v3677, %v3679
      %v3696 = vsel %vm1010, %v3675, %v3677
      %v3697 = vsel %vm1010, %v3689, %v3675
      %v3698 = vld [vmem:[%s2 + $0x1c0] sm:$0xff]
      %v3699 = vld [vmem:[%s2 + $0x1c8] sm:$0xff]
      %v3700 = vld [vmem:[%s2 + $0x1d0] sm:$0xff]
      %v3701 = vld [vmem:[%s2 + $0x1d8] sm:$0xff]
      %v3702 = vld [vmem:[%s2 + $0x1e0] sm:$0xff]
      %v3703 = vld [vmem:[%s2 + $0x1e8] sm:$0xff]
      %v3704 = vld [vmem:[%s2 + $0x1f0] sm:$0xff]
      %v3705 = vld [vmem:[%s2 + $0x1f8] sm:$0xff]
      %v3706 = vmul.f32 %v3696, %v3698
      %v3707 = vmul.f32 %v3695, %v3699
      %v3708 = vmul.f32 %v3694, %v3700
      %v3709 = vmul.f32 %v3693, %v3701
      %v3710 = vmul.f32 %v3692, %v3702
      %v3711 = vmul.f32 %v3691, %v3703
      %v3712 = vmul.f32 %v3690, %v3704
      %v3713 = vmul.f32 %v3697, %v3705
      %v3714 = vpack.c.bf16 %v3706, %v3706
      %v3715 = vpack.c.bf16 %v3707, %v3707
      %v3716 = vpack.c.bf16 %v3708, %v3708
      %v3717 = vpack.c.bf16 %v3709, %v3709
      %v3718 = vpack.c.bf16 %v3710, %v3710
      %v3719 = vpack.c.bf16 %v3711, %v3711
      %v3720 = vpack.c.bf16 %v3712, %v3712
      %v3721 = vpack.c.bf16 %v3713, %v3713
      %v3730 = vunpack.c.l.b16 %v3714
      %v3731 = vunpack.c.l.b16 %v3715
      %v3732 = vunpack.c.l.b16 %v3716
      %v3733 = vunpack.c.l.b16 %v3717
      %v3734 = vunpack.c.l.b16 %v3718
      %v3735 = vunpack.c.l.b16 %v3719
      %v3736 = vunpack.c.l.b16 %v3720
      %v3737 = vunpack.c.l.b16 %v3721
      %v3738 = vpack.c.b16 %v3731, %v3730
      %v3739 = vpack.c.b16 %v3733, %v3732
      %v3740 = vpack.c.b16 %v3735, %v3734
      %v3741 = vpack.c.b16 %v3737, %v3736
      %3746 = vst [vmem:[#allocation2 + $0xe0] sm:$0xff] %v3738
      %3747 = vst [vmem:[#allocation2 + $0xe8] sm:$0xff] %v3739
      %3748 = vst [vmem:[#allocation2 + $0xf0] sm:$0xff] %v3740
      %3749 = vst [vmem:[#allocation2 + $0xf8] sm:$0xff] %v3741
      %3750 = vrot.lane.b32.xlu0 %v3174, 95
      %v3751 = vpop.permute.xlu0 %3750
      %3752 = vrot.lane.b32.xlu0 %v3175, 95
      %v3753 = vpop.permute.xlu0 %3752
      %3754 = vrot.lane.b32.xlu0 %v3176, 95
      %v3755 = vpop.permute.xlu0 %3754
      %3756 = vrot.lane.b32.xlu0 %v3177, 95
      %v3757 = vpop.permute.xlu0 %3756
      %3758 = vrot.lane.b32.xlu0 %v3178, 95
      %v3759 = vpop.permute.xlu0 %3758
      %3760 = vrot.lane.b32.xlu0 %v3179, 95
      %v3761 = vpop.permute.xlu0 %3760
      %3762 = vrot.lane.b32.xlu0 %v3180, 95
      %v3763 = vpop.permute.xlu0 %3762
      %3764 = vrot.lane.b32.xlu0 %v3181, 95
      %v3765 = vpop.permute.xlu0 %3764
      %v3766 = vsel %vm1087, %v3763, %v3765
      %v3767 = vsel %vm1087, %v3761, %v3763
      %v3768 = vsel %vm1087, %v3759, %v3761
      %v3769 = vsel %vm1087, %v3757, %v3759
      %v3770 = vsel %vm1087, %v3755, %v3757
      %v3771 = vsel %vm1087, %v3753, %v3755
      %v3772 = vsel %vm1087, %v3751, %v3753
      %v3773 = vsel %vm1087, %v3765, %v3751
      %v3774 = vld [vmem:[%s2 + $0x200] sm:$0xff]
      %v3775 = vld [vmem:[%s2 + $0x208] sm:$0xff]
      %v3776 = vld [vmem:[%s2 + $0x210] sm:$0xff]
      %v3777 = vld [vmem:[%s2 + $0x218] sm:$0xff]
      %v3778 = vld [vmem:[%s2 + $0x220] sm:$0xff]
      %v3779 = vld [vmem:[%s2 + $0x228] sm:$0xff]
      %v3780 = vld [vmem:[%s2 + $0x230] sm:$0xff]
      %v3781 = vld [vmem:[%s2 + $0x238] sm:$0xff]
      %v3782 = vmul.f32 %v3772, %v3774
      %v3783 = vmul.f32 %v3771, %v3775
      %v3784 = vmul.f32 %v3770, %v3776
      %v3785 = vmul.f32 %v3769, %v3777
      %v3786 = vmul.f32 %v3768, %v3778
      %v3787 = vmul.f32 %v3767, %v3779
      %v3788 = vmul.f32 %v3766, %v3780
      %v3789 = vmul.f32 %v3773, %v3781
      %v3790 = vpack.c.bf16 %v3782, %v3782
      %v3791 = vpack.c.bf16 %v3783, %v3783
      %v3792 = vpack.c.bf16 %v3784, %v3784
      %v3793 = vpack.c.bf16 %v3785, %v3785
      %v3794 = vpack.c.bf16 %v3786, %v3786
      %v3795 = vpack.c.bf16 %v3787, %v3787
      %v3796 = vpack.c.bf16 %v3788, %v3788
      %v3797 = vpack.c.bf16 %v3789, %v3789
      %v3806 = vunpack.c.l.b16 %v3790
      %v3807 = vunpack.c.l.b16 %v3791
      %v3808 = vunpack.c.l.b16 %v3792
      %v3809 = vunpack.c.l.b16 %v3793
      %v3810 = vunpack.c.l.b16 %v3794
      %v3811 = vunpack.c.l.b16 %v3795
      %v3812 = vunpack.c.l.b16 %v3796
      %v3813 = vunpack.c.l.b16 %v3797
      %v3814 = vpack.c.b16 %v3807, %v3806
      %v3815 = vpack.c.b16 %v3809, %v3808
      %v3816 = vpack.c.b16 %v3811, %v3810
      %v3817 = vpack.c.b16 %v3813, %v3812
      %3822 = vst [vmem:[#allocation2 + $0x100] sm:$0xff] %v3814
      %3823 = vst [vmem:[#allocation2 + $0x108] sm:$0xff] %v3815
      %3824 = vst [vmem:[#allocation2 + $0x110] sm:$0xff] %v3816
      %3825 = vst [vmem:[#allocation2 + $0x118] sm:$0xff] %v3817
      %v3826 = vld [vmem:[%s9] sm:$0x3]
      %v3827 = vld [vmem:[#allocation2] sm:$0xff]
      %v3828 = vld [vmem:[#allocation2 + $0x8] sm:$0xff]
      %v3829 = vld [vmem:[#allocation2 + $0x10] sm:$0xff]
      %v3830 = vld [vmem:[#allocation2 + $0x18] sm:$0xff]
      %v3831 = vld [vmem:[#allocation2 + $0x20] sm:$0xff]
      %v3832 = vld [vmem:[#allocation2 + $0x28] sm:$0xff]
      %v3833 = vld [vmem:[#allocation2 + $0x30] sm:$0xff]
      %v3834 = vld [vmem:[#allocation2 + $0x38] sm:$0xff]
      %v3835 = vld [vmem:[#allocation2 + $0x40] sm:$0xff]
      %v3836 = vld [vmem:[#allocation2 + $0x48] sm:$0xff]
      %v3837 = vld [vmem:[#allocation2 + $0x50] sm:$0xff]
      %v3838 = vld [vmem:[#allocation2 + $0x58] sm:$0xff]
      %v3839 = vld [vmem:[#allocation2 + $0x60] sm:$0xff]
      %v3840 = vld [vmem:[#allocation2 + $0x68] sm:$0xff]
      %v3841 = vld [vmem:[#allocation2 + $0x70] sm:$0xff]
      %v3842 = vld [vmem:[#allocation2 + $0x78] sm:$0xff]
      %v3843 = vld [vmem:[#allocation2 + $0x80] sm:$0xff]
      %v3844 = vld [vmem:[#allocation2 + $0x88] sm:$0xff]
      %v3845 = vld [vmem:[#allocation2 + $0x90] sm:$0xff]
      %v3846 = vld [vmem:[#allocation2 + $0x98] sm:$0xff]
      %v3847 = vld [vmem:[#allocation2 + $0xa0] sm:$0xff]
      %v3848 = vld [vmem:[#allocation2 + $0xa8] sm:$0xff]
      %v3849 = vld [vmem:[#allocation2 + $0xb0] sm:$0xff]
      %v3850 = vld [vmem:[#allocation2 + $0xb8] sm:$0xff]
      %v3851 = vld [vmem:[#allocation2 + $0xc0] sm:$0xff]
      %v3852 = vld [vmem:[#allocation2 + $0xc8] sm:$0xff]
      %v3853 = vld [vmem:[#allocation2 + $0xd0] sm:$0xff]
      %v3854 = vld [vmem:[#allocation2 + $0xd8] sm:$0xff]
      %v3855 = vld [vmem:[#allocation2 + $0xe0] sm:$0xff]
      %v3856 = vld [vmem:[#allocation2 + $0xe8] sm:$0xff]
      %v3857 = vld [vmem:[#allocation2 + $0xf0] sm:$0xff]
      %v3858 = vld [vmem:[#allocation2 + $0xf8] sm:$0xff]
      %v3859 = vld [vmem:[#allocation2 + $0x100] sm:$0xff]
      %v3860 = vld [vmem:[#allocation2 + $0x108] sm:$0xff]
      %v3861 = vld [vmem:[#allocation2 + $0x110] sm:$0xff]
      %v3862 = vld [vmem:[#allocation2 + $0x118] sm:$0xff]
      %v3899 = vunpack.c.l.b16 %v3827
      %v3900 = vunpack.c.h.b16 %v3827
      %v3901 = vunpack.c.l.b16 %v3828
      %v3902 = vunpack.c.h.b16 %v3828
      %v3903 = vunpack.c.l.b16 %v3829
      %v3904 = vunpack.c.h.b16 %v3829
      %v3905 = vunpack.c.l.b16 %v3830
      %v3906 = vunpack.c.h.b16 %v3830
      %v3907 = vunpack.c.l.b16 %v3831
      %v3908 = vunpack.c.h.b16 %v3831
      %v3909 = vunpack.c.l.b16 %v3832
      %v3910 = vunpack.c.h.b16 %v3832
      %v3911 = vunpack.c.l.b16 %v3833
      %v3912 = vunpack.c.h.b16 %v3833
      %v3913 = vunpack.c.l.b16 %v3834
      %v3914 = vunpack.c.h.b16 %v3834
      %v3915 = vunpack.c.l.b16 %v3835
      %v3916 = vunpack.c.h.b16 %v3835
      %v3917 = vunpack.c.l.b16 %v3836
      %v3918 = vunpack.c.h.b16 %v3836
      %v3919 = vunpack.c.l.b16 %v3837
      %v3920 = vunpack.c.h.b16 %v3837
      %v3921 = vunpack.c.l.b16 %v3838
      %v3922 = vunpack.c.h.b16 %v3838
      %v3923 = vunpack.c.l.b16 %v3839
      %v3924 = vunpack.c.h.b16 %v3839
      %v3925 = vunpack.c.l.b16 %v3840
      %v3926 = vunpack.c.h.b16 %v3840
      %v3927 = vunpack.c.l.b16 %v3841
      %v3928 = vunpack.c.h.b16 %v3841
      %v3929 = vunpack.c.l.b16 %v3842
      %v3930 = vunpack.c.h.b16 %v3842
      %v3931 = vunpack.c.l.b16 %v3843
      %v3932 = vunpack.c.h.b16 %v3843
      %v3933 = vunpack.c.l.b16 %v3844
      %v3934 = vunpack.c.h.b16 %v3844
      %v3935 = vunpack.c.l.b16 %v3845
      %v3936 = vunpack.c.h.b16 %v3845
      %v3937 = vunpack.c.l.b16 %v3846
      %v3938 = vunpack.c.h.b16 %v3846
      %v3939 = vunpack.c.l.b16 %v3847
      %v3940 = vunpack.c.h.b16 %v3847
      %v3941 = vunpack.c.l.b16 %v3848
      %v3942 = vunpack.c.h.b16 %v3848
      %v3943 = vunpack.c.l.b16 %v3849
      %v3944 = vunpack.c.h.b16 %v3849
      %v3945 = vunpack.c.l.b16 %v3850
      %v3946 = vunpack.c.h.b16 %v3850
      %v3947 = vunpack.c.l.b16 %v3851
      %v3948 = vunpack.c.h.b16 %v3851
      %v3949 = vunpack.c.l.b16 %v3852
      %v3950 = vunpack.c.h.b16 %v3852
      %v3951 = vunpack.c.l.b16 %v3853
      %v3952 = vunpack.c.h.b16 %v3853
      %v3953 = vunpack.c.l.b16 %v3854
      %v3954 = vunpack.c.h.b16 %v3854
      %v3955 = vunpack.c.l.b16 %v3855
      %v3956 = vunpack.c.h.b16 %v3855
      %v3957 = vunpack.c.l.b16 %v3856
      %v3958 = vunpack.c.h.b16 %v3856
      %v3959 = vunpack.c.l.b16 %v3857
      %v3960 = vunpack.c.h.b16 %v3857
      %v3961 = vunpack.c.l.b16 %v3858
      %v3962 = vunpack.c.h.b16 %v3858
      %v3963 = vunpack.c.l.b16 %v3859
      %v3964 = vunpack.c.h.b16 %v3859
      %v3965 = vunpack.c.l.b16 %v3860
      %v3966 = vunpack.c.h.b16 %v3860
      %v3967 = vunpack.c.l.b16 %v3861
      %v3968 = vunpack.c.h.b16 %v3861
      %v3969 = vunpack.c.l.b16 %v3862
      %v3970 = vunpack.c.h.b16 %v3862
      %v3971 = vpack.c.b16 %v3907, %v3899
      %v3972 = vpack.c.b16 %v3908, %v3900
      %v3973 = vpack.c.b16 %v3909, %v3901
      %v3974 = vpack.c.b16 %v3910, %v3902
      %v3975 = vpack.c.b16 %v3911, %v3903
      %v3976 = vpack.c.b16 %v3912, %v3904
      %v3977 = vpack.c.b16 %v3913, %v3905
      %v3978 = vpack.c.b16 %v3914, %v3906
      %v3979 = vpack.c.b16 %v3923, %v3915
      %v3980 = vpack.c.b16 %v3924, %v3916
      %v3981 = vpack.c.b16 %v3925, %v3917
      %v3982 = vpack.c.b16 %v3926, %v3918
      %v3983 = vpack.c.b16 %v3927, %v3919
      %v3984 = vpack.c.b16 %v3928, %v3920
      %v3985 = vpack.c.b16 %v3929, %v3921
      %v3986 = vpack.c.b16 %v3930, %v3922
      %v3987 = vpack.c.b16 %v3939, %v3931
      %v3988 = vpack.c.b16 %v3940, %v3932
      %v3989 = vpack.c.b16 %v3941, %v3933
      %v3990 = vpack.c.b16 %v3942, %v3934
      %v3991 = vpack.c.b16 %v3943, %v3935
      %v3992 = vpack.c.b16 %v3944, %v3936
      %v3993 = vpack.c.b16 %v3945, %v3937
      %v3994 = vpack.c.b16 %v3946, %v3938
      %v3995 = vpack.c.b16 %v3955, %v3947
      %v3996 = vpack.c.b16 %v3956, %v3948
      %v3997 = vpack.c.b16 %v3957, %v3949
      %v3998 = vpack.c.b16 %v3958, %v3950
      %v3999 = vpack.c.b16 %v3959, %v3951
      %v4000 = vpack.c.b16 %v3960, %v3952
      %v4001 = vpack.c.b16 %v3961, %v3953
      %v4002 = vpack.c.b16 %v3962, %v3954
      %v4003 = vpack.c.b16 %v3963, %v3963
      %v4004 = vpack.c.b16 %v3964, %v3964
      %v4005 = vpack.c.b16 %v3965, %v3965
      %v4006 = vpack.c.b16 %v3966, %v3966
      %v4007 = vpack.c.b16 %v3967, %v3967
      %v4008 = vpack.c.b16 %v3968, %v3968
      %v4009 = vpack.c.b16 %v3969, %v3969
      %v4010 = vpack.c.b16 %v3970, %v3970
      %v4044 = vsel %vm1365, %v3826, 0
      %v4047 = vsel %vm1369, %v4003, 0
      %v4050 = vsel %vm1369, %v4004, 0
      %v4053 = vsel %vm1369, %v4005, 0
      %v4056 = vsel %vm1369, %v4006, 0
      %v4059 = vsel %vm1369, %v4007, 0
      %v4062 = vsel %vm1369, %v4008, 0
      %v4065 = vsel %vm1369, %v4009, 0
      %v4068 = vsel %vm1369, %v4010, 0
      %4070 = vmatprep.subr.bf16.mxu0 0
      %4071 = vmatpush1.bf16.msra.mxu0 0
      %4072 = vmatprep.subr.bf16.mxu0 0
      %4073 = vmatpush1.bf16.msra.mxu0 0
      %4074 = vmatprep.subr.bf16.mxu0 0
      %4075 = vmatpush1.bf16.msra.mxu0 0
      %4076 = vmatprep.subr.bf16.mxu0 %v4050
      %4077 = vmatpush1.bf16.msra.mxu0 %v4047
      %4078 = vmatprep.subr.bf16.mxu0 %v3996
      %4079 = vmatpush1.bf16.msra.mxu0 %v3995
      %4080 = vmatprep.subr.bf16.mxu0 %v3988
      %4081 = vmatpush1.bf16.msra.mxu0 %v3987
      %4082 = vmatprep.subr.bf16.mxu0 %v3980
      %4083 = vmatpush1.bf16.msra.mxu0 %v3979
      %4084 = vmatprep.subr.bf16.mxu0 %v3972
      %4085 = vmatpush1.bf16.msra.mxu0 %v3971
      %4086 = vmatprep.subr.bf16.mxu0 0
      %4087 = vmatpush2.bf16.msra.mxu0 0
      %4088 = vmatprep.subr.bf16.mxu0 0
      %4089 = vmatpush2.bf16.msra.mxu0 0
      %4090 = vmatprep.subr.bf16.mxu0 0
      %4091 = vmatpush2.bf16.msra.mxu0 0
      %4092 = vmatprep.subr.bf16.mxu0 0
      %4093 = vmatpush2.bf16.msra.mxu0 0
      %4094 = vmatprep.subr.bf16.mxu0 0
      %4095 = vmatpush2.bf16.msra.mxu0 0
      %4096 = vmatprep.subr.bf16.mxu0 0
      %4097 = vmatpush2.bf16.msra.mxu0 0
      %4098 = vmatprep.subr.bf16.mxu0 0
      %4099 = vmatpush2.bf16.msra.mxu0 0
      %4100 = vmatprep.subr.bf16.mxu0 0
      %4101 = vmatpush2.bf16.msra.mxu0 0
      %4102 = vmatprep.mubr.bf16.mxu0 0
      %4103 = vmatmul.mubr.bf16.gmra.mxu0 %v4044
      %v4104 = vpop.f32.mrf.mxu0
      %v4105 = vadd.f32 0.0, %v4104
      %v4106 = vpop.f32.mrf.mxu0
      %v4107 = vadd.f32 0.0, %v4106
      %v4108 = vpop.f32.mrf.mxu0
      %v4109 = vpop.f32.mrf.mxu0
      %4110 = vdwg.mxu0
      %4111 = vmatprep.subr.bf16.mxu0 0
      %4112 = vmatpush1.bf16.msra.mxu0 0
      %4113 = vmatprep.subr.bf16.mxu0 0
      %4114 = vmatpush1.bf16.msra.mxu0 0
      %4115 = vmatprep.subr.bf16.mxu0 0
      %4116 = vmatpush1.bf16.msra.mxu0 0
      %4117 = vmatprep.subr.bf16.mxu0 %v4056
      %4118 = vmatpush1.bf16.msra.mxu0 %v4053
      %4119 = vmatprep.subr.bf16.mxu0 %v3998
      %4120 = vmatpush1.bf16.msra.mxu0 %v3997
      %4121 = vmatprep.subr.bf16.mxu0 %v3990
      %4122 = vmatpush1.bf16.msra.mxu0 %v3989
      %4123 = vmatprep.subr.bf16.mxu0 %v3982
      %4124 = vmatpush1.bf16.msra.mxu0 %v3981
      %4125 = vmatprep.subr.bf16.mxu0 %v3974
      %4126 = vmatpush1.bf16.msra.mxu0 %v3973
      %4127 = vmatprep.subr.bf16.mxu0 0
      %4128 = vmatpush2.bf16.msra.mxu0 0
      %4129 = vmatprep.subr.bf16.mxu0 0
      %4130 = vmatpush2.bf16.msra.mxu0 0
      %4131 = vmatprep.subr.bf16.mxu0 0
      %4132 = vmatpush2.bf16.msra.mxu0 0
      %4133 = vmatprep.subr.bf16.mxu0 0
      %4134 = vmatpush2.bf16.msra.mxu0 0
      %4135 = vmatprep.subr.bf16.mxu0 0
      %4136 = vmatpush2.bf16.msra.mxu0 0
      %4137 = vmatprep.subr.bf16.mxu0 0
      %4138 = vmatpush2.bf16.msra.mxu0 0
      %4139 = vmatprep.subr.bf16.mxu0 0
      %4140 = vmatpush2.bf16.msra.mxu0 0
      %4141 = vmatprep.subr.bf16.mxu0 0
      %4142 = vmatpush2.bf16.msra.mxu0 0
      %4143 = vmatprep.mubr.bf16.mxu0 0
      %4144 = vmatmul.mubr.bf16.gmra.mxu0 %v4044
      %v4145 = vpop.f32.mrf.mxu0
      %v4146 = vadd.f32 0.0, %v4145
      %v4147 = vpop.f32.mrf.mxu0
      %v4148 = vadd.f32 0.0, %v4147
      %v4149 = vpop.f32.mrf.mxu0
      %v4150 = vpop.f32.mrf.mxu0
      %4151 = vdwg.mxu0
      %4152 = vmatprep.subr.bf16.mxu0 0
      %4153 = vmatpush1.bf16.msra.mxu0 0
      %4154 = vmatprep.subr.bf16.mxu0 0
      %4155 = vmatpush1.bf16.msra.mxu0 0
      %4156 = vmatprep.subr.bf16.mxu0 0
      %4157 = vmatpush1.bf16.msra.mxu0 0
      %4158 = vmatprep.subr.bf16.mxu0 %v4062
      %4159 = vmatpush1.bf16.msra.mxu0 %v4059
      %4160 = vmatprep.subr.bf16.mxu0 %v4000
      %4161 = vmatpush1.bf16.msra.mxu0 %v3999
      %4162 = vmatprep.subr.bf16.mxu0 %v3992
      %4163 = vmatpush1.bf16.msra.mxu0 %v3991
      %4164 = vmatprep.subr.bf16.mxu0 %v3984
      %4165 = vmatpush1.bf16.msra.mxu0 %v3983
      %4166 = vmatprep.subr.bf16.mxu0 %v3976
      %4167 = vmatpush1.bf16.msra.mxu0 %v3975
      %4168 = vmatprep.subr.bf16.mxu0 0
      %4169 = vmatpush2.bf16.msra.mxu0 0
      %4170 = vmatprep.subr.bf16.mxu0 0
      %4171 = vmatpush2.bf16.msra.mxu0 0
      %4172 = vmatprep.subr.bf16.mxu0 0
      %4173 = vmatpush2.bf16.msra.mxu0 0
      %4174 = vmatprep.subr.bf16.mxu0 0
      %4175 = vmatpush2.bf16.msra.mxu0 0
      %4176 = vmatprep.subr.bf16.mxu0 0
      %4177 = vmatpush2.bf16.msra.mxu0 0
      %4178 = vmatprep.subr.bf16.mxu0 0
      %4179 = vmatpush2.bf16.msra.mxu0 0
      %4180 = vmatprep.subr.bf16.mxu0 0
      %4181 = vmatpush2.bf16.msra.mxu0 0
      %4182 = vmatprep.subr.bf16.mxu0 0
      %4183 = vmatpush2.bf16.msra.mxu0 0
      %4184 = vmatprep.mubr.bf16.mxu0 0
      %4185 = vmatmul.mubr.bf16.gmra.mxu0 %v4044
      %v4186 = vpop.f32.mrf.mxu0
      %v4187 = vadd.f32 0.0, %v4186
      %v4188 = vpop.f32.mrf.mxu0
      %v4189 = vadd.f32 0.0, %v4188
      %v4190 = vpop.f32.mrf.mxu0
      %v4191 = vpop.f32.mrf.mxu0
      %4192 = vdwg.mxu0
      %4193 = vmatprep.subr.bf16.mxu0 0
      %4194 = vmatpush1.bf16.msra.mxu0 0
      %4195 = vmatprep.subr.bf16.mxu0 0
      %4196 = vmatpush1.bf16.msra.mxu0 0
      %4197 = vmatprep.subr.bf16.mxu0 0
      %4198 = vmatpush1.bf16.msra.mxu0 0
      %4199 = vmatprep.subr.bf16.mxu0 %v4068
      %4200 = vmatpush1.bf16.msra.mxu0 %v4065
      %4201 = vmatprep.subr.bf16.mxu0 %v4002
      %4202 = vmatpush1.bf16.msra.mxu0 %v4001
      %4203 = vmatprep.subr.bf16.mxu0 %v3994
      %4204 = vmatpush1.bf16.msra.mxu0 %v3993
      %4205 = vmatprep.subr.bf16.mxu0 %v3986
      %4206 = vmatpush1.bf16.msra.mxu0 %v3985
      %4207 = vmatprep.subr.bf16.mxu0 %v3978
      %4208 = vmatpush1.bf16.msra.mxu0 %v3977
      %4209 = vmatprep.subr.bf16.mxu0 0
      %4210 = vmatpush2.bf16.msra.mxu0 0
      %4211 = vmatprep.subr.bf16.mxu0 0
      %4212 = vmatpush2.bf16.msra.mxu0 0
      %4213 = vmatprep.subr.bf16.mxu0 0
      %4214 = vmatpush2.bf16.msra.mxu0 0
      %4215 = vmatprep.subr.bf16.mxu0 0
      %4216 = vmatpush2.bf16.msra.mxu0 0
      %4217 = vmatprep.subr.bf16.mxu0 0
      %4218 = vmatpush2.bf16.msra.mxu0 0
      %4219 = vmatprep.subr.bf16.mxu0 0
      %4220 = vmatpush2.bf16.msra.mxu0 0
      %4221 = vmatprep.subr.bf16.mxu0 0
      %4222 = vmatpush2.bf16.msra.mxu0 0
      %4223 = vmatprep.subr.bf16.mxu0 0
      %4224 = vmatpush2.bf16.msra.mxu0 0
      %4225 = vmatprep.mubr.bf16.mxu0 0
      %4226 = vmatmul.mubr.bf16.gmra.mxu0 %v4044
      %v4227 = vpop.f32.mrf.mxu0
      %v4228 = vadd.f32 0.0, %v4227
      %v4229 = vpop.f32.mrf.mxu0
      %v4230 = vadd.f32 0.0, %v4229
      %v4231 = vpop.f32.mrf.mxu0
      %v4232 = vpop.f32.mrf.mxu0
      %4233 = vdwg.mxu0
      %v4234 = vld [vmem:[%s10] sm:$0xf]
      %v4235 = vld [vmem:[%s11] sm:$0xf]
      %v4236 = vsel %vm1369, %v4105, 0.0
      %v4237 = vsel %vm1369, %v4107, 0.0
      %v4238 = vadd.f32 %v4236, %v4237
      %v4239 = vsel %vm1369, %v4146, 0.0
      %v4240 = vadd.f32 %v4238, %v4239
      %v4241 = vsel %vm1369, %v4148, 0.0
      %v4242 = vadd.f32 %v4240, %v4241
      %v4243 = vsel %vm1369, %v4187, 0.0
      %v4244 = vadd.f32 %v4242, %v4243
      %v4245 = vsel %vm1369, %v4189, 0.0
      %v4246 = vadd.f32 %v4244, %v4245
      %v4247 = vsel %vm1369, %v4228, 0.0
      %v4248 = vadd.f32 %v4246, %v4247
      %v4249 = vsel %vm1369, %v4230, 0.0
      %v4250 = vadd.f32 %v4248, %v4249
      %4251 = vadd.xlane.f32.xlu0 %v4250
      %v4252 = vpop.xlane.xlu0 %4251
      %v4253 = vrot.slane %v4252, 4
      %v4254 = vadd.f32 %v4252, %v4253
      %v4255 = vrot.slane %v4254, 2
      %v4256 = vadd.f32 %v4254, %v4255
      %v4257 = vrot.slane %v4256, 1
      %v4258 = vadd.f32 %v4256, %v4257
      %s4259 = vtos %v4258
      %s4260 = smul.f32 %s4259, 0.00024414063
      %v4261 = vmul.f32 %v4105, %v4105
      %v4262 = vmul.f32 %v4107, %v4107
      %v4263 = vmul.f32 %v4146, %v4146
      %v4264 = vmul.f32 %v4148, %v4148
      %v4265 = vmul.f32 %v4187, %v4187
      %v4266 = vmul.f32 %v4189, %v4189
      %v4267 = vmul.f32 %v4228, %v4228
      %v4268 = vmul.f32 %v4230, %v4230
      %v4269 = vsel %vm1369, %v4261, 0.0
      %v4270 = vsel %vm1369, %v4262, 0.0
      %v4271 = vadd.f32 %v4269, %v4270
      %v4272 = vsel %vm1369, %v4263, 0.0
      %v4273 = vadd.f32 %v4271, %v4272
      %v4274 = vsel %vm1369, %v4264, 0.0
      %v4275 = vadd.f32 %v4273, %v4274
      %v4276 = vsel %vm1369, %v4265, 0.0
      %v4277 = vadd.f32 %v4275, %v4276
      %v4278 = vsel %vm1369, %v4266, 0.0
      %v4279 = vadd.f32 %v4277, %v4278
      %v4280 = vsel %vm1369, %v4267, 0.0
      %v4281 = vadd.f32 %v4279, %v4280
      %v4282 = vsel %vm1369, %v4268, 0.0
      %v4283 = vadd.f32 %v4281, %v4282
      %4284 = vadd.xlane.f32.xlu0 %v4283
      %v4285 = vpop.xlane.xlu0 %4284
      %v4286 = vrot.slane %v4285, 4
      %v4287 = vadd.f32 %v4285, %v4286
      %v4288 = vrot.slane %v4287, 2
      %v4289 = vadd.f32 %v4287, %v4288
      %v4290 = vrot.slane %v4289, 1
      %v4291 = vadd.f32 %v4289, %v4290
      %s4292 = vtos %v4291
      %s4293 = smul.f32 %s4292, 0.00024414063
      %s4294 = smul.f32 %s4260, %s4260
      %s4295 = ssub.f32 %s4293, %s4294
      %s4296 = smax.f32 %s4295, 0.0
      %s4297 = sadd.f32 %s4296, 1e-05
      %v4298 = vstv %s4297
      %v4299 = vrsqrt.pop %v4298
      %s4300 = vtos %v4299
      %v4301 = vstv %s4300
      %v4302 = vmul.f32 %v4234, %v4301
      %v4303 = vstv %s4260
      %v4304 = vmul.f32 %v4303, %v4302
      %v4305 = vsub.f32 %v4235, %v4304
      %4307 = vset.pattern.permute.xlu0 0
      %4308 = vperm.xlu0 %4307, %v4302
      %v4309 = vpop.permute.xlu0 %4308
      %v4311 = vmul.f32 %v4105, %v4309
      %v4312 = vmul.f32 %v4107, %v4309
      %v4313 = vmul.f32 %v4146, %v4309
      %v4314 = vmul.f32 %v4148, %v4309
      %v4315 = vmul.f32 %v4187, %v4309
      %v4316 = vmul.f32 %v4189, %v4309
      %v4317 = vmul.f32 %v4228, %v4309
      %v4318 = vmul.f32 %v4230, %v4309
      %4320 = vset.pattern.permute.xlu0 0
      %4321 = vperm.xlu0 %4320, %v4305
      %v4322 = vpop.permute.xlu0 %4321
      %v4324 = vadd.f32 %v4311, %v4322
      %v4325 = vadd.f32 %v4312, %v4322
      %v4326 = vadd.f32 %v4313, %v4322
      %v4327 = vadd.f32 %v4314, %v4322
      %v4328 = vadd.f32 %v4315, %v4322
      %v4329 = vadd.f32 %v4316, %v4322
      %v4330 = vadd.f32 %v4317, %v4322
      %v4331 = vadd.f32 %v4318, %v4322
      %v4332 = vmul.f32 %v4324, 0.70710677
      %v4333 = vmul.f32 %v4325, 0.70710677
      %v4334 = vmul.f32 %v4326, 0.70710677
      %v4335 = vmul.f32 %v4327, 0.70710677
      %v4336 = vmul.f32 %v4328, 0.70710677
      %v4337 = vmul.f32 %v4329, 0.70710677
      %v4338 = vmul.f32 %v4330, 0.70710677
      %v4339 = vmul.f32 %v4331, 0.70710677
      %v4340 = vand.u32 2147483647, %v4332
      %v4341 = vand.u32 2147483647, %v4333
      %v4342 = vand.u32 2147483647, %v4334
      %v4343 = vand.u32 2147483647, %v4335
      %v4344 = vand.u32 2147483647, %v4336
      %v4345 = vand.u32 2147483647, %v4337
      %v4346 = vand.u32 2147483647, %v4338
      %v4347 = vand.u32 2147483647, %v4339
      %v4348 = vmul.f32 %v4340, 0.3275911
      %v4349 = vmul.f32 %v4341, 0.3275911
      %v4350 = vmul.f32 %v4342, 0.3275911
      %v4351 = vmul.f32 %v4343, 0.3275911
      %v4352 = vmul.f32 %v4344, 0.3275911
      %v4353 = vmul.f32 %v4345, 0.3275911
      %v4354 = vmul.f32 %v4346, 0.3275911
      %v4355 = vmul.f32 %v4347, 0.3275911
      %v4356 = vadd.f32 %v4348, 1.0
      %v4357 = vadd.f32 %v4349, 1.0
      %v4358 = vadd.f32 %v4350, 1.0
      %v4359 = vadd.f32 %v4351, 1.0
      %v4360 = vadd.f32 %v4352, 1.0
      %v4361 = vadd.f32 %v4353, 1.0
      %v4362 = vadd.f32 %v4354, 1.0
      %v4363 = vadd.f32 %v4355, 1.0
      %v4364 = vrcp.pop %v4356
      %v4365 = vmul.f32 1.0, %v4364
      %v4366 = vrcp.pop %v4357
      %v4367 = vmul.f32 1.0, %v4366
      %v4368 = vrcp.pop %v4358
      %v4369 = vmul.f32 1.0, %v4368
      %v4370 = vrcp.pop %v4359
      %v4371 = vmul.f32 1.0, %v4370
      %v4372 = vrcp.pop %v4360
      %v4373 = vmul.f32 1.0, %v4372
      %v4374 = vrcp.pop %v4361
      %v4375 = vmul.f32 1.0, %v4374
      %v4376 = vrcp.pop %v4362
      %v4377 = vmul.f32 1.0, %v4376
      %v4378 = vrcp.pop %v4363
      %v4379 = vmul.f32 1.0, %v4378
      %v4380 = vmul.f32 %v4365, 1.0614054
      %v4381 = vmul.f32 %v4367, 1.0614054
      %v4382 = vmul.f32 %v4369, 1.0614054
      %v4383 = vmul.f32 %v4371, 1.0614054
      %v4384 = vmul.f32 %v4373, 1.0614054
      %v4385 = vmul.f32 %v4375, 1.0614054
      %v4386 = vmul.f32 %v4377, 1.0614054
      %v4387 = vmul.f32 %v4379, 1.0614054
      %v4388 = vsub.f32 %v4380, 1.4531521
      %v4389 = vsub.f32 %v4381, 1.4531521
      %v4390 = vsub.f32 %v4382, 1.4531521
      %v4391 = vsub.f32 %v4383, 1.4531521
      %v4392 = vsub.f32 %v4384, 1.4531521
      %v4393 = vsub.f32 %v4385, 1.4531521
      %v4394 = vsub.f32 %v4386, 1.4531521
      %v4395 = vsub.f32 %v4387, 1.4531521
      %v4396 = vmul.f32 %v4388, %v4365
      %v4397 = vmul.f32 %v4389, %v4367
      %v4398 = vmul.f32 %v4390, %v4369
      %v4399 = vmul.f32 %v4391, %v4371
      %v4400 = vmul.f32 %v4392, %v4373
      %v4401 = vmul.f32 %v4393, %v4375
      %v4402 = vmul.f32 %v4394, %v4377
      %v4403 = vmul.f32 %v4395, %v4379
      %v4404 = vadd.f32 %v4396, 1.4214138
      %v4405 = vadd.f32 %v4397, 1.4214138
      %v4406 = vadd.f32 %v4398, 1.4214138
      %v4407 = vadd.f32 %v4399, 1.4214138
      %v4408 = vadd.f32 %v4400, 1.4214138
      %v4409 = vadd.f32 %v4401, 1.4214138
      %v4410 = vadd.f32 %v4402, 1.4214138
      %v4411 = vadd.f32 %v4403, 1.4214138
      %v4412 = vmul.f32 %v4404, %v4365
      %v4413 = vmul.f32 %v4405, %v4367
      %v4414 = vmul.f32 %v4406, %v4369
      %v4415 = vmul.f32 %v4407, %v4371
      %v4416 = vmul.f32 %v4408, %v4373
      %v4417 = vmul.f32 %v4409, %v4375
      %v4418 = vmul.f32 %v4410, %v4377
      %v4419 = vmul.f32 %v4411, %v4379
      %v4420 = vsub.f32 %v4412, 0.28449672
      %v4421 = vsub.f32 %v4413, 0.28449672
      %v4422 = vsub.f32 %v4414, 0.28449672
      %v4423 = vsub.f32 %v4415, 0.28449672
      %v4424 = vsub.f32 %v4416, 0.28449672
      %v4425 = vsub.f32 %v4417, 0.28449672
      %v4426 = vsub.f32 %v4418, 0.28449672
      %v4427 = vsub.f32 %v4419, 0.28449672
      %v4428 = vmul.f32 %v4420, %v4365
      %v4429 = vmul.f32 %v4421, %v4367
      %v4430 = vmul.f32 %v4422, %v4369
      %v4431 = vmul.f32 %v4423, %v4371
      %v4432 = vmul.f32 %v4424, %v4373
      %v4433 = vmul.f32 %v4425, %v4375
      %v4434 = vmul.f32 %v4426, %v4377
      %v4435 = vmul.f32 %v4427, %v4379
      %v4436 = vadd.f32 %v4428, 0.2548296
      %v4437 = vadd.f32 %v4429, 0.2548296
      %v4438 = vadd.f32 %v4430, 0.2548296
      %v4439 = vadd.f32 %v4431, 0.2548296
      %v4440 = vadd.f32 %v4432, 0.2548296
      %v4441 = vadd.f32 %v4433, 0.2548296
      %v4442 = vadd.f32 %v4434, 0.2548296
      %v4443 = vadd.f32 %v4435, 0.2548296
      %v4444 = vmul.f32 %v4436, %v4365
      %v4445 = vmul.f32 %v4437, %v4367
      %v4446 = vmul.f32 %v4438, %v4369
      %v4447 = vmul.f32 %v4439, %v4371
      %v4448 = vmul.f32 %v4440, %v4373
      %v4449 = vmul.f32 %v4441, %v4375
      %v4450 = vmul.f32 %v4442, %v4377
      %v4451 = vmul.f32 %v4443, %v4379
      %v4452 = vmul.f32 %v4444, 0.5
      %v4453 = vmul.f32 %v4445, 0.5
      %v4454 = vmul.f32 %v4446, 0.5
      %v4455 = vmul.f32 %v4447, 0.5
      %v4456 = vmul.f32 %v4448, 0.5
      %v4457 = vmul.f32 %v4449, 0.5
      %v4458 = vmul.f32 %v4450, 0.5
      %v4459 = vmul.f32 %v4451, 0.5
      %v4460 = vsub.f32 0.0, %v4340
      %v4461 = vsub.f32 0.0, %v4341
      %v4462 = vsub.f32 0.0, %v4342
      %v4463 = vsub.f32 0.0, %v4343
      %v4464 = vsub.f32 0.0, %v4344
      %v4465 = vsub.f32 0.0, %v4345
      %v4466 = vsub.f32 0.0, %v4346
      %v4467 = vsub.f32 0.0, %v4347
      %v4468 = vmul.f32 %v4460, %v4340
      %v4469 = vmul.f32 %v4461, %v4341
      %v4470 = vmul.f32 %v4462, %v4342
      %v4471 = vmul.f32 %v4463, %v4343
      %v4472 = vmul.f32 %v4464, %v4344
      %v4473 = vmul.f32 %v4465, %v4345
      %v4474 = vmul.f32 %v4466, %v4346
      %v4475 = vmul.f32 %v4467, %v4347
      %v4476 = vmul.f32 %v4468, 1.442695
      %v4477 = vpow.pop %v4476
      %v4478 = vmul.f32 %v4469, 1.442695
      %v4479 = vpow.pop %v4478
      %v4480 = vmul.f32 %v4470, 1.442695
      %v4481 = vpow.pop %v4480
      %v4482 = vmul.f32 %v4471, 1.442695
      %v4483 = vpow.pop %v4482
      %v4484 = vmul.f32 %v4472, 1.442695
      %v4485 = vpow.pop %v4484
      %v4486 = vmul.f32 %v4473, 1.442695
      %v4487 = vpow.pop %v4486
      %v4488 = vmul.f32 %v4474, 1.442695
      %v4489 = vpow.pop %v4488
      %v4490 = vmul.f32 %v4475, 1.442695
      %v4491 = vpow.pop %v4490
      %v4492 = vmul.f32 %v4452, %v4477
      %v4493 = vmul.f32 %v4453, %v4479
      %v4494 = vmul.f32 %v4454, %v4481
      %v4495 = vmul.f32 %v4455, %v4483
      %v4496 = vmul.f32 %v4456, %v4485
      %v4497 = vmul.f32 %v4457, %v4487
      %v4498 = vmul.f32 %v4458, %v4489
      %v4499 = vmul.f32 %v4459, %v4491
      %vm4500 = vcmp.ge.f32.partialorder %v4332, 0.0
      %vm4501 = vcmp.ge.f32.partialorder %v4333, 0.0
      %vm4502 = vcmp.ge.f32.partialorder %v4334, 0.0
      %vm4503 = vcmp.ge.f32.partialorder %v4335, 0.0
      %vm4504 = vcmp.ge.f32.partialorder %v4336, 0.0
      %vm4505 = vcmp.ge.f32.partialorder %v4337, 0.0
      %vm4506 = vcmp.ge.f32.partialorder %v4338, 0.0
      %vm4507 = vcmp.ge.f32.partialorder %v4339, 0.0
      %v4508 = vsub.f32 1.0, %v4492
      %v4509 = vsub.f32 1.0, %v4493
      %v4510 = vsub.f32 1.0, %v4494
      %v4511 = vsub.f32 1.0, %v4495
      %v4512 = vsub.f32 1.0, %v4496
      %v4513 = vsub.f32 1.0, %v4497
      %v4514 = vsub.f32 1.0, %v4498
      %v4515 = vsub.f32 1.0, %v4499
      %v4516 = vsel %vm4500, %v4508, %v4492
      %v4517 = vsel %vm4501, %v4509, %v4493
      %v4518 = vsel %vm4502, %v4510, %v4494
      %v4519 = vsel %vm4503, %v4511, %v4495
      %v4520 = vsel %vm4504, %v4512, %v4496
      %v4521 = vsel %vm4505, %v4513, %v4497
      %v4522 = vsel %vm4506, %v4514, %v4498
      %v4523 = vsel %vm4507, %v4515, %v4499
      %v4524 = vmul.f32 %v4324, %v4516
      %v4525 = vmul.f32 %v4325, %v4517
      %v4526 = vmul.f32 %v4326, %v4518
      %v4527 = vmul.f32 %v4327, %v4519
      %v4528 = vmul.f32 %v4328, %v4520
      %v4529 = vmul.f32 %v4329, %v4521
      %v4530 = vmul.f32 %v4330, %v4522
      %v4531 = vmul.f32 %v4331, %v4523
      %4532 = vrot.lane.b32.xlu0 %v4524, 33
      %v4533 = vpop.permute.xlu0 %4532
      %4534 = vrot.lane.b32.xlu0 %v4525, 33
      %v4535 = vpop.permute.xlu0 %4534
      %4536 = vrot.lane.b32.xlu0 %v4526, 33
      %v4537 = vpop.permute.xlu0 %4536
      %4538 = vrot.lane.b32.xlu0 %v4527, 33
      %v4539 = vpop.permute.xlu0 %4538
      %4540 = vrot.lane.b32.xlu0 %v4528, 33
      %v4541 = vpop.permute.xlu0 %4540
      %4542 = vrot.lane.b32.xlu0 %v4529, 33
      %v4543 = vpop.permute.xlu0 %4542
      %4544 = vrot.lane.b32.xlu0 %v4530, 33
      %v4545 = vpop.permute.xlu0 %4544
      %4546 = vrot.lane.b32.xlu0 %v4531, 33
      %v4547 = vpop.permute.xlu0 %4546
      %v4548 = vsel %vm512, %v4545, %v4547
      %v4549 = vsel %vm512, %v4543, %v4545
      %v4550 = vsel %vm512, %v4541, %v4543
      %v4551 = vsel %vm512, %v4539, %v4541
      %v4552 = vsel %vm512, %v4537, %v4539
      %v4553 = vsel %vm512, %v4535, %v4537
      %v4554 = vsel %vm512, %v4533, %v4535
      %v4555 = vsel %vm512, %v4547, %v4533
      %v4556 = vld [vmem:[%s2] sm:$0xf]
      %v4557 = vld [vmem:[%s2 + $0x8] sm:$0xf]
      %v4558 = vld [vmem:[%s2 + $0x10] sm:$0xf]
      %v4559 = vld [vmem:[%s2 + $0x18] sm:$0xf]
      %v4560 = vld [vmem:[%s2 + $0x20] sm:$0xf]
      %v4561 = vld [vmem:[%s2 + $0x28] sm:$0xf]
      %v4562 = vld [vmem:[%s2 + $0x30] sm:$0xf]
      %v4563 = vld [vmem:[%s2 + $0x38] sm:$0xf]
      %v4564 = vmul.f32 %v4555, %v4556
      %v4565 = vmul.f32 %v4554, %v4557
      %v4566 = vmul.f32 %v4553, %v4558
      %v4567 = vmul.f32 %v4552, %v4559
      %v4568 = vmul.f32 %v4551, %v4560
      %v4569 = vmul.f32 %v4550, %v4561
      %v4570 = vmul.f32 %v4549, %v4562
      %v4571 = vmul.f32 %v4548, %v4563
      %v4572 = vpack.c.bf16 %v4564, %v4564
      %v4573 = vpack.c.bf16 %v4565, %v4565
      %v4574 = vpack.c.bf16 %v4566, %v4566
      %v4575 = vpack.c.bf16 %v4567, %v4567
      %v4576 = vpack.c.bf16 %v4568, %v4568
      %v4577 = vpack.c.bf16 %v4569, %v4569
      %v4578 = vpack.c.bf16 %v4570, %v4570
      %v4579 = vpack.c.bf16 %v4571, %v4571
      %v4588 = vunpack.c.l.b16 %v4572
      %v4589 = vunpack.c.l.b16 %v4573
      %v4590 = vunpack.c.l.b16 %v4574
      %v4591 = vunpack.c.l.b16 %v4575
      %v4592 = vunpack.c.l.b16 %v4576
      %v4593 = vunpack.c.l.b16 %v4577
      %v4594 = vunpack.c.l.b16 %v4578
      %v4595 = vunpack.c.l.b16 %v4579
      %v4596 = vpack.c.b16 %v4589, %v4588
      %v4597 = vpack.c.b16 %v4591, %v4590
      %v4598 = vpack.c.b16 %v4593, %v4592
      %v4599 = vpack.c.b16 %v4595, %v4594
      %4604 = vst [vmem:[#allocation2] sm:$0x33] %v4596
      %4605 = vst [vmem:[#allocation2 + $0x8] sm:$0x33] %v4597
      %4606 = vst [vmem:[#allocation2 + $0x10] sm:$0x33] %v4598
      %4607 = vst [vmem:[#allocation2 + $0x18] sm:$0x33] %v4599
      %4608 = vrot.lane.b32.xlu0 %v4524, 32
      %v4609 = vpop.permute.xlu0 %4608
      %4610 = vrot.lane.b32.xlu0 %v4525, 32
      %v4611 = vpop.permute.xlu0 %4610
      %4612 = vrot.lane.b32.xlu0 %v4526, 32
      %v4613 = vpop.permute.xlu0 %4612
      %4614 = vrot.lane.b32.xlu0 %v4527, 32
      %v4615 = vpop.permute.xlu0 %4614
      %4616 = vrot.lane.b32.xlu0 %v4528, 32
      %v4617 = vpop.permute.xlu0 %4616
      %4618 = vrot.lane.b32.xlu0 %v4529, 32
      %v4619 = vpop.permute.xlu0 %4618
      %4620 = vrot.lane.b32.xlu0 %v4530, 32
      %v4621 = vpop.permute.xlu0 %4620
      %4622 = vrot.lane.b32.xlu0 %v4531, 32
      %v4623 = vpop.permute.xlu0 %4622
      %v4624 = vsel %vm589, %v4621, %v4623
      %v4625 = vsel %vm589, %v4619, %v4621
      %v4626 = vsel %vm589, %v4617, %v4619
      %v4627 = vsel %vm589, %v4615, %v4617
      %v4628 = vsel %vm589, %v4613, %v4615
      %v4629 = vsel %vm589, %v4611, %v4613
      %v4630 = vsel %vm589, %v4609, %v4611
      %v4631 = vsel %vm589, %v4623, %v4609
      %v4632 = vld [vmem:[%s2 + $0x40] sm:$0xf]
      %v4633 = vld [vmem:[%s2 + $0x48] sm:$0xf]
      %v4634 = vld [vmem:[%s2 + $0x50] sm:$0xf]
      %v4635 = vld [vmem:[%s2 + $0x58] sm:$0xf]
      %v4636 = vld [vmem:[%s2 + $0x60] sm:$0xf]
      %v4637 = vld [vmem:[%s2 + $0x68] sm:$0xf]
      %v4638 = vld [vmem:[%s2 + $0x70] sm:$0xf]
      %v4639 = vld [vmem:[%s2 + $0x78] sm:$0xf]
      %v4640 = vmul.f32 %v4631, %v4632
      %v4641 = vmul.f32 %v4630, %v4633
      %v4642 = vmul.f32 %v4629, %v4634
      %v4643 = vmul.f32 %v4628, %v4635
      %v4644 = vmul.f32 %v4627, %v4636
      %v4645 = vmul.f32 %v4626, %v4637
      %v4646 = vmul.f32 %v4625, %v4638
      %v4647 = vmul.f32 %v4624, %v4639
      %v4648 = vpack.c.bf16 %v4640, %v4640
      %v4649 = vpack.c.bf16 %v4641, %v4641
      %v4650 = vpack.c.bf16 %v4642, %v4642
      %v4651 = vpack.c.bf16 %v4643, %v4643
      %v4652 = vpack.c.bf16 %v4644, %v4644
      %v4653 = vpack.c.bf16 %v4645, %v4645
      %v4654 = vpack.c.bf16 %v4646, %v4646
      %v4655 = vpack.c.bf16 %v4647, %v4647
      %v4664 = vunpack.c.l.b16 %v4648
      %v4665 = vunpack.c.l.b16 %v4649
      %v4666 = vunpack.c.l.b16 %v4650
      %v4667 = vunpack.c.l.b16 %v4651
      %v4668 = vunpack.c.l.b16 %v4652
      %v4669 = vunpack.c.l.b16 %v4653
      %v4670 = vunpack.c.l.b16 %v4654
      %v4671 = vunpack.c.l.b16 %v4655
      %v4672 = vpack.c.b16 %v4665, %v4664
      %v4673 = vpack.c.b16 %v4667, %v4666
      %v4674 = vpack.c.b16 %v4669, %v4668
      %v4675 = vpack.c.b16 %v4671, %v4670
      %4680 = vst [vmem:[#allocation2 + $0x20] sm:$0x33] %v4672
      %4681 = vst [vmem:[#allocation2 + $0x28] sm:$0x33] %v4673
      %4682 = vst [vmem:[#allocation2 + $0x30] sm:$0x33] %v4674
      %4683 = vst [vmem:[#allocation2 + $0x38] sm:$0x33] %v4675
      %4684 = vrot.lane.b32.xlu0 %v4524, 31
      %v4685 = vpop.permute.xlu0 %4684
      %4686 = vrot.lane.b32.xlu0 %v4525, 31
      %v4687 = vpop.permute.xlu0 %4686
      %4688 = vrot.lane.b32.xlu0 %v4526, 31
      %v4689 = vpop.permute.xlu0 %4688
      %4690 = vrot.lane.b32.xlu0 %v4527, 31
      %v4691 = vpop.permute.xlu0 %4690
      %4692 = vrot.lane.b32.xlu0 %v4528, 31
      %v4693 = vpop.permute.xlu0 %4692
      %4694 = vrot.lane.b32.xlu0 %v4529, 31
      %v4695 = vpop.permute.xlu0 %4694
      %4696 = vrot.lane.b32.xlu0 %v4530, 31
      %v4697 = vpop.permute.xlu0 %4696
      %4698 = vrot.lane.b32.xlu0 %v4531, 31
      %v4699 = vpop.permute.xlu0 %4698
      %v4700 = vsel %vm666, %v4697, %v4699
      %v4701 = vsel %vm666, %v4695, %v4697
      %v4702 = vsel %vm666, %v4693, %v4695
      %v4703 = vsel %vm666, %v4691, %v4693
      %v4704 = vsel %vm666, %v4689, %v4691
      %v4705 = vsel %vm666, %v4687, %v4689
      %v4706 = vsel %vm666, %v4685, %v4687
      %v4707 = vsel %vm666, %v4699, %v4685
      %v4708 = vld [vmem:[%s2 + $0x80] sm:$0xf]
      %v4709 = vld [vmem:[%s2 + $0x88] sm:$0xf]
      %v4710 = vld [vmem:[%s2 + $0x90] sm:$0xf]
      %v4711 = vld [vmem:[%s2 + $0x98] sm:$0xf]
      %v4712 = vld [vmem:[%s2 + $0xa0] sm:$0xf]
      %v4713 = vld [vmem:[%s2 + $0xa8] sm:$0xf]
      %v4714 = vld [vmem:[%s2 + $0xb0] sm:$0xf]
      %v4715 = vld [vmem:[%s2 + $0xb8] sm:$0xf]
      %v4716 = vmul.f32 %v4707, %v4708
      %v4717 = vmul.f32 %v4706, %v4709
      %v4718 = vmul.f32 %v4705, %v4710
      %v4719 = vmul.f32 %v4704, %v4711
      %v4720 = vmul.f32 %v4703, %v4712
      %v4721 = vmul.f32 %v4702, %v4713
      %v4722 = vmul.f32 %v4701, %v4714
      %v4723 = vmul.f32 %v4700, %v4715
      %v4724 = vpack.c.bf16 %v4716, %v4716
      %v4725 = vpack.c.bf16 %v4717, %v4717
      %v4726 = vpack.c.bf16 %v4718, %v4718
      %v4727 = vpack.c.bf16 %v4719, %v4719
      %v4728 = vpack.c.bf16 %v4720, %v4720
      %v4729 = vpack.c.bf16 %v4721, %v4721
      %v4730 = vpack.c.bf16 %v4722, %v4722
      %v4731 = vpack.c.bf16 %v4723, %v4723
      %v4740 = vunpack.c.l.b16 %v4724
      %v4741 = vunpack.c.l.b16 %v4725
      %v4742 = vunpack.c.l.b16 %v4726
      %v4743 = vunpack.c.l.b16 %v4727
      %v4744 = vunpack.c.l.b16 %v4728
      %v4745 = vunpack.c.l.b16 %v4729
      %v4746 = vunpack.c.l.b16 %v4730
      %v4747 = vunpack.c.l.b16 %v4731
      %v4748 = vpack.c.b16 %v4741, %v4740
      %v4749 = vpack.c.b16 %v4743, %v4742
      %v4750 = vpack.c.b16 %v4745, %v4744
      %v4751 = vpack.c.b16 %v4747, %v4746
      %4756 = vst [vmem:[#allocation2 + $0x40] sm:$0x33] %v4748
      %4757 = vst [vmem:[#allocation2 + $0x48] sm:$0x33] %v4749
      %4758 = vst [vmem:[#allocation2 + $0x50] sm:$0x33] %v4750
      %4759 = vst [vmem:[#allocation2 + $0x58] sm:$0x33] %v4751
      %4760 = vrot.lane.b32.xlu0 %v4524, 1
      %v4761 = vpop.permute.xlu0 %4760
      %4762 = vrot.lane.b32.xlu0 %v4525, 1
      %v4763 = vpop.permute.xlu0 %4762
      %4764 = vrot.lane.b32.xlu0 %v4526, 1
      %v4765 = vpop.permute.xlu0 %4764
      %4766 = vrot.lane.b32.xlu0 %v4527, 1
      %v4767 = vpop.permute.xlu0 %4766
      %4768 = vrot.lane.b32.xlu0 %v4528, 1
      %v4769 = vpop.permute.xlu0 %4768
      %4770 = vrot.lane.b32.xlu0 %v4529, 1
      %v4771 = vpop.permute.xlu0 %4770
      %4772 = vrot.lane.b32.xlu0 %v4530, 1
      %v4773 = vpop.permute.xlu0 %4772
      %4774 = vrot.lane.b32.xlu0 %v4531, 1
      %v4775 = vpop.permute.xlu0 %4774
      %v4776 = vsel %vm743, %v4773, %v4775
      %v4777 = vsel %vm743, %v4771, %v4773
      %v4778 = vsel %vm743, %v4769, %v4771
      %v4779 = vsel %vm743, %v4767, %v4769
      %v4780 = vsel %vm743, %v4765, %v4767
      %v4781 = vsel %vm743, %v4763, %v4765
      %v4782 = vsel %vm743, %v4761, %v4763
      %v4783 = vsel %vm743, %v4775, %v4761
      %v4784 = vld [vmem:[%s2 + $0xc0] sm:$0xf]
      %v4785 = vld [vmem:[%s2 + $0xc8] sm:$0xf]
      %v4786 = vld [vmem:[%s2 + $0xd0] sm:$0xf]
      %v4787 = vld [vmem:[%s2 + $0xd8] sm:$0xf]
      %v4788 = vld [vmem:[%s2 + $0xe0] sm:$0xf]
      %v4789 = vld [vmem:[%s2 + $0xe8] sm:$0xf]
      %v4790 = vld [vmem:[%s2 + $0xf0] sm:$0xf]
      %v4791 = vld [vmem:[%s2 + $0xf8] sm:$0xf]
      %v4792 = vmul.f32 %v4783, %v4784
      %v4793 = vmul.f32 %v4782, %v4785
      %v4794 = vmul.f32 %v4781, %v4786
      %v4795 = vmul.f32 %v4780, %v4787
      %v4796 = vmul.f32 %v4779, %v4788
      %v4797 = vmul.f32 %v4778, %v4789
      %v4798 = vmul.f32 %v4777, %v4790
      %v4799 = vmul.f32 %v4776, %v4791
      %v4800 = vpack.c.bf16 %v4792, %v4792
      %v4801 = vpack.c.bf16 %v4793, %v4793
      %v4802 = vpack.c.bf16 %v4794, %v4794
      %v4803 = vpack.c.bf16 %v4795, %v4795
      %v4804 = vpack.c.bf16 %v4796, %v4796
      %v4805 = vpack.c.bf16 %v4797, %v4797
      %v4806 = vpack.c.bf16 %v4798, %v4798
      %v4807 = vpack.c.bf16 %v4799, %v4799
      %v4816 = vunpack.c.l.b16 %v4800
      %v4817 = vunpack.c.l.b16 %v4801
      %v4818 = vunpack.c.l.b16 %v4802
      %v4819 = vunpack.c.l.b16 %v4803
      %v4820 = vunpack.c.l.b16 %v4804
      %v4821 = vunpack.c.l.b16 %v4805
      %v4822 = vunpack.c.l.b16 %v4806
      %v4823 = vunpack.c.l.b16 %v4807
      %v4824 = vpack.c.b16 %v4817, %v4816
      %v4825 = vpack.c.b16 %v4819, %v4818
      %v4826 = vpack.c.b16 %v4821, %v4820
      %v4827 = vpack.c.b16 %v4823, %v4822
      %4832 = vst [vmem:[#allocation2 + $0x60] sm:$0x33] %v4824
      %4833 = vst [vmem:[#allocation2 + $0x68] sm:$0x33] %v4825
      %4834 = vst [vmem:[#allocation2 + $0x70] sm:$0x33] %v4826
      %4835 = vst [vmem:[#allocation2 + $0x78] sm:$0x33] %v4827
      %v4836 = vpack.c.bf16 %v4524, %v4524
      %v4837 = vpack.c.bf16 %v4525, %v4525
      %v4838 = vpack.c.bf16 %v4526, %v4526
      %v4839 = vpack.c.bf16 %v4527, %v4527
      %v4840 = vpack.c.bf16 %v4528, %v4528
      %v4841 = vpack.c.bf16 %v4529, %v4529
      %v4842 = vpack.c.bf16 %v4530, %v4530
      %v4843 = vpack.c.bf16 %v4531, %v4531
      %v4852 = vunpack.c.l.b16 %v4836
      %v4853 = vunpack.c.l.b16 %v4837
      %v4854 = vunpack.c.l.b16 %v4838
      %v4855 = vunpack.c.l.b16 %v4839
      %v4856 = vunpack.c.l.b16 %v4840
      %v4857 = vunpack.c.l.b16 %v4841
      %v4858 = vunpack.c.l.b16 %v4842
      %v4859 = vunpack.c.l.b16 %v4843
      %v4860 = vpack.c.b16 %v4853, %v4852
      %v4861 = vpack.c.b16 %v4855, %v4854
      %v4862 = vpack.c.b16 %v4857, %v4856
      %v4863 = vpack.c.b16 %v4859, %v4858
      %4868 = vst [vmem:[#allocation2 + $0x80] sm:$0x33] %v4860
      %4869 = vst [vmem:[#allocation2 + $0x88] sm:$0x33] %v4861
      %4870 = vst [vmem:[#allocation2 + $0x90] sm:$0x33] %v4862
      %4871 = vst [vmem:[#allocation2 + $0x98] sm:$0x33] %v4863
      %4872 = vrot.lane.b32.xlu0 %v4524, 127
      %v4873 = vpop.permute.xlu0 %4872
      %4874 = vrot.lane.b32.xlu0 %v4525, 127
      %v4875 = vpop.permute.xlu0 %4874
      %4876 = vrot.lane.b32.xlu0 %v4526, 127
      %v4877 = vpop.permute.xlu0 %4876
      %4878 = vrot.lane.b32.xlu0 %v4527, 127
      %v4879 = vpop.permute.xlu0 %4878
      %4880 = vrot.lane.b32.xlu0 %v4528, 127
      %v4881 = vpop.permute.xlu0 %4880
      %4882 = vrot.lane.b32.xlu0 %v4529, 127
      %v4883 = vpop.permute.xlu0 %4882
      %4884 = vrot.lane.b32.xlu0 %v4530, 127
      %v4885 = vpop.permute.xlu0 %4884
      %4886 = vrot.lane.b32.xlu0 %v4531, 127
      %v4887 = vpop.permute.xlu0 %4886
      %v4888 = vsel %vm856, %v4885, %v4887
      %v4889 = vsel %vm856, %v4883, %v4885
      %v4890 = vsel %vm856, %v4881, %v4883
      %v4891 = vsel %vm856, %v4879, %v4881
      %v4892 = vsel %vm856, %v4877, %v4879
      %v4893 = vsel %vm856, %v4875, %v4877
      %v4894 = vsel %vm856, %v4873, %v4875
      %v4895 = vsel %vm856, %v4887, %v4873
      %v4896 = vld [vmem:[%s2 + $0x140] sm:$0xf]
      %v4897 = vld [vmem:[%s2 + $0x148] sm:$0xf]
      %v4898 = vld [vmem:[%s2 + $0x150] sm:$0xf]
      %v4899 = vld [vmem:[%s2 + $0x158] sm:$0xf]
      %v4900 = vld [vmem:[%s2 + $0x160] sm:$0xf]
      %v4901 = vld [vmem:[%s2 + $0x168] sm:$0xf]
      %v4902 = vld [vmem:[%s2 + $0x170] sm:$0xf]
      %v4903 = vld [vmem:[%s2 + $0x178] sm:$0xf]
      %v4904 = vmul.f32 %v4894, %v4896
      %v4905 = vmul.f32 %v4893, %v4897
      %v4906 = vmul.f32 %v4892, %v4898
      %v4907 = vmul.f32 %v4891, %v4899
      %v4908 = vmul.f32 %v4890, %v4900
      %v4909 = vmul.f32 %v4889, %v4901
      %v4910 = vmul.f32 %v4888, %v4902
      %v4911 = vmul.f32 %v4895, %v4903
      %v4912 = vpack.c.bf16 %v4904, %v4904
      %v4913 = vpack.c.bf16 %v4905, %v4905
      %v4914 = vpack.c.bf16 %v4906, %v4906
      %v4915 = vpack.c.bf16 %v4907, %v4907
      %v4916 = vpack.c.bf16 %v4908, %v4908
      %v4917 = vpack.c.bf16 %v4909, %v4909
      %v4918 = vpack.c.bf16 %v4910, %v4910
      %v4919 = vpack.c.bf16 %v4911, %v4911
      %v4928 = vunpack.c.l.b16 %v4912
      %v4929 = vunpack.c.l.b16 %v4913
      %v4930 = vunpack.c.l.b16 %v4914
      %v4931 = vunpack.c.l.b16 %v4915
      %v4932 = vunpack.c.l.b16 %v4916
      %v4933 = vunpack.c.l.b16 %v4917
      %v4934 = vunpack.c.l.b16 %v4918
      %v4935 = vunpack.c.l.b16 %v4919
      %v4936 = vpack.c.b16 %v4929, %v4928
      %v4937 = vpack.c.b16 %v4931, %v4930
      %v4938 = vpack.c.b16 %v4933, %v4932
      %v4939 = vpack.c.b16 %v4935, %v4934
      %4944 = vst [vmem:[#allocation2 + $0xa0] sm:$0x33] %v4936
      %4945 = vst [vmem:[#allocation2 + $0xa8] sm:$0x33] %v4937
      %4946 = vst [vmem:[#allocation2 + $0xb0] sm:$0x33] %v4938
      %4947 = vst [vmem:[#allocation2 + $0xb8] sm:$0x33] %v4939
      %4948 = vrot.lane.b32.xlu0 %v4524, 97
      %v4949 = vpop.permute.xlu0 %4948
      %4950 = vrot.lane.b32.xlu0 %v4525, 97
      %v4951 = vpop.permute.xlu0 %4950
      %4952 = vrot.lane.b32.xlu0 %v4526, 97
      %v4953 = vpop.permute.xlu0 %4952
      %4954 = vrot.lane.b32.xlu0 %v4527, 97
      %v4955 = vpop.permute.xlu0 %4954
      %4956 = vrot.lane.b32.xlu0 %v4528, 97
      %v4957 = vpop.permute.xlu0 %4956
      %4958 = vrot.lane.b32.xlu0 %v4529, 97
      %v4959 = vpop.permute.xlu0 %4958
      %4960 = vrot.lane.b32.xlu0 %v4530, 97
      %v4961 = vpop.permute.xlu0 %4960
      %4962 = vrot.lane.b32.xlu0 %v4531, 97
      %v4963 = vpop.permute.xlu0 %4962
      %v4964 = vsel %vm933, %v4961, %v4963
      %v4965 = vsel %vm933, %v4959, %v4961
      %v4966 = vsel %vm933, %v4957, %v4959
      %v4967 = vsel %vm933, %v4955, %v4957
      %v4968 = vsel %vm933, %v4953, %v4955
      %v4969 = vsel %vm933, %v4951, %v4953
      %v4970 = vsel %vm933, %v4949, %v4951
      %v4971 = vsel %vm933, %v4963, %v4949
      %v4972 = vld [vmem:[%s2 + $0x180] sm:$0xf]
      %v4973 = vld [vmem:[%s2 + $0x188] sm:$0xf]
      %v4974 = vld [vmem:[%s2 + $0x190] sm:$0xf]
      %v4975 = vld [vmem:[%s2 + $0x198] sm:$0xf]
      %v4976 = vld [vmem:[%s2 + $0x1a0] sm:$0xf]
      %v4977 = vld [vmem:[%s2 + $0x1a8] sm:$0xf]
      %v4978 = vld [vmem:[%s2 + $0x1b0] sm:$0xf]
      %v4979 = vld [vmem:[%s2 + $0x1b8] sm:$0xf]
      %v4980 = vmul.f32 %v4970, %v4972
      %v4981 = vmul.f32 %v4969, %v4973
      %v4982 = vmul.f32 %v4968, %v4974
      %v4983 = vmul.f32 %v4967, %v4975
      %v4984 = vmul.f32 %v4966, %v4976
      %v4985 = vmul.f32 %v4965, %v4977
      %v4986 = vmul.f32 %v4964, %v4978
      %v4987 = vmul.f32 %v4971, %v4979
      %v4988 = vpack.c.bf16 %v4980, %v4980
      %v4989 = vpack.c.bf16 %v4981, %v4981
      %v4990 = vpack.c.bf16 %v4982, %v4982
      %v4991 = vpack.c.bf16 %v4983, %v4983
      %v4992 = vpack.c.bf16 %v4984, %v4984
      %v4993 = vpack.c.bf16 %v4985, %v4985
      %v4994 = vpack.c.bf16 %v4986, %v4986
      %v4995 = vpack.c.bf16 %v4987, %v4987
      %v5004 = vunpack.c.l.b16 %v4988
      %v5005 = vunpack.c.l.b16 %v4989
      %v5006 = vunpack.c.l.b16 %v4990
      %v5007 = vunpack.c.l.b16 %v4991
      %v5008 = vunpack.c.l.b16 %v4992
      %v5009 = vunpack.c.l.b16 %v4993
      %v5010 = vunpack.c.l.b16 %v4994
      %v5011 = vunpack.c.l.b16 %v4995
      %v5012 = vpack.c.b16 %v5005, %v5004
      %v5013 = vpack.c.b16 %v5007, %v5006
      %v5014 = vpack.c.b16 %v5009, %v5008
      %v5015 = vpack.c.b16 %v5011, %v5010
      %5020 = vst [vmem:[#allocation2 + $0xc0] sm:$0x33] %v5012
      %5021 = vst [vmem:[#allocation2 + $0xc8] sm:$0x33] %v5013
      %5022 = vst [vmem:[#allocation2 + $0xd0] sm:$0x33] %v5014
      %5023 = vst [vmem:[#allocation2 + $0xd8] sm:$0x33] %v5015
      %5024 = vrot.lane.b32.xlu0 %v4524, 96
      %v5025 = vpop.permute.xlu0 %5024
      %5026 = vrot.lane.b32.xlu0 %v4525, 96
      %v5027 = vpop.permute.xlu0 %5026
      %5028 = vrot.lane.b32.xlu0 %v4526, 96
      %v5029 = vpop.permute.xlu0 %5028
      %5030 = vrot.lane.b32.xlu0 %v4527, 96
      %v5031 = vpop.permute.xlu0 %5030
      %5032 = vrot.lane.b32.xlu0 %v4528, 96
      %v5033 = vpop.permute.xlu0 %5032
      %5034 = vrot.lane.b32.xlu0 %v4529, 96
      %v5035 = vpop.permute.xlu0 %5034
      %5036 = vrot.lane.b32.xlu0 %v4530, 96
      %v5037 = vpop.permute.xlu0 %5036
      %5038 = vrot.lane.b32.xlu0 %v4531, 96
      %v5039 = vpop.permute.xlu0 %5038
      %v5040 = vsel %vm1010, %v5037, %v5039
      %v5041 = vsel %vm1010, %v5035, %v5037
      %v5042 = vsel %vm1010, %v5033, %v5035
      %v5043 = vsel %vm1010, %v5031, %v5033
      %v5044 = vsel %vm1010, %v5029, %v5031
      %v5045 = vsel %vm1010, %v5027, %v5029
      %v5046 = vsel %vm1010, %v5025, %v5027
      %v5047 = vsel %vm1010, %v5039, %v5025
      %v5048 = vld [vmem:[%s2 + $0x1c0] sm:$0xf]
      %v5049 = vld [vmem:[%s2 + $0x1c8] sm:$0xf]
      %v5050 = vld [vmem:[%s2 + $0x1d0] sm:$0xf]
      %v5051 = vld [vmem:[%s2 + $0x1d8] sm:$0xf]
      %v5052 = vld [vmem:[%s2 + $0x1e0] sm:$0xf]
      %v5053 = vld [vmem:[%s2 + $0x1e8] sm:$0xf]
      %v5054 = vld [vmem:[%s2 + $0x1f0] sm:$0xf]
      %v5055 = vld [vmem:[%s2 + $0x1f8] sm:$0xf]
      %v5056 = vmul.f32 %v5046, %v5048
      %v5057 = vmul.f32 %v5045, %v5049
      %v5058 = vmul.f32 %v5044, %v5050
      %v5059 = vmul.f32 %v5043, %v5051
      %v5060 = vmul.f32 %v5042, %v5052
      %v5061 = vmul.f32 %v5041, %v5053
      %v5062 = vmul.f32 %v5040, %v5054
      %v5063 = vmul.f32 %v5047, %v5055
      %v5064 = vpack.c.bf16 %v5056, %v5056
      %v5065 = vpack.c.bf16 %v5057, %v5057
      %v5066 = vpack.c.bf16 %v5058, %v5058
      %v5067 = vpack.c.bf16 %v5059, %v5059
      %v5068 = vpack.c.bf16 %v5060, %v5060
      %v5069 = vpack.c.bf16 %v5061, %v5061
      %v5070 = vpack.c.bf16 %v5062, %v5062
      %v5071 = vpack.c.bf16 %v5063, %v5063
      %v5080 = vunpack.c.l.b16 %v5064
      %v5081 = vunpack.c.l.b16 %v5065
      %v5082 = vunpack.c.l.b16 %v5066
      %v5083 = vunpack.c.l.b16 %v5067
      %v5084 = vunpack.c.l.b16 %v5068
      %v5085 = vunpack.c.l.b16 %v5069
      %v5086 = vunpack.c.l.b16 %v5070
      %v5087 = vunpack.c.l.b16 %v5071
      %v5088 = vpack.c.b16 %v5081, %v5080
      %v5089 = vpack.c.b16 %v5083, %v5082
      %v5090 = vpack.c.b16 %v5085, %v5084
      %v5091 = vpack.c.b16 %v5087, %v5086
      %5096 = vst [vmem:[#allocation2 + $0xe0] sm:$0x33] %v5088
      %5097 = vst [vmem:[#allocation2 + $0xe8] sm:$0x33] %v5089
      %5098 = vst [vmem:[#allocation2 + $0xf0] sm:$0x33] %v5090
      %5099 = vst [vmem:[#allocation2 + $0xf8] sm:$0x33] %v5091
      %5100 = vrot.lane.b32.xlu0 %v4524, 95
      %v5101 = vpop.permute.xlu0 %5100
      %5102 = vrot.lane.b32.xlu0 %v4525, 95
      %v5103 = vpop.permute.xlu0 %5102
      %5104 = vrot.lane.b32.xlu0 %v4526, 95
      %v5105 = vpop.permute.xlu0 %5104
      %5106 = vrot.lane.b32.xlu0 %v4527, 95
      %v5107 = vpop.permute.xlu0 %5106
      %5108 = vrot.lane.b32.xlu0 %v4528, 95
      %v5109 = vpop.permute.xlu0 %5108
      %5110 = vrot.lane.b32.xlu0 %v4529, 95
      %v5111 = vpop.permute.xlu0 %5110
      %5112 = vrot.lane.b32.xlu0 %v4530, 95
      %v5113 = vpop.permute.xlu0 %5112
      %5114 = vrot.lane.b32.xlu0 %v4531, 95
      %v5115 = vpop.permute.xlu0 %5114
      %v5116 = vsel %vm1087, %v5113, %v5115
      %v5117 = vsel %vm1087, %v5111, %v5113
      %v5118 = vsel %vm1087, %v5109, %v5111
      %v5119 = vsel %vm1087, %v5107, %v5109
      %v5120 = vsel %vm1087, %v5105, %v5107
      %v5121 = vsel %vm1087, %v5103, %v5105
      %v5122 = vsel %vm1087, %v5101, %v5103
      %v5123 = vsel %vm1087, %v5115, %v5101
      %v5124 = vld [vmem:[%s2 + $0x200] sm:$0xf]
      %v5125 = vld [vmem:[%s2 + $0x208] sm:$0xf]
      %v5126 = vld [vmem:[%s2 + $0x210] sm:$0xf]
      %v5127 = vld [vmem:[%s2 + $0x218] sm:$0xf]
      %v5128 = vld [vmem:[%s2 + $0x220] sm:$0xf]
      %v5129 = vld [vmem:[%s2 + $0x228] sm:$0xf]
      %v5130 = vld [vmem:[%s2 + $0x230] sm:$0xf]
      %v5131 = vld [vmem:[%s2 + $0x238] sm:$0xf]
      %v5132 = vmul.f32 %v5122, %v5124
      %v5133 = vmul.f32 %v5121, %v5125
      %v5134 = vmul.f32 %v5120, %v5126
      %v5135 = vmul.f32 %v5119, %v5127
      %v5136 = vmul.f32 %v5118, %v5128
      %v5137 = vmul.f32 %v5117, %v5129
      %v5138 = vmul.f32 %v5116, %v5130
      %v5139 = vmul.f32 %v5123, %v5131
      %v5140 = vpack.c.bf16 %v5132, %v5132
      %v5141 = vpack.c.bf16 %v5133, %v5133
      %v5142 = vpack.c.bf16 %v5134, %v5134
      %v5143 = vpack.c.bf16 %v5135, %v5135
      %v5144 = vpack.c.bf16 %v5136, %v5136
      %v5145 = vpack.c.bf16 %v5137, %v5137
      %v5146 = vpack.c.bf16 %v5138, %v5138
      %v5147 = vpack.c.bf16 %v5139, %v5139
      %v5156 = vunpack.c.l.b16 %v5140
      %v5157 = vunpack.c.l.b16 %v5141
      %v5158 = vunpack.c.l.b16 %v5142
      %v5159 = vunpack.c.l.b16 %v5143
      %v5160 = vunpack.c.l.b16 %v5144
      %v5161 = vunpack.c.l.b16 %v5145
      %v5162 = vunpack.c.l.b16 %v5146
      %v5163 = vunpack.c.l.b16 %v5147
      %v5164 = vpack.c.b16 %v5157, %v5156
      %v5165 = vpack.c.b16 %v5159, %v5158
      %v5166 = vpack.c.b16 %v5161, %v5160
      %v5167 = vpack.c.b16 %v5163, %v5162
      %5172 = vst [vmem:[#allocation2 + $0x100] sm:$0x33] %v5164
      %5173 = vst [vmem:[#allocation2 + $0x108] sm:$0x33] %v5165
      %5174 = vst [vmem:[#allocation2 + $0x110] sm:$0x33] %v5166
      %5175 = vst [vmem:[#allocation2 + $0x118] sm:$0x33] %v5167
      %v5176 = vld [vmem:[%s12] sm:$0x3]
      %v5177 = vld [vmem:[#allocation2] sm:$0xff]
      %v5178 = vld [vmem:[#allocation2 + $0x8] sm:$0xff]
      %v5179 = vld [vmem:[#allocation2 + $0x10] sm:$0xff]
      %v5180 = vld [vmem:[#allocation2 + $0x18] sm:$0xff]
      %v5181 = vld [vmem:[#allocation2 + $0x20] sm:$0xff]
      %v5182 = vld [vmem:[#allocation2 + $0x28] sm:$0xff]
      %v5183 = vld [vmem:[#allocation2 + $0x30] sm:$0xff]
      %v5184 = vld [vmem:[#allocation2 + $0x38] sm:$0xff]
      %v5185 = vld [vmem:[#allocation2 + $0x40] sm:$0xff]
      %v5186 = vld [vmem:[#allocation2 + $0x48] sm:$0xff]
      %v5187 = vld [vmem:[#allocation2 + $0x50] sm:$0xff]
      %v5188 = vld [vmem:[#allocation2 + $0x58] sm:$0xff]
      %v5189 = vld [vmem:[#allocation2 + $0x60] sm:$0xff]
      %v5190 = vld [vmem:[#allocation2 + $0x68] sm:$0xff]
      %v5191 = vld [vmem:[#allocation2 + $0x70] sm:$0xff]
      %v5192 = vld [vmem:[#allocation2 + $0x78] sm:$0xff]
      %v5193 = vld [vmem:[#allocation2 + $0x80] sm:$0xff]
      %v5194 = vld [vmem:[#allocation2 + $0x88] sm:$0xff]
      %v5195 = vld [vmem:[#allocation2 + $0x90] sm:$0xff]
      %v5196 = vld [vmem:[#allocation2 + $0x98] sm:$0xff]
      %v5197 = vld [vmem:[#allocation2 + $0xa0] sm:$0xff]
      %v5198 = vld [vmem:[#allocation2 + $0xa8] sm:$0xff]
      %v5199 = vld [vmem:[#allocation2 + $0xb0] sm:$0xff]
      %v5200 = vld [vmem:[#allocation2 + $0xb8] sm:$0xff]
      %v5201 = vld [vmem:[#allocation2 + $0xc0] sm:$0xff]
      %v5202 = vld [vmem:[#allocation2 + $0xc8] sm:$0xff]
      %v5203 = vld [vmem:[#allocation2 + $0xd0] sm:$0xff]
      %v5204 = vld [vmem:[#allocation2 + $0xd8] sm:$0xff]
      %v5205 = vld [vmem:[#allocation2 + $0xe0] sm:$0xff]
      %v5206 = vld [vmem:[#allocation2 + $0xe8] sm:$0xff]
      %v5207 = vld [vmem:[#allocation2 + $0xf0] sm:$0xff]
      %v5208 = vld [vmem:[#allocation2 + $0xf8] sm:$0xff]
      %v5209 = vld [vmem:[#allocation2 + $0x100] sm:$0xff]
      %v5210 = vld [vmem:[#allocation2 + $0x108] sm:$0xff]
      %v5211 = vld [vmem:[#allocation2 + $0x110] sm:$0xff]
      %v5212 = vld [vmem:[#allocation2 + $0x118] sm:$0xff]
      %v5249 = vunpack.c.l.b16 %v5177
      %v5250 = vunpack.c.h.b16 %v5177
      %v5251 = vunpack.c.l.b16 %v5178
      %v5252 = vunpack.c.h.b16 %v5178
      %v5253 = vunpack.c.l.b16 %v5179
      %v5254 = vunpack.c.h.b16 %v5179
      %v5255 = vunpack.c.l.b16 %v5180
      %v5256 = vunpack.c.h.b16 %v5180
      %v5257 = vunpack.c.l.b16 %v5181
      %v5258 = vunpack.c.h.b16 %v5181
      %v5259 = vunpack.c.l.b16 %v5182
      %v5260 = vunpack.c.h.b16 %v5182
      %v5261 = vunpack.c.l.b16 %v5183
      %v5262 = vunpack.c.h.b16 %v5183
      %v5263 = vunpack.c.l.b16 %v5184
      %v5264 = vunpack.c.h.b16 %v5184
      %v5265 = vunpack.c.l.b16 %v5185
      %v5266 = vunpack.c.h.b16 %v5185
      %v5267 = vunpack.c.l.b16 %v5186
      %v5268 = vunpack.c.h.b16 %v5186
      %v5269 = vunpack.c.l.b16 %v5187
      %v5270 = vunpack.c.h.b16 %v5187
      %v5271 = vunpack.c.l.b16 %v5188
      %v5272 = vunpack.c.h.b16 %v5188
      %v5273 = vunpack.c.l.b16 %v5189
      %v5274 = vunpack.c.h.b16 %v5189
      %v5275 = vunpack.c.l.b16 %v5190
      %v5276 = vunpack.c.h.b16 %v5190
      %v5277 = vunpack.c.l.b16 %v5191
      %v5278 = vunpack.c.h.b16 %v5191
      %v5279 = vunpack.c.l.b16 %v5192
      %v5280 = vunpack.c.h.b16 %v5192
      %v5281 = vunpack.c.l.b16 %v5193
      %v5282 = vunpack.c.h.b16 %v5193
      %v5283 = vunpack.c.l.b16 %v5194
      %v5284 = vunpack.c.h.b16 %v5194
      %v5285 = vunpack.c.l.b16 %v5195
      %v5286 = vunpack.c.h.b16 %v5195
      %v5287 = vunpack.c.l.b16 %v5196
      %v5288 = vunpack.c.h.b16 %v5196
      %v5289 = vunpack.c.l.b16 %v5197
      %v5290 = vunpack.c.h.b16 %v5197
      %v5291 = vunpack.c.l.b16 %v5198
      %v5292 = vunpack.c.h.b16 %v5198
      %v5293 = vunpack.c.l.b16 %v5199
      %v5294 = vunpack.c.h.b16 %v5199
      %v5295 = vunpack.c.l.b16 %v5200
      %v5296 = vunpack.c.h.b16 %v5200
      %v5297 = vunpack.c.l.b16 %v5201
      %v5298 = vunpack.c.h.b16 %v5201
      %v5299 = vunpack.c.l.b16 %v5202
      %v5300 = vunpack.c.h.b16 %v5202
      %v5301 = vunpack.c.l.b16 %v5203
      %v5302 = vunpack.c.h.b16 %v5203
      %v5303 = vunpack.c.l.b16 %v5204
      %v5304 = vunpack.c.h.b16 %v5204
      %v5305 = vunpack.c.l.b16 %v5205
      %v5306 = vunpack.c.h.b16 %v5205
      %v5307 = vunpack.c.l.b16 %v5206
      %v5308 = vunpack.c.h.b16 %v5206
      %v5309 = vunpack.c.l.b16 %v5207
      %v5310 = vunpack.c.h.b16 %v5207
      %v5311 = vunpack.c.l.b16 %v5208
      %v5312 = vunpack.c.h.b16 %v5208
      %v5313 = vunpack.c.l.b16 %v5209
      %v5314 = vunpack.c.h.b16 %v5209
      %v5315 = vunpack.c.l.b16 %v5210
      %v5316 = vunpack.c.h.b16 %v5210
      %v5317 = vunpack.c.l.b16 %v5211
      %v5318 = vunpack.c.h.b16 %v5211
      %v5319 = vunpack.c.l.b16 %v5212
      %v5320 = vunpack.c.h.b16 %v5212
      %v5321 = vpack.c.b16 %v5257, %v5249
      %v5322 = vpack.c.b16 %v5258, %v5250
      %v5323 = vpack.c.b16 %v5259, %v5251
      %v5324 = vpack.c.b16 %v5260, %v5252
      %v5325 = vpack.c.b16 %v5261, %v5253
      %v5326 = vpack.c.b16 %v5262, %v5254
      %v5327 = vpack.c.b16 %v5263, %v5255
      %v5328 = vpack.c.b16 %v5264, %v5256
      %v5329 = vpack.c.b16 %v5273, %v5265
      %v5330 = vpack.c.b16 %v5274, %v5266
      %v5331 = vpack.c.b16 %v5275, %v5267
      %v5332 = vpack.c.b16 %v5276, %v5268
      %v5333 = vpack.c.b16 %v5277, %v5269
      %v5334 = vpack.c.b16 %v5278, %v5270
      %v5335 = vpack.c.b16 %v5279, %v5271
      %v5336 = vpack.c.b16 %v5280, %v5272
      %v5337 = vpack.c.b16 %v5289, %v5281
      %v5338 = vpack.c.b16 %v5290, %v5282
      %v5339 = vpack.c.b16 %v5291, %v5283
      %v5340 = vpack.c.b16 %v5292, %v5284
      %v5341 = vpack.c.b16 %v5293, %v5285
      %v5342 = vpack.c.b16 %v5294, %v5286
      %v5343 = vpack.c.b16 %v5295, %v5287
      %v5344 = vpack.c.b16 %v5296, %v5288
      %v5345 = vpack.c.b16 %v5305, %v5297
      %v5346 = vpack.c.b16 %v5306, %v5298
      %v5347 = vpack.c.b16 %v5307, %v5299
      %v5348 = vpack.c.b16 %v5308, %v5300
      %v5349 = vpack.c.b16 %v5309, %v5301
      %v5350 = vpack.c.b16 %v5310, %v5302
      %v5351 = vpack.c.b16 %v5311, %v5303
      %v5352 = vpack.c.b16 %v5312, %v5304
      %v5353 = vpack.c.b16 %v5313, %v5313
      %v5354 = vpack.c.b16 %v5314, %v5314
      %v5355 = vpack.c.b16 %v5315, %v5315
      %v5356 = vpack.c.b16 %v5316, %v5316
      %v5357 = vpack.c.b16 %v5317, %v5317
      %v5358 = vpack.c.b16 %v5318, %v5318
      %v5359 = vpack.c.b16 %v5319, %v5319
      %v5360 = vpack.c.b16 %v5320, %v5320
      %v5394 = vsel %vm1365, %v5176, 0
      %v5397 = vsel %vm1369, %v5353, 0
      %v5400 = vsel %vm1369, %v5354, 0
      %v5403 = vsel %vm1369, %v5355, 0
      %v5406 = vsel %vm1369, %v5356, 0
      %v5409 = vsel %vm1369, %v5357, 0
      %v5412 = vsel %vm1369, %v5358, 0
      %v5415 = vsel %vm1369, %v5359, 0
      %v5418 = vsel %vm1369, %v5360, 0
      %5420 = vmatprep.subr.bf16.mxu0 0
      %5421 = vmatpush1.bf16.msra.mxu0 0
      %5422 = vmatprep.subr.bf16.mxu0 0
      %5423 = vmatpush1.bf16.msra.mxu0 0
      %5424 = vmatprep.subr.bf16.mxu0 0
      %5425 = vmatpush1.bf16.msra.mxu0 0
      %5426 = vmatprep.subr.bf16.mxu0 %v5400
      %5427 = vmatpush1.bf16.msra.mxu0 %v5397
      %5428 = vmatprep.subr.bf16.mxu0 %v5346
      %5429 = vmatpush1.bf16.msra.mxu0 %v5345
      %5430 = vmatprep.subr.bf16.mxu0 %v5338
      %5431 = vmatpush1.bf16.msra.mxu0 %v5337
      %5432 = vmatprep.subr.bf16.mxu0 %v5330
      %5433 = vmatpush1.bf16.msra.mxu0 %v5329
      %5434 = vmatprep.subr.bf16.mxu0 %v5322
      %5435 = vmatpush1.bf16.msra.mxu0 %v5321
      %5436 = vmatprep.subr.bf16.mxu0 0
      %5437 = vmatpush2.bf16.msra.mxu0 0
      %5438 = vmatprep.subr.bf16.mxu0 0
      %5439 = vmatpush2.bf16.msra.mxu0 0
      %5440 = vmatprep.subr.bf16.mxu0 0
      %5441 = vmatpush2.bf16.msra.mxu0 0
      %5442 = vmatprep.subr.bf16.mxu0 0
      %5443 = vmatpush2.bf16.msra.mxu0 0
      %5444 = vmatprep.subr.bf16.mxu0 0
      %5445 = vmatpush2.bf16.msra.mxu0 0
      %5446 = vmatprep.subr.bf16.mxu0 0
      %5447 = vmatpush2.bf16.msra.mxu0 0
      %5448 = vmatprep.subr.bf16.mxu0 0
      %5449 = vmatpush2.bf16.msra.mxu0 0
      %5450 = vmatprep.subr.bf16.mxu0 0
      %5451 = vmatpush2.bf16.msra.mxu0 0
      %5452 = vmatprep.mubr.bf16.mxu0 0
      %5453 = vmatmul.mubr.bf16.gmra.mxu0 %v5394
      %v5454 = vpop.f32.mrf.mxu0
      %v5455 = vadd.f32 0.0, %v5454
      %v5456 = vpop.f32.mrf.mxu0
      %v5457 = vadd.f32 0.0, %v5456
      %v5458 = vpop.f32.mrf.mxu0
      %v5459 = vpop.f32.mrf.mxu0
      %5460 = vdwg.mxu0
      %5461 = vmatprep.subr.bf16.mxu0 0
      %5462 = vmatpush1.bf16.msra.mxu0 0
      %5463 = vmatprep.subr.bf16.mxu0 0
      %5464 = vmatpush1.bf16.msra.mxu0 0
      %5465 = vmatprep.subr.bf16.mxu0 0
      %5466 = vmatpush1.bf16.msra.mxu0 0
      %5467 = vmatprep.subr.bf16.mxu0 %v5406
      %5468 = vmatpush1.bf16.msra.mxu0 %v5403
      %5469 = vmatprep.subr.bf16.mxu0 %v5348
      %5470 = vmatpush1.bf16.msra.mxu0 %v5347
      %5471 = vmatprep.subr.bf16.mxu0 %v5340
      %5472 = vmatpush1.bf16.msra.mxu0 %v5339
      %5473 = vmatprep.subr.bf16.mxu0 %v5332
      %5474 = vmatpush1.bf16.msra.mxu0 %v5331
      %5475 = vmatprep.subr.bf16.mxu0 %v5324
      %5476 = vmatpush1.bf16.msra.mxu0 %v5323
      %5477 = vmatprep.subr.bf16.mxu0 0
      %5478 = vmatpush2.bf16.msra.mxu0 0
      %5479 = vmatprep.subr.bf16.mxu0 0
      %5480 = vmatpush2.bf16.msra.mxu0 0
      %5481 = vmatprep.subr.bf16.mxu0 0
      %5482 = vmatpush2.bf16.msra.mxu0 0
      %5483 = vmatprep.subr.bf16.mxu0 0
      %5484 = vmatpush2.bf16.msra.mxu0 0
      %5485 = vmatprep.subr.bf16.mxu0 0
      %5486 = vmatpush2.bf16.msra.mxu0 0
      %5487 = vmatprep.subr.bf16.mxu0 0
      %5488 = vmatpush2.bf16.msra.mxu0 0
      %5489 = vmatprep.subr.bf16.mxu0 0
      %5490 = vmatpush2.bf16.msra.mxu0 0
      %5491 = vmatprep.subr.bf16.mxu0 0
      %5492 = vmatpush2.bf16.msra.mxu0 0
      %5493 = vmatprep.mubr.bf16.mxu0 0
      %5494 = vmatmul.mubr.bf16.gmra.mxu0 %v5394
      %v5495 = vpop.f32.mrf.mxu0
      %v5496 = vadd.f32 0.0, %v5495
      %v5497 = vpop.f32.mrf.mxu0
      %v5498 = vadd.f32 0.0, %v5497
      %v5499 = vpop.f32.mrf.mxu0
      %v5500 = vpop.f32.mrf.mxu0
      %5501 = vdwg.mxu0
      %5502 = vmatprep.subr.bf16.mxu0 0
      %5503 = vmatpush1.bf16.msra.mxu0 0
      %5504 = vmatprep.subr.bf16.mxu0 0
      %5505 = vmatpush1.bf16.msra.mxu0 0
      %5506 = vmatprep.subr.bf16.mxu0 0
      %5507 = vmatpush1.bf16.msra.mxu0 0
      %5508 = vmatprep.subr.bf16.mxu0 %v5412
      %5509 = vmatpush1.bf16.msra.mxu0 %v5409
      %5510 = vmatprep.subr.bf16.mxu0 %v5350
      %5511 = vmatpush1.bf16.msra.mxu0 %v5349
      %5512 = vmatprep.subr.bf16.mxu0 %v5342
      %5513 = vmatpush1.bf16.msra.mxu0 %v5341
      %5514 = vmatprep.subr.bf16.mxu0 %v5334
      %5515 = vmatpush1.bf16.msra.mxu0 %v5333
      %5516 = vmatprep.subr.bf16.mxu0 %v5326
      %5517 = vmatpush1.bf16.msra.mxu0 %v5325
      %5518 = vmatprep.subr.bf16.mxu0 0
      %5519 = vmatpush2.bf16.msra.mxu0 0
      %5520 = vmatprep.subr.bf16.mxu0 0
      %5521 = vmatpush2.bf16.msra.mxu0 0
      %5522 = vmatprep.subr.bf16.mxu0 0
      %5523 = vmatpush2.bf16.msra.mxu0 0
      %5524 = vmatprep.subr.bf16.mxu0 0
      %5525 = vmatpush2.bf16.msra.mxu0 0
      %5526 = vmatprep.subr.bf16.mxu0 0
      %5527 = vmatpush2.bf16.msra.mxu0 0
      %5528 = vmatprep.subr.bf16.mxu0 0
      %5529 = vmatpush2.bf16.msra.mxu0 0
      %5530 = vmatprep.subr.bf16.mxu0 0
      %5531 = vmatpush2.bf16.msra.mxu0 0
      %5532 = vmatprep.subr.bf16.mxu0 0
      %5533 = vmatpush2.bf16.msra.mxu0 0
      %5534 = vmatprep.mubr.bf16.mxu0 0
      %5535 = vmatmul.mubr.bf16.gmra.mxu0 %v5394
      %v5536 = vpop.f32.mrf.mxu0
      %v5537 = vadd.f32 0.0, %v5536
      %v5538 = vpop.f32.mrf.mxu0
      %v5539 = vadd.f32 0.0, %v5538
      %v5540 = vpop.f32.mrf.mxu0
      %v5541 = vpop.f32.mrf.mxu0
      %5542 = vdwg.mxu0
      %5543 = vmatprep.subr.bf16.mxu0 0
      %5544 = vmatpush1.bf16.msra.mxu0 0
      %5545 = vmatprep.subr.bf16.mxu0 0
      %5546 = vmatpush1.bf16.msra.mxu0 0
      %5547 = vmatprep.subr.bf16.mxu0 0
      %5548 = vmatpush1.bf16.msra.mxu0 0
      %5549 = vmatprep.subr.bf16.mxu0 %v5418
      %5550 = vmatpush1.bf16.msra.mxu0 %v5415
      %5551 = vmatprep.subr.bf16.mxu0 %v5352
      %5552 = vmatpush1.bf16.msra.mxu0 %v5351
      %5553 = vmatprep.subr.bf16.mxu0 %v5344
      %5554 = vmatpush1.bf16.msra.mxu0 %v5343
      %5555 = vmatprep.subr.bf16.mxu0 %v5336
      %5556 = vmatpush1.bf16.msra.mxu0 %v5335
      %5557 = vmatprep.subr.bf16.mxu0 %v5328
      %5558 = vmatpush1.bf16.msra.mxu0 %v5327
      %5559 = vmatprep.subr.bf16.mxu0 0
      %5560 = vmatpush2.bf16.msra.mxu0 0
      %5561 = vmatprep.subr.bf16.mxu0 0
      %5562 = vmatpush2.bf16.msra.mxu0 0
      %5563 = vmatprep.subr.bf16.mxu0 0
      %5564 = vmatpush2.bf16.msra.mxu0 0
      %5565 = vmatprep.subr.bf16.mxu0 0
      %5566 = vmatpush2.bf16.msra.mxu0 0
      %5567 = vmatprep.subr.bf16.mxu0 0
      %5568 = vmatpush2.bf16.msra.mxu0 0
      %5569 = vmatprep.subr.bf16.mxu0 0
      %5570 = vmatpush2.bf16.msra.mxu0 0
      %5571 = vmatprep.subr.bf16.mxu0 0
      %5572 = vmatpush2.bf16.msra.mxu0 0
      %5573 = vmatprep.subr.bf16.mxu0 0
      %5574 = vmatpush2.bf16.msra.mxu0 0
      %5575 = vmatprep.mubr.bf16.mxu0 0
      %5576 = vmatmul.mubr.bf16.gmra.mxu0 %v5394
      %v5577 = vpop.f32.mrf.mxu0
      %v5578 = vadd.f32 0.0, %v5577
      %v5579 = vpop.f32.mrf.mxu0
      %v5580 = vadd.f32 0.0, %v5579
      %v5581 = vpop.f32.mrf.mxu0
      %v5582 = vpop.f32.mrf.mxu0
      %5583 = vdwg.mxu0
      %v5584 = vld [vmem:[%s13] sm:$0xf]
      %v5585 = vld [vmem:[%s479] sm:$0xf]
      %v5586 = vsel %vm1369, %v5455, 0.0
      %v5587 = vsel %vm1369, %v5457, 0.0
      %v5588 = vadd.f32 %v5586, %v5587
      %v5589 = vsel %vm1369, %v5496, 0.0
      %v5590 = vadd.f32 %v5588, %v5589
      %v5591 = vsel %vm1369, %v5498, 0.0
      %v5592 = vadd.f32 %v5590, %v5591
      %v5593 = vsel %vm1369, %v5537, 0.0
      %v5594 = vadd.f32 %v5592, %v5593
      %v5595 = vsel %vm1369, %v5539, 0.0
      %v5596 = vadd.f32 %v5594, %v5595
      %v5597 = vsel %vm1369, %v5578, 0.0
      %v5598 = vadd.f32 %v5596, %v5597
      %v5599 = vsel %vm1369, %v5580, 0.0
      %v5600 = vadd.f32 %v5598, %v5599
      %5601 = vadd.xlane.f32.xlu0 %v5600
      %v5602 = vpop.xlane.xlu0 %5601
      %v5603 = vrot.slane %v5602, 4
      %v5604 = vadd.f32 %v5602, %v5603
      %v5605 = vrot.slane %v5604, 2
      %v5606 = vadd.f32 %v5604, %v5605
      %v5607 = vrot.slane %v5606, 1
      %v5608 = vadd.f32 %v5606, %v5607
      %s5609 = vtos %v5608
      %s5610 = smul.f32 %s5609, 0.00024414063
      %v5611 = vmul.f32 %v5455, %v5455
      %v5612 = vmul.f32 %v5457, %v5457
      %v5613 = vmul.f32 %v5496, %v5496
      %v5614 = vmul.f32 %v5498, %v5498
      %v5615 = vmul.f32 %v5537, %v5537
      %v5616 = vmul.f32 %v5539, %v5539
      %v5617 = vmul.f32 %v5578, %v5578
      %v5618 = vmul.f32 %v5580, %v5580
      %v5619 = vsel %vm1369, %v5611, 0.0
      %v5620 = vsel %vm1369, %v5612, 0.0
      %v5621 = vadd.f32 %v5619, %v5620
      %v5622 = vsel %vm1369, %v5613, 0.0
      %v5623 = vadd.f32 %v5621, %v5622
      %v5624 = vsel %vm1369, %v5614, 0.0
      %v5625 = vadd.f32 %v5623, %v5624
      %v5626 = vsel %vm1369, %v5615, 0.0
      %v5627 = vadd.f32 %v5625, %v5626
      %v5628 = vsel %vm1369, %v5616, 0.0
      %v5629 = vadd.f32 %v5627, %v5628
      %v5630 = vsel %vm1369, %v5617, 0.0
      %v5631 = vadd.f32 %v5629, %v5630
      %v5632 = vsel %vm1369, %v5618, 0.0
      %v5633 = vadd.f32 %v5631, %v5632
      %5634 = vadd.xlane.f32.xlu0 %v5633
      %v5635 = vpop.xlane.xlu0 %5634
      %v5636 = vrot.slane %v5635, 4
      %v5637 = vadd.f32 %v5635, %v5636
      %v5638 = vrot.slane %v5637, 2
      %v5639 = vadd.f32 %v5637, %v5638
      %v5640 = vrot.slane %v5639, 1
      %v5641 = vadd.f32 %v5639, %v5640
      %s5642 = vtos %v5641
      %s5643 = smul.f32 %s5642, 0.00024414063
      %s5644 = smul.f32 %s5610, %s5610
      %s5645 = ssub.f32 %s5643, %s5644
      %s5646 = smax.f32 %s5645, 0.0
      %s5647 = sadd.f32 %s5646, 1e-05
      %v5648 = vstv %s5647
      %v5649 = vrsqrt.pop %v5648
      %s5650 = vtos %v5649
      %v5651 = vstv %s5650
      %v5652 = vmul.f32 %v5584, %v5651
      %v5653 = vstv %s5610
      %v5654 = vmul.f32 %v5653, %v5652
      %v5655 = vsub.f32 %v5585, %v5654
      %5657 = vset.pattern.permute.xlu0 0
      %5658 = vperm.xlu0 %5657, %v5652
      %v5659 = vpop.permute.xlu0 %5658
      %v5661 = vmul.f32 %v5455, %v5659
      %v5662 = vmul.f32 %v5457, %v5659
      %v5663 = vmul.f32 %v5496, %v5659
      %v5664 = vmul.f32 %v5498, %v5659
      %v5665 = vmul.f32 %v5537, %v5659
      %v5666 = vmul.f32 %v5539, %v5659
      %v5667 = vmul.f32 %v5578, %v5659
      %v5668 = vmul.f32 %v5580, %v5659
      %5670 = vset.pattern.permute.xlu0 0
      %5671 = vperm.xlu0 %5670, %v5655
      %v5672 = vpop.permute.xlu0 %5671
      %v5674 = vadd.f32 %v5661, %v5672
      %v5675 = vadd.f32 %v5662, %v5672
      %v5676 = vadd.f32 %v5663, %v5672
      %v5677 = vadd.f32 %v5664, %v5672
      %v5678 = vadd.f32 %v5665, %v5672
      %v5679 = vadd.f32 %v5666, %v5672
      %v5680 = vadd.f32 %v5667, %v5672
      %v5681 = vadd.f32 %v5668, %v5672
      %v5690 = vcombine.low %v5674, %v5675
      %v5691 = vcombine.low %v5676, %v5677
      %v5692 = vcombine.low %v5678, %v5679
      %v5693 = vcombine.low %v5680, %v5681
      %5698 = vst [vmem:[%s484] sm:$0xff] %v5690
      %5699 = vst [vmem:[%s484 + $0x8] sm:$0xff] %v5691
      %5700 = vst [vmem:[%s484 + $0x10] sm:$0xff] %v5692
      %5701 = vst [vmem:[%s484 + $0x18] sm:$0xff] %v5693
      %p5702 = scmp.lt.s32.totalorder %s25, 1
      %s5703 = scalar_select %p5702, %s25, 1
      %s5704 = smul.addr %s5703, 8
      %s5705 = smul.addr %s5704, 4
      %s5706 = scalar_lea.vmem %s14, %s5705
      // Predicated region
      $region77: #{up_forward.1} parent=75 // pred_check
        %p5707 = pneg %p347
      $region78: #{up_forward.1} parent=75 // pred_check_branch
        %5709 = sbr.rel (%p5707) target = $region80
      $region79: #{up_forward.1} parent=75 // pred_region
        _
      $region80: #{up_forward.1} parent=75 // pred_fallthru
        _
    $region76: #{up_forward.1} parent=5 // pred_fallthru
      _
    %p5710 = scmp.le.s32.totalorder 2, %s20
    // Predicated region
    $region81: #{up_forward.1} parent=5 // pred_check
      %p5711 = pneg %p5710
    $region82: #{up_forward.1} parent=5 // pred_check_branch
      %5713 = sbr.rel (%p5711) target = $region84
    $region83: #{up_forward.1} parent=5 // pred_region
      %s5714 = ssub.s32 %s20, 2
      // Predicated region
      $region85: #{up_forward.1} parent=83 // pred_check
        %p5715 = pneg %p353
      $region86: #{up_forward.1} parent=83 // pred_check_branch
        %5717 = sbr.rel (%p5715) target = $region88
      $region87: #{up_forward.1} parent=83 // pred_region
        %p5718 = scmp.lt.s32.totalorder %s26, 1
        %s5719 = scalar_select %p5718, %s26, 1
        %s5720 = smul.addr %s5719, 8
        %s5721 = smul.addr %s5720, 4
        %s5722 = scalar_lea.vmem %s14, %s5721
      $region88: #{up_forward.1} parent=83 // pred_fallthru
        _
    $region84: #{up_forward.1} parent=5 // pred_fallthru
      _
  $region6: #{up_forward.1} parent=0 // loop_footer
    %s24 = sadd.s32 1, %s20
  $region7: #{up_forward.1} parent=0 // loop_footer_branch
    %19 = sbr.rel target = $region3
  $region8: #{up_forward.1} parent=0 // loop_exit
    _

</llo_original>
